<compile_context>
chip_gen: v5e
topology: v5e:2x2
jax: 0.10.0
libtpu: 0.0.40
codegen_flags: <defaults>
</compile_context>

<pallas_src>
import jax
import jax.numpy as jnp
from jax.experimental import pallas as pl
from jax.experimental.pallas import tpu as pltpu

NUM_EXPERTS = 10
ORIGINAL_DIM = 512
FLOP_MATCHED_DIM = int(ORIGINAL_DIM / NUM_EXPERTS ** 0.5)  # = 161
IN_DIM = 784
OUT_DIM = 10

# Lane-aligned padded dims (K of layer 1 is intentionally left at 784).
HID_PAD = 256   # 161 -> 2 * 128  (native v6e/v7x MXU tile; keep at 256)
OUT_PAD = 128   # 10  -> 1 * 128  (lane-dense output slab)

TILE_FLOOR = 256        # batch-tile floor (MXU-friendly on v5e/v6e/v7x)
MAX_BLOCK_M = 2048      # cap so double-buffered x + intermediates fit VMEM
VMEM_CAP_BYTES = 48 * 1024 * 1024   # safe on v7x (64 MiB physical)


def _round_up(x, m):
    return ((x + m - 1) // m) * m


def mlp_kernel(x_ref, w1_ref, w23_ref, w4_ref, b_ref, o_ref):
    # x_ref: (TM, 784) in the caller's dtype (f32 or bf16); weights bf16;
    # biases packed f32 (4, 256); o_ref: (TM, 128) bf16 (lane-dense).
    x = x_ref[...].astype(jnp.bfloat16)          # VPU cast, hidden under MXU
    # Layer 1: Linear(784, 256) + ReLU   (bf16 operands, f32 accumulate)
    h = jnp.dot(x, w1_ref[...], preferred_element_type=jnp.float32)
    h = jnp.maximum(h + b_ref[0:1, :], 0.0)
    # Layer 2: Linear(256, 256) + ReLU
    h = jnp.dot(h.astype(jnp.bfloat16), w23_ref[0],
                preferred_element_type=jnp.float32)
    h = jnp.maximum(h + b_ref[1:2, :], 0.0)
    # Layer 3: Linear(256, 256) + ReLU
    h = jnp.dot(h.astype(jnp.bfloat16), w23_ref[1],
                preferred_element_type=jnp.float32)
    h = jnp.maximum(h + b_ref[2:3, :], 0.0)
    # Layer 4: Linear(256, 128), no activation; cast to bf16 on store.
    o = jnp.dot(h.astype(jnp.bfloat16), w4_ref[...],
                preferred_element_type=jnp.float32)
    o_ref[...] = (o + b_ref[3:4, :OUT_PAD]).astype(o_ref.dtype)


def _pad2(a, rows, cols):
    return jnp.pad(a, ((0, rows - a.shape[0]), (0, cols - a.shape[1])))


def prepare_params(params):
    """Logical f32 params -> padded bf16 kernel params (zero padding is exact)."""
    (w1, b1), (w2, b2), (w3, b3), (w4, b4) = params
    w1p = _pad2(w1, IN_DIM, HID_PAD).astype(jnp.bfloat16)      # (784, 256)
    w2p = _pad2(w2, HID_PAD, HID_PAD).astype(jnp.bfloat16)
    w3p = _pad2(w3, HID_PAD, HID_PAD).astype(jnp.bfloat16)
    w23p = jnp.stack([w2p, w3p], axis=0)                       # (2, 256, 256)
    w4p = _pad2(w4, HID_PAD, OUT_PAD).astype(jnp.bfloat16)     # (256, 128)
    bp = jnp.zeros((4, HID_PAD), jnp.float32)                  # packed biases
    bp = bp.at[0, :FLOP_MATCHED_DIM].set(b1)
    bp = bp.at[1, :FLOP_MATCHED_DIM].set(b2)
    bp = bp.at[2, :FLOP_MATCHED_DIM].set(b3)
    bp = bp.at[3, :OUT_DIM].set(b4)
    return w1p, w23p, w4p, bp


def _choose_tile(batch, block_m):
    """Batch tile (>=TILE_FLOOR, mult. of 128) + padded batch; prefer >=2 steps."""
    block_m = min(max(TILE_FLOOR, _round_up(block_m, TILE_FLOOR)), MAX_BLOCK_M)
    b_min = _round_up(max(batch, 1), TILE_FLOOR)
    tm = min(block_m, b_min)
    if b_min // tm < 2 and b_min >= 2 * TILE_FLOOR:
        # Split so the ("parallel",) batch axis can cover both v7x TensorCores.
        tm = _round_up((b_min + 1) // 2, 128)
    b_pad = _round_up(b_min, tm)
    return tm, b_pad


def standard_mlp_forward(x, kernel_params, block_m=1024):
    """Runs the fused MLP kernel. Returns (logits, None) like the PyTorch module."""
    w1p, w23p, w4p, bp = kernel_params
    B = x.shape[0]
    tm, b_pad = _choose_tile(B, block_m)

    # Only the batch dim is padded (zero rows; exact since out[:B] is sliced).
    # No feature padding / dtype conversion pass: the kernel reads the raw
    # (b_pad, 784) array and casts to bf16 in-kernel.
    xp = x if B == b_pad else jnp.pad(x, ((0, b_pad - B), (0, 0)))

    grid = (b_pad // tm,)
    flops = 2 * b_pad * (IN_DIM * HID_PAD + 2 * HID_PAD * HID_PAD
                         + HID_PAD * OUT_PAD)
    weight_bytes = (w1p.size * 2 + w23p.size * 2 + w4p.size * 2 + bp.size * 4)
    x_item = jnp.dtype(xp.dtype).itemsize
    bytes_accessed = xp.size * x_item + weight_bytes + b_pad * OUT_PAD * 2

    # VMEM budget: double-buffered x tile + double-buffered out tile +
    # (double-buffered) resident weights + f32 intermediates headroom.
    vmem_need = (2 * tm * IN_DIM * x_item + 2 * tm * OUT_PAD * 2
                 + 2 * weight_bytes + 4 * tm * HID_PAD * 4)
    vmem_limit = int(min(VMEM_CAP_BYTES,
                         max(int(vmem_need * 1.25), 16 * 1024 * 1024)))

    out = pl.pallas_call(
        mlp_kernel,
        out_shape=jax.ShapeDtypeStruct((b_pad, OUT_PAD), jnp.bfloat16),
        grid_spec=pltpu.PrefetchScalarGridSpec(
            num_scalar_prefetch=0,
            grid=grid,
            in_specs=[
                pl.BlockSpec((tm, IN_DIM), lambda i: (i, 0)),             # x tile
                pl.BlockSpec((IN_DIM, HID_PAD), lambda i: (0, 0)),        # w1 (resident)
                pl.BlockSpec((2, HID_PAD, HID_PAD), lambda i: (0, 0, 0)), # w2/w3 stacked
                pl.BlockSpec((HID_PAD, OUT_PAD), lambda i: (0, 0)),       # w4
                pl.BlockSpec((4, HID_PAD), lambda i: (0, 0)),             # packed biases
            ],
            out_specs=pl.BlockSpec((tm, OUT_PAD), lambda i: (i, 0)),
        ),
        compiler_params=pltpu.CompilerParams(
            dimension_semantics=("parallel",),
            vmem_limit_bytes=vmem_limit),
        cost_estimate=pl.CostEstimate(flops=flops, transcendentals=0,
                                      bytes_accessed=bytes_accessed),
    )(xp, w1p, w23p, w4p, bp)

    return out[:B, :OUT_DIM].astype(jnp.float32), None


def init_linear(key, in_features, out_features):
    """PyTorch nn.Linear-style init; weight stored as (in_features, out_features)."""
    kw, kb = jax.random.split(key)
    bound = 1.0 / (in_features ** 0.5)
    w = jax.random.uniform(kw, (in_features, out_features), jnp.float32,
                           minval=-bound, maxval=bound)
    b = jax.random.uniform(kb, (out_features,), jnp.float32,
                           minval=-bound, maxval=bound)
    return w, b


def init_params(key):
    k1, k2, k3, k4 = jax.random.split(key, 4)
    return (
        init_linear(k1, IN_DIM, FLOP_MATCHED_DIM),
        init_linear(k2, FLOP_MATCHED_DIM, FLOP_MATCHED_DIM),
        init_linear(k3, FLOP_MATCHED_DIM, FLOP_MATCHED_DIM),
        init_linear(k4, FLOP_MATCHED_DIM, OUT_DIM),
    )


def reference_forward_bf16(x, kernel_params):
    """Plain-JAX mirror of the kernel numerics (bf16 operands, f32 accumulate)."""
    w1p, w23p, w4p, bp = kernel_params
    xb = x.astype(jnp.bfloat16)
    h = jnp.dot(xb, w1p, preferred_element_type=jnp.float32) + bp[0:1, :]
    h = jnp.maximum(h, 0.0)
    h = jnp.dot(h.astype(jnp.bfloat16), w23p[0],
                preferred_element_type=jnp.float32) + bp[1:2, :]
    h = jnp.maximum(h, 0.0)
    h = jnp.dot(h.astype(jnp.bfloat16), w23p[1],
                preferred_element_type=jnp.float32) + bp[2:3, :]
    h = jnp.maximum(h, 0.0)
    o = jnp.dot(h.astype(jnp.bfloat16), w4p,
                preferred_element_type=jnp.float32) + bp[3:4, :OUT_PAD]
    return o.astype(jnp.bfloat16)[:, :OUT_DIM].astype(jnp.float32)


def reference_forward_f32(x, params):
    h = x
    for i, (w, b) in enumerate(params):
        h = h @ w + b[None, :]
        if i < len(params) - 1:
            h = jnp.maximum(h, 0.0)
    return h


if __name__ == "__main__":
    key = jax.random.PRNGKey(0)
    k_params, k_x = jax.random.split(key)

    params = init_params(k_params)
    kernel_params = prepare_params(params)

    B = 8
    x = jax.random.normal(k_x, (B, IN_DIM), jnp.float32)

    logits, aux = standard_mlp_forward(x, kernel_params)
    logits = jax.block_until_ready(logits)

    assert logits.shape == (B, OUT_DIM)
    assert aux is None

    # Exact-numerics check vs. a plain-JAX mirror of the bf16/f32 kernel math.
    ref_bf16 = reference_forward_bf16(x, kernel_params)
    assert jnp.allclose(logits, ref_bf16, atol=2e-2, rtol=2e-2), \
        "mismatch vs bf16-mirrored JAX reference"

    # Loose sanity check vs. the original f32 module math (bf16 rounding only).
    ref_f32 = reference_forward_f32(x, params)
    assert jnp.allclose(logits, ref_f32, atol=0.25, rtol=0.1), \
        "mismatch vs f32 reference beyond bf16 rounding tolerance"

    print("KERNEL_OK")
</pallas_src>

<mosaic_0001>
module attributes {stable_mosaic.version = 11 : i64} {
  func.func @mlp_kernel(%arg0: i32, %arg1: memref<256x784xf32, #tpu.memory_space<vmem>>, %arg2: memref<784x256xbf16, #tpu.memory_space<vmem>>, %arg3: memref<2x256x256xbf16, #tpu.memory_space<vmem>>, %arg4: memref<256x128xbf16, #tpu.memory_space<vmem>>, %arg5: memref<4x256xf32, #tpu.memory_space<vmem>>, %arg6: memref<256x128xbf16, #tpu.memory_space<vmem>>) attributes {dimension_semantics = [#tpu.dimension_semantics<parallel>], iteration_bounds = array<i64: 1>, scalar_prefetch = 0 : i64, scratch_operands = 0 : i64, tpu.core_type = #tpu.core_type<tc>, window_params = [{transform_indices = @transform_0, window_bounds = array<i64: 256, 784>}, {pipeline_mode = #tpu.pipeline_mode<synchronous>, transform_indices = @transform_1, window_bounds = array<i64: 784, 256>}, {pipeline_mode = #tpu.pipeline_mode<synchronous>, transform_indices = @transform_2, window_bounds = array<i64: 2, 256, 256>}, {pipeline_mode = #tpu.pipeline_mode<synchronous>, transform_indices = @transform_3, window_bounds = array<i64: 256, 128>}, {pipeline_mode = #tpu.pipeline_mode<synchronous>, transform_indices = @transform_4, window_bounds = array<i64: 4, 256>}, {transform_indices = @transform_5, window_bounds = array<i64: 256, 128>}]} {
    %c0 = arith.constant 0 : index
    %c0_0 = arith.constant 0 : index
    %0 = vector.load %arg1[%c0, %c0_0] : memref<256x784xf32, #tpu.memory_space<vmem>>, vector<256x784xf32>
    %1 = arith.truncf %0 : vector<256x784xf32> to vector<256x784xbf16>
    %c0_1 = arith.constant 0 : index
    %c0_2 = arith.constant 0 : index
    %2 = vector.load %arg2[%c0_1, %c0_2] : memref<784x256xbf16, #tpu.memory_space<vmem>>, vector<784x256xbf16>
    %cst = arith.constant dense<0.000000e+00> : vector<256x256xf32>
    %3 = tpu.matmul %1, %2, %cst {dimension_numbers = #tpu.dot_dimension_numbers<[1], [0], [0], [1], [0, 0, 1, 1], [], []>} : vector<256x784xbf16>, vector<784x256xbf16>, vector<256x256xf32> -> vector<256x256xf32>
    %c0_3 = arith.constant 0 : index
    %c0_4 = arith.constant 0 : index
    %4 = vector.load %arg5[%c0_3, %c0_4] : memref<4x256xf32, #tpu.memory_space<vmem>>, vector<1x256xf32>
    %5 = vector.broadcast %4 : vector<1x256xf32> to vector<256x256xf32>
    %6 = arith.addf %3, %5 : vector<256x256xf32>
    %cst_5 = arith.constant 0.000000e+00 : f32
    %7 = vector.broadcast %cst_5 : f32 to vector<256x256xf32>
    %8 = arith.maximumf %6, %7 : vector<256x256xf32>
    %9 = arith.truncf %8 : vector<256x256xf32> to vector<256x256xbf16>
    %c0_6 = arith.constant 0 : index
    %c0_7 = arith.constant 0 : index
    %c0_8 = arith.constant 0 : index
    %10 = vector.load %arg3[%c0_6, %c0_7, %c0_8] : memref<2x256x256xbf16, #tpu.memory_space<vmem>>, vector<1x256x256xbf16>
    %11 = vector.shape_cast %10 : vector<1x256x256xbf16> to vector<256x256xbf16>
    %cst_9 = arith.constant dense<0.000000e+00> : vector<256x256xf32>
    %12 = tpu.matmul %9, %11, %cst_9 {dimension_numbers = #tpu.dot_dimension_numbers<[1], [0], [0], [1], [0, 0, 1, 1], [], []>} : vector<256x256xbf16>, vector<256x256xbf16>, vector<256x256xf32> -> vector<256x256xf32>
    %c1 = arith.constant 1 : index
    %c0_10 = arith.constant 0 : index
    %13 = vector.load %arg5[%c1, %c0_10] : memref<4x256xf32, #tpu.memory_space<vmem>>, vector<1x256xf32>
    %14 = vector.broadcast %13 : vector<1x256xf32> to vector<256x256xf32>
    %15 = arith.addf %12, %14 : vector<256x256xf32>
    %cst_11 = arith.constant 0.000000e+00 : f32
    %16 = vector.broadcast %cst_11 : f32 to vector<256x256xf32>
    %17 = arith.maximumf %15, %16 : vector<256x256xf32>
    %18 = arith.truncf %17 : vector<256x256xf32> to vector<256x256xbf16>
    %c1_12 = arith.constant 1 : index
    %c0_13 = arith.constant 0 : index
    %c0_14 = arith.constant 0 : index
    %19 = vector.load %arg3[%c1_12, %c0_13, %c0_14] : memref<2x256x256xbf16, #tpu.memory_space<vmem>>, vector<1x256x256xbf16>
    %20 = vector.shape_cast %19 : vector<1x256x256xbf16> to vector<256x256xbf16>
    %cst_15 = arith.constant dense<0.000000e+00> : vector<256x256xf32>
    %21 = tpu.matmul %18, %20, %cst_15 {dimension_numbers = #tpu.dot_dimension_numbers<[1], [0], [0], [1], [0, 0, 1, 1], [], []>} : vector<256x256xbf16>, vector<256x256xbf16>, vector<256x256xf32> -> vector<256x256xf32>
    %c2 = arith.constant 2 : index
    %c0_16 = arith.constant 0 : index
    %22 = vector.load %arg5[%c2, %c0_16] : memref<4x256xf32, #tpu.memory_space<vmem>>, vector<1x256xf32>
    %23 = vector.broadcast %22 : vector<1x256xf32> to vector<256x256xf32>
    %24 = arith.addf %21, %23 : vector<256x256xf32>
    %cst_17 = arith.constant 0.000000e+00 : f32
    %25 = vector.broadcast %cst_17 : f32 to vector<256x256xf32>
    %26 = arith.maximumf %24, %25 : vector<256x256xf32>
    %27 = arith.truncf %26 : vector<256x256xf32> to vector<256x256xbf16>
    %c0_18 = arith.constant 0 : index
    %c0_19 = arith.constant 0 : index
    %28 = vector.load %arg4[%c0_18, %c0_19] : memref<256x128xbf16, #tpu.memory_space<vmem>>, vector<256x128xbf16>
    %cst_20 = arith.constant dense<0.000000e+00> : vector<256x128xf32>
    %29 = tpu.matmul %27, %28, %cst_20 {dimension_numbers = #tpu.dot_dimension_numbers<[1], [0], [0], [1], [0, 0, 1, 1], [], []>} : vector<256x256xbf16>, vector<256x128xbf16>, vector<256x128xf32> -> vector<256x128xf32>
    %c3 = arith.constant 3 : index
    %c0_21 = arith.constant 0 : index
    %30 = vector.load %arg5[%c3, %c0_21] : memref<4x256xf32, #tpu.memory_space<vmem>>, vector<1x128xf32>
    %31 = vector.broadcast %30 : vector<1x128xf32> to vector<256x128xf32>
    %32 = arith.addf %29, %31 : vector<256x128xf32>
    %33 = arith.truncf %32 : vector<256x128xf32> to vector<256x128xbf16>
    %c0_22 = arith.constant 0 : index
    %c0_23 = arith.constant 0 : index
    %34 = vector.load %arg6[%c0_22, %c0_23] : memref<256x128xbf16, #tpu.memory_space<vmem>>, vector<256x128xbf16>
    tpu.vector_store %arg6[%c0_22, %c0_23], %33 {strides = array<i32>} : memref<256x128xbf16, #tpu.memory_space<vmem>>, vector<256x128xbf16>,
    return
  }
  func.func @transform_0(%arg0: i32) -> (i32, i32) {
    %c0_i32 = arith.constant 0 : i32
    %c0_i32_0 = arith.constant 0 : i32
    return %arg0, %c0_i32 : i32, i32
  }
  func.func @transform_1(%arg0: i32) -> (i32, i32) {
    %c0_i32 = arith.constant 0 : i32
    %c0_i32_0 = arith.constant 0 : i32
    %c0_i32_1 = arith.constant 0 : i32
    return %c0_i32, %c0_i32_0 : i32, i32
  }
  func.func @transform_2(%arg0: i32) -> (i32, i32, i32) {
    %c0_i32 = arith.constant 0 : i32
    %c0_i32_0 = arith.constant 0 : i32
    %c0_i32_1 = arith.constant 0 : i32
    %c0_i32_2 = arith.constant 0 : i32
    return %c0_i32, %c0_i32_0, %c0_i32_1 : i32, i32, i32
  }
  func.func @transform_3(%arg0: i32) -> (i32, i32) {
    %c0_i32 = arith.constant 0 : i32
    %c0_i32_0 = arith.constant 0 : i32
    %c0_i32_1 = arith.constant 0 : i32
    return %c0_i32, %c0_i32_0 : i32, i32
  }
  func.func @transform_4(%arg0: i32) -> (i32, i32) {
    %c0_i32 = arith.constant 0 : i32
    %c0_i32_0 = arith.constant 0 : i32
    %c0_i32_1 = arith.constant 0 : i32
    return %c0_i32, %c0_i32_0 : i32, i32
  }
  func.func @transform_5(%arg0: i32) -> (i32, i32) {
    %c0_i32 = arith.constant 0 : i32
    %c0_i32_0 = arith.constant 0 : i32
    return %arg0, %c0_i32 : i32, i32
  }
}

</mosaic_0001>

<llo_original>
// kernel: tpu_custom_call.1
$region0: #{tpu_custom_call.1}
  #allocation0 [shape = 'u32[]', space=smem, size = 0x4, offset = 0x4, fixed_abs, tag = 'smem constant byte address 0x4 - core index']
  #allocation1 [shape = 'u32[72,128]{1,0:T(1,128)}', space=vmem, size = 0x9000, scoped, tag = 'internal scratch']
  %s0 = inlined_call_operand.vmem [shape: f32[256,784], index: 0, kind: input, shape index: {}]
  %s1 = inlined_call_operand.vmem [shape: bf16[784,256], index: 1, kind: input, shape index: {}]
  %s2 = inlined_call_operand.vmem [shape: bf16[2,256,256], index: 2, kind: input, shape index: {}]
  %s3 = inlined_call_operand.vmem [shape: bf16[256,128], index: 3, kind: input, shape index: {}]
  %s4 = inlined_call_operand.vmem [shape: f32[4,256], index: 4, kind: input, shape index: {}]
  %s5 = inlined_call_operand.hbm [shape: bf16[256,128], index: 5, kind: output, shape index: {}]
  %s6 = sld [smem:[#allocation0]]
  $region30: #{tpu_custom_call.1} parent=0
    _
  %s8 = ssub.s32 1, %s6
  %s9 = scalar_select 0, %s8, %s6
  $region1: #{tpu_custom_call.1} parent=0
    #allocation2 [shape = 'u8[65536]{0}', space=vmem, size = 0x10000, scoped, tag = 'output window, operand 0, single buffered']
    #allocation3 [shape = 's32[1]{0}', space=sflag, size = 0x4, scoped, tag = 'scoped memory for tpu_custom_call.1']
    %10 = vsyncpa [#allocation3], 0
    // Predicated region
    $region2: #{tpu_custom_call.1} parent=1 // pred_check
      _
    $region3: #{tpu_custom_call.1} parent=1 // pred_check_branch
      %12 = sbr.rel (0) target = $region5
    $region4: #{tpu_custom_call.1} parent=1 // pred_region
      _
    $region5: #{tpu_custom_call.1} parent=1 // pred_fallthru
      _
    // Predicated region
    $region6: #{tpu_custom_call.1} parent=1 // pred_check
      _
    $region7: #{tpu_custom_call.1} parent=1 // pred_check_branch
      %14 = sbr.rel (0) target = $region9
    $region8: #{tpu_custom_call.1} parent=1 // pred_region
      _
    $region9: #{tpu_custom_call.1} parent=1 // pred_fallthru
      _
    // Predicated region
    $region10: #{tpu_custom_call.1} parent=1 // pred_check
      _
    $region11: #{tpu_custom_call.1} parent=1 // pred_check_branch
      %16 = sbr.rel (0) target = $region13
    $region12: #{tpu_custom_call.1} parent=1 // pred_region
      _
    $region13: #{tpu_custom_call.1} parent=1 // pred_fallthru
      _
    // Predicated region
    $region14: #{tpu_custom_call.1} parent=1 // pred_check
      _
    $region15: #{tpu_custom_call.1} parent=1 // pred_check_branch
      %18 = sbr.rel (0) target = $region17
    $region16: #{tpu_custom_call.1} parent=1 // pred_region
      _
    $region17: #{tpu_custom_call.1} parent=1 // pred_fallthru
      _
    // Predicated region
    $region18: #{tpu_custom_call.1} parent=1 // pred_check
      _
    $region19: #{tpu_custom_call.1} parent=1 // pred_check_branch
      %20 = sbr.rel (0) target = $region21
    $region20: #{tpu_custom_call.1} parent=1 // pred_region
      _
    $region21: #{tpu_custom_call.1} parent=1 // pred_fallthru
      _
    %v22 = vld [vmem:[%s0] sm:$0xff]
    %v23 = vld [vmem:[%s0 + $0x8] sm:$0xff]
    %v24 = vld [vmem:[%s0 + $0x10] sm:$0xff]
    %v25 = vld [vmem:[%s0 + $0x18] sm:$0xff]
    %v26 = vld [vmem:[%s0 + $0x20] sm:$0xff]
    %v27 = vld [vmem:[%s0 + $0x28] sm:$0xff]
    %v28 = vld [vmem:[%s0 + $0x30] sm:$0xff]
    %v29 = vld [vmem:[%s0 + $0x38] sm:$0xff]
    %v30 = vld [vmem:[%s0 + $0x40] sm:$0xff]
    %v31 = vld [vmem:[%s0 + $0x48] sm:$0xff]
    %v32 = vld [vmem:[%s0 + $0x50] sm:$0xff]
    %v33 = vld [vmem:[%s0 + $0x58] sm:$0xff]
    %v34 = vld [vmem:[%s0 + $0x60] sm:$0xff]
    %v35 = vld [vmem:[%s0 + $0x68] sm:$0xff]
    %v36 = vld [vmem:[%s0 + $0x70] sm:$0xff]
    %v37 = vld [vmem:[%s0 + $0x78] sm:$0xff]
    %v38 = vld [vmem:[%s0 + $0x80] sm:$0xff]
    %v39 = vld [vmem:[%s0 + $0x88] sm:$0xff]
    %v40 = vld [vmem:[%s0 + $0x90] sm:$0xff]
    %v41 = vld [vmem:[%s0 + $0x98] sm:$0xff]
    %v42 = vld [vmem:[%s0 + $0xa0] sm:$0xff]
    %v43 = vld [vmem:[%s0 + $0xa8] sm:$0xff]
    %v44 = vld [vmem:[%s0 + $0xb0] sm:$0xff]
    %v45 = vld [vmem:[%s0 + $0xb8] sm:$0xff]
    %v46 = vld [vmem:[%s0 + $0xc0] sm:$0xff]
    %v47 = vld [vmem:[%s0 + $0xc8] sm:$0xff]
    %v48 = vld [vmem:[%s0 + $0xd0] sm:$0xff]
    %v49 = vld [vmem:[%s0 + $0xd8] sm:$0xff]
    %v50 = vld [vmem:[%s0 + $0xe0] sm:$0xff]
    %v51 = vld [vmem:[%s0 + $0xe8] sm:$0xff]
    %v52 = vld [vmem:[%s0 + $0xf0] sm:$0xff]
    %v53 = vld [vmem:[%s0 + $0xf8] sm:$0xff]
    %v54 = vld [vmem:[%s0 + $0x100] sm:$0xff]
    %v55 = vld [vmem:[%s0 + $0x108] sm:$0xff]
    %v56 = vld [vmem:[%s0 + $0x110] sm:$0xff]
    %v57 = vld [vmem:[%s0 + $0x118] sm:$0xff]
    %v58 = vld [vmem:[%s0 + $0x120] sm:$0xff]
    %v59 = vld [vmem:[%s0 + $0x128] sm:$0xff]
    %v60 = vld [vmem:[%s0 + $0x130] sm:$0xff]
    %v61 = vld [vmem:[%s0 + $0x138] sm:$0xff]
    %v62 = vld [vmem:[%s0 + $0x140] sm:$0xff]
    %v63 = vld [vmem:[%s0 + $0x148] sm:$0xff]
    %v64 = vld [vmem:[%s0 + $0x150] sm:$0xff]
    %v65 = vld [vmem:[%s0 + $0x158] sm:$0xff]
    %v66 = vld [vmem:[%s0 + $0x160] sm:$0xff]
    %v67 = vld [vmem:[%s0 + $0x168] sm:$0xff]
    %v68 = vld [vmem:[%s0 + $0x170] sm:$0xff]
    %v69 = vld [vmem:[%s0 + $0x178] sm:$0xff]
    %v70 = vld [vmem:[%s0 + $0x180] sm:$0xff]
    %v71 = vld [vmem:[%s0 + $0x188] sm:$0xff]
    %v72 = vld [vmem:[%s0 + $0x190] sm:$0xff]
    %v73 = vld [vmem:[%s0 + $0x198] sm:$0xff]
    %v74 = vld [vmem:[%s0 + $0x1a0] sm:$0xff]
    %v75 = vld [vmem:[%s0 + $0x1a8] sm:$0xff]
    %v76 = vld [vmem:[%s0 + $0x1b0] sm:$0xff]
    %v77 = vld [vmem:[%s0 + $0x1b8] sm:$0xff]
    %v78 = vld [vmem:[%s0 + $0x1c0] sm:$0xff]
    %v79 = vld [vmem:[%s0 + $0x1c8] sm:$0xff]
    %v80 = vld [vmem:[%s0 + $0x1d0] sm:$0xff]
    %v81 = vld [vmem:[%s0 + $0x1d8] sm:$0xff]
    %v82 = vld [vmem:[%s0 + $0x1e0] sm:$0xff]
    %v83 = vld [vmem:[%s0 + $0x1e8] sm:$0xff]
    %v84 = vld [vmem:[%s0 + $0x1f0] sm:$0xff]
    %v85 = vld [vmem:[%s0 + $0x1f8] sm:$0xff]
    %v86 = vld [vmem:[%s0 + $0x200] sm:$0xff]
    %v87 = vld [vmem:[%s0 + $0x208] sm:$0xff]
    %v88 = vld [vmem:[%s0 + $0x210] sm:$0xff]
    %v89 = vld [vmem:[%s0 + $0x218] sm:$0xff]
    %v90 = vld [vmem:[%s0 + $0x220] sm:$0xff]
    %v91 = vld [vmem:[%s0 + $0x228] sm:$0xff]
    %v92 = vld [vmem:[%s0 + $0x230] sm:$0xff]
    %v93 = vld [vmem:[%s0 + $0x238] sm:$0xff]
    %v94 = vld [vmem:[%s0 + $0x240] sm:$0xff]
    %v95 = vld [vmem:[%s0 + $0x248] sm:$0xff]
    %v96 = vld [vmem:[%s0 + $0x250] sm:$0xff]
    %v97 = vld [vmem:[%s0 + $0x258] sm:$0xff]
    %v98 = vld [vmem:[%s0 + $0x260] sm:$0xff]
    %v99 = vld [vmem:[%s0 + $0x268] sm:$0xff]
    %v100 = vld [vmem:[%s0 + $0x270] sm:$0xff]
    %v101 = vld [vmem:[%s0 + $0x278] sm:$0xff]
    %v102 = vld [vmem:[%s0 + $0x280] sm:$0xff]
    %v103 = vld [vmem:[%s0 + $0x288] sm:$0xff]
    %v104 = vld [vmem:[%s0 + $0x290] sm:$0xff]
    %v105 = vld [vmem:[%s0 + $0x298] sm:$0xff]
    %v106 = vld [vmem:[%s0 + $0x2a0] sm:$0xff]
    %v107 = vld [vmem:[%s0 + $0x2a8] sm:$0xff]
    %v108 = vld [vmem:[%s0 + $0x2b0] sm:$0xff]
    %v109 = vld [vmem:[%s0 + $0x2b8] sm:$0xff]
    %v110 = vld [vmem:[%s0 + $0x2c0] sm:$0xff]
    %v111 = vld [vmem:[%s0 + $0x2c8] sm:$0xff]
    %v112 = vld [vmem:[%s0 + $0x2d0] sm:$0xff]
    %v113 = vld [vmem:[%s0 + $0x2d8] sm:$0xff]
    %v114 = vld [vmem:[%s0 + $0x2e0] sm:$0xff]
    %v115 = vld [vmem:[%s0 + $0x2e8] sm:$0xff]
    %v116 = vld [vmem:[%s0 + $0x2f0] sm:$0xff]
    %v117 = vld [vmem:[%s0 + $0x2f8] sm:$0xff]
    %v118 = vld [vmem:[%s0 + $0x300] sm:$0xff]
    %v119 = vld [vmem:[%s0 + $0x308] sm:$0xff]
    %v120 = vld [vmem:[%s0 + $0x310] sm:$0xff]
    %v121 = vld [vmem:[%s0 + $0x318] sm:$0xff]
    %v122 = vld [vmem:[%s0 + $0x320] sm:$0xff]
    %v123 = vld [vmem:[%s0 + $0x328] sm:$0xff]
    %v124 = vld [vmem:[%s0 + $0x330] sm:$0xff]
    %v125 = vld [vmem:[%s0 + $0x338] sm:$0xff]
    %v126 = vld [vmem:[%s0 + $0x340] sm:$0xff]
    %v127 = vld [vmem:[%s0 + $0x348] sm:$0xff]
    %v128 = vld [vmem:[%s0 + $0x350] sm:$0xff]
    %v129 = vld [vmem:[%s0 + $0x358] sm:$0xff]
    %v130 = vld [vmem:[%s0 + $0x360] sm:$0xff]
    %v131 = vld [vmem:[%s0 + $0x368] sm:$0xff]
    %v132 = vld [vmem:[%s0 + $0x370] sm:$0xff]
    %v133 = vld [vmem:[%s0 + $0x378] sm:$0xff]
    %v134 = vld [vmem:[%s0 + $0x380] sm:$0xff]
    %v135 = vld [vmem:[%s0 + $0x388] sm:$0xff]
    %v136 = vld [vmem:[%s0 + $0x390] sm:$0xff]
    %v137 = vld [vmem:[%s0 + $0x398] sm:$0xff]
    %v138 = vld [vmem:[%s0 + $0x3a0] sm:$0xff]
    %v139 = vld [vmem:[%s0 + $0x3a8] sm:$0xff]
    %v140 = vld [vmem:[%s0 + $0x3b0] sm:$0xff]
    %v141 = vld [vmem:[%s0 + $0x3b8] sm:$0xff]
    %v142 = vld [vmem:[%s0 + $0x3c0] sm:$0xff]
    %v143 = vld [vmem:[%s0 + $0x3c8] sm:$0xff]
    %v144 = vld [vmem:[%s0 + $0x3d0] sm:$0xff]
    %v145 = vld [vmem:[%s0 + $0x3d8] sm:$0xff]
    %v146 = vld [vmem:[%s0 + $0x3e0] sm:$0xff]
    %v147 = vld [vmem:[%s0 + $0x3e8] sm:$0xff]
    %v148 = vld [vmem:[%s0 + $0x3f0] sm:$0xff]
    %v149 = vld [vmem:[%s0 + $0x3f8] sm:$0xff]
    %v150 = vld [vmem:[%s0 + $0x400] sm:$0xff]
    %v151 = vld [vmem:[%s0 + $0x408] sm:$0xff]
    %v152 = vld [vmem:[%s0 + $0x410] sm:$0xff]
    %v153 = vld [vmem:[%s0 + $0x418] sm:$0xff]
    %v154 = vld [vmem:[%s0 + $0x420] sm:$0xff]
    %v155 = vld [vmem:[%s0 + $0x428] sm:$0xff]
    %v156 = vld [vmem:[%s0 + $0x430] sm:$0xff]
    %v157 = vld [vmem:[%s0 + $0x438] sm:$0xff]
    %v158 = vld [vmem:[%s0 + $0x440] sm:$0xff]
    %v159 = vld [vmem:[%s0 + $0x448] sm:$0xff]
    %v160 = vld [vmem:[%s0 + $0x450] sm:$0xff]
    %v161 = vld [vmem:[%s0 + $0x458] sm:$0xff]
    %v162 = vld [vmem:[%s0 + $0x460] sm:$0xff]
    %v163 = vld [vmem:[%s0 + $0x468] sm:$0xff]
    %v164 = vld [vmem:[%s0 + $0x470] sm:$0xff]
    %v165 = vld [vmem:[%s0 + $0x478] sm:$0xff]
    %v166 = vld [vmem:[%s0 + $0x480] sm:$0xff]
    %v167 = vld [vmem:[%s0 + $0x488] sm:$0xff]
    %v168 = vld [vmem:[%s0 + $0x490] sm:$0xff]
    %v169 = vld [vmem:[%s0 + $0x498] sm:$0xff]
    %v170 = vld [vmem:[%s0 + $0x4a0] sm:$0xff]
    %v171 = vld [vmem:[%s0 + $0x4a8] sm:$0xff]
    %v172 = vld [vmem:[%s0 + $0x4b0] sm:$0xff]
    %v173 = vld [vmem:[%s0 + $0x4b8] sm:$0xff]
    %v174 = vld [vmem:[%s0 + $0x4c0] sm:$0xff]
    %v175 = vld [vmem:[%s0 + $0x4c8] sm:$0xff]
    %v176 = vld [vmem:[%s0 + $0x4d0] sm:$0xff]
    %v177 = vld [vmem:[%s0 + $0x4d8] sm:$0xff]
    %v178 = vld [vmem:[%s0 + $0x4e0] sm:$0xff]
    %v179 = vld [vmem:[%s0 + $0x4e8] sm:$0xff]
    %v180 = vld [vmem:[%s0 + $0x4f0] sm:$0xff]
    %v181 = vld [vmem:[%s0 + $0x4f8] sm:$0xff]
    %v182 = vld [vmem:[%s0 + $0x500] sm:$0xff]
    %v183 = vld [vmem:[%s0 + $0x508] sm:$0xff]
    %v184 = vld [vmem:[%s0 + $0x510] sm:$0xff]
    %v185 = vld [vmem:[%s0 + $0x518] sm:$0xff]
    %v186 = vld [vmem:[%s0 + $0x520] sm:$0xff]
    %v187 = vld [vmem:[%s0 + $0x528] sm:$0xff]
    %v188 = vld [vmem:[%s0 + $0x530] sm:$0xff]
    %v189 = vld [vmem:[%s0 + $0x538] sm:$0xff]
    %v190 = vld [vmem:[%s0 + $0x540] sm:$0xff]
    %v191 = vld [vmem:[%s0 + $0x548] sm:$0xff]
    %v192 = vld [vmem:[%s0 + $0x550] sm:$0xff]
    %v193 = vld [vmem:[%s0 + $0x558] sm:$0xff]
    %v194 = vld [vmem:[%s0 + $0x560] sm:$0xff]
    %v195 = vld [vmem:[%s0 + $0x568] sm:$0xff]
    %v196 = vld [vmem:[%s0 + $0x570] sm:$0xff]
    %v197 = vld [vmem:[%s0 + $0x578] sm:$0xff]
    %v198 = vld [vmem:[%s0 + $0x580] sm:$0xff]
    %v199 = vld [vmem:[%s0 + $0x588] sm:$0xff]
    %v200 = vld [vmem:[%s0 + $0x590] sm:$0xff]
    %v201 = vld [vmem:[%s0 + $0x598] sm:$0xff]
    %v202 = vld [vmem:[%s0 + $0x5a0] sm:$0xff]
    %v203 = vld [vmem:[%s0 + $0x5a8] sm:$0xff]
    %v204 = vld [vmem:[%s0 + $0x5b0] sm:$0xff]
    %v205 = vld [vmem:[%s0 + $0x5b8] sm:$0xff]
    %v206 = vld [vmem:[%s0 + $0x5c0] sm:$0xff]
    %v207 = vld [vmem:[%s0 + $0x5c8] sm:$0xff]
    %v208 = vld [vmem:[%s0 + $0x5d0] sm:$0xff]
    %v209 = vld [vmem:[%s0 + $0x5d8] sm:$0xff]
    %v210 = vld [vmem:[%s0 + $0x5e0] sm:$0xff]
    %v211 = vld [vmem:[%s0 + $0x5e8] sm:$0xff]
    %v212 = vld [vmem:[%s0 + $0x5f0] sm:$0xff]
    %v213 = vld [vmem:[%s0 + $0x5f8] sm:$0xff]
    %v214 = vld [vmem:[%s0 + $0x600] sm:$0xff]
    %v215 = vld [vmem:[%s0 + $0x608] sm:$0xff]
    %v216 = vld [vmem:[%s0 + $0x610] sm:$0xff]
    %v217 = vld [vmem:[%s0 + $0x618] sm:$0xff]
    %v218 = vld [vmem:[%s0 + $0x620] sm:$0xff]
    %v219 = vld [vmem:[%s0 + $0x628] sm:$0xff]
    %v220 = vld [vmem:[%s0 + $0x630] sm:$0xff]
    %v221 = vld [vmem:[%s0 + $0x638] sm:$0xff]
    %v222 = vld [vmem:[%s0 + $0x640] sm:$0xff]
    %v223 = vld [vmem:[%s0 + $0x648] sm:$0xff]
    %v224 = vld [vmem:[%s0 + $0x650] sm:$0xff]
    %v225 = vld [vmem:[%s0 + $0x658] sm:$0xff]
    %v226 = vld [vmem:[%s0 + $0x660] sm:$0xff]
    %v227 = vld [vmem:[%s0 + $0x668] sm:$0xff]
    %v228 = vld [vmem:[%s0 + $0x670] sm:$0xff]
    %v229 = vld [vmem:[%s0 + $0x678] sm:$0xff]
    %v230 = vld [vmem:[%s0 + $0x680] sm:$0xff]
    %v231 = vld [vmem:[%s0 + $0x688] sm:$0xff]
    %v232 = vld [vmem:[%s0 + $0x690] sm:$0xff]
    %v233 = vld [vmem:[%s0 + $0x698] sm:$0xff]
    %v234 = vld [vmem:[%s0 + $0x6a0] sm:$0xff]
    %v235 = vld [vmem:[%s0 + $0x6a8] sm:$0xff]
    %v236 = vld [vmem:[%s0 + $0x6b0] sm:$0xff]
    %v237 = vld [vmem:[%s0 + $0x6b8] sm:$0xff]
    %v238 = vld [vmem:[%s0 + $0x6c0] sm:$0xff]
    %v239 = vld [vmem:[%s0 + $0x6c8] sm:$0xff]
    %v240 = vld [vmem:[%s0 + $0x6d0] sm:$0xff]
    %v241 = vld [vmem:[%s0 + $0x6d8] sm:$0xff]
    %v242 = vld [vmem:[%s0 + $0x6e0] sm:$0xff]
    %v243 = vld [vmem:[%s0 + $0x6e8] sm:$0xff]
    %v244 = vld [vmem:[%s0 + $0x6f0] sm:$0xff]
    %v245 = vld [vmem:[%s0 + $0x6f8] sm:$0xff]
    %v246 = vpack.c.bf16 %v29, %v22
    %v247 = vpack.c.bf16 %v30, %v23
    %v248 = vpack.c.bf16 %v31, %v24
    %v249 = vpack.c.bf16 %v32, %v25
    %v250 = vpack.c.bf16 %v33, %v26
    %v251 = vpack.c.bf16 %v34, %v27
    %v252 = vpack.c.bf16 %v35, %v28
    %v253 = vpack.c.bf16 %v43, %v36
    %v254 = vpack.c.bf16 %v44, %v37
    %v255 = vpack.c.bf16 %v45, %v38
    %v256 = vpack.c.bf16 %v46, %v39
    %v257 = vpack.c.bf16 %v47, %v40
    %v258 = vpack.c.bf16 %v48, %v41
    %v259 = vpack.c.bf16 %v49, %v42
    %v260 = vpack.c.bf16 %v57, %v50
    %v261 = vpack.c.bf16 %v58, %v51
    %v262 = vpack.c.bf16 %v59, %v52
    %v263 = vpack.c.bf16 %v60, %v53
    %v264 = vpack.c.bf16 %v61, %v54
    %v265 = vpack.c.bf16 %v62, %v55
    %v266 = vpack.c.bf16 %v63, %v56
    %v267 = vpack.c.bf16 %v71, %v64
    %v268 = vpack.c.bf16 %v72, %v65
    %v269 = vpack.c.bf16 %v73, %v66
    %v270 = vpack.c.bf16 %v74, %v67
    %v271 = vpack.c.bf16 %v75, %v68
    %v272 = vpack.c.bf16 %v76, %v69
    %v273 = vpack.c.bf16 %v77, %v70
    %v274 = vpack.c.bf16 %v85, %v78
    %v275 = vpack.c.bf16 %v86, %v79
    %v276 = vpack.c.bf16 %v87, %v80
    %v277 = vpack.c.bf16 %v88, %v81
    %v278 = vpack.c.bf16 %v89, %v82
    %v279 = vpack.c.bf16 %v90, %v83
    %v280 = vpack.c.bf16 %v91, %v84
    %v281 = vpack.c.bf16 %v99, %v92
    %v282 = vpack.c.bf16 %v100, %v93
    %v283 = vpack.c.bf16 %v101, %v94
    %v284 = vpack.c.bf16 %v102, %v95
    %v285 = vpack.c.bf16 %v103, %v96
    %v286 = vpack.c.bf16 %v104, %v97
    %v287 = vpack.c.bf16 %v105, %v98
    %v288 = vpack.c.bf16 %v113, %v106
    %v289 = vpack.c.bf16 %v114, %v107
    %v290 = vpack.c.bf16 %v115, %v108
    %v291 = vpack.c.bf16 %v116, %v109
    %v292 = vpack.c.bf16 %v117, %v110
    %v293 = vpack.c.bf16 %v118, %v111
    %v294 = vpack.c.bf16 %v119, %v112
    %v295 = vpack.c.bf16 %v127, %v120
    %v296 = vpack.c.bf16 %v128, %v121
    %v297 = vpack.c.bf16 %v129, %v122
    %v298 = vpack.c.bf16 %v130, %v123
    %v299 = vpack.c.bf16 %v131, %v124
    %v300 = vpack.c.bf16 %v132, %v125
    %v301 = vpack.c.bf16 %v133, %v126
    %v302 = vpack.c.bf16 %v141, %v134
    %v303 = vpack.c.bf16 %v142, %v135
    %v304 = vpack.c.bf16 %v143, %v136
    %v305 = vpack.c.bf16 %v144, %v137
    %v306 = vpack.c.bf16 %v145, %v138
    %v307 = vpack.c.bf16 %v146, %v139
    %v308 = vpack.c.bf16 %v147, %v140
    %v309 = vpack.c.bf16 %v155, %v148
    %v310 = vpack.c.bf16 %v156, %v149
    %v311 = vpack.c.bf16 %v157, %v150
    %v312 = vpack.c.bf16 %v158, %v151
    %v313 = vpack.c.bf16 %v159, %v152
    %v314 = vpack.c.bf16 %v160, %v153
    %v315 = vpack.c.bf16 %v161, %v154
    %v316 = vpack.c.bf16 %v169, %v162
    %v317 = vpack.c.bf16 %v170, %v163
    %v318 = vpack.c.bf16 %v171, %v164
    %v319 = vpack.c.bf16 %v172, %v165
    %v320 = vpack.c.bf16 %v173, %v166
    %v321 = vpack.c.bf16 %v174, %v167
    %v322 = vpack.c.bf16 %v175, %v168
    %v323 = vpack.c.bf16 %v183, %v176
    %v324 = vpack.c.bf16 %v184, %v177
    %v325 = vpack.c.bf16 %v185, %v178
    %v326 = vpack.c.bf16 %v186, %v179
    %v327 = vpack.c.bf16 %v187, %v180
    %v328 = vpack.c.bf16 %v188, %v181
    %v329 = vpack.c.bf16 %v189, %v182
    %v330 = vpack.c.bf16 %v197, %v190
    %v331 = vpack.c.bf16 %v198, %v191
    %v332 = vpack.c.bf16 %v199, %v192
    %v333 = vpack.c.bf16 %v200, %v193
    %v334 = vpack.c.bf16 %v201, %v194
    %v335 = vpack.c.bf16 %v202, %v195
    %v336 = vpack.c.bf16 %v203, %v196
    %v337 = vpack.c.bf16 %v211, %v204
    %v338 = vpack.c.bf16 %v212, %v205
    %v339 = vpack.c.bf16 %v213, %v206
    %v340 = vpack.c.bf16 %v214, %v207
    %v341 = vpack.c.bf16 %v215, %v208
    %v342 = vpack.c.bf16 %v216, %v209
    %v343 = vpack.c.bf16 %v217, %v210
    %v344 = vpack.c.bf16 %v225, %v218
    %v345 = vpack.c.bf16 %v226, %v219
    %v346 = vpack.c.bf16 %v227, %v220
    %v347 = vpack.c.bf16 %v228, %v221
    %v348 = vpack.c.bf16 %v229, %v222
    %v349 = vpack.c.bf16 %v230, %v223
    %v350 = vpack.c.bf16 %v231, %v224
    %v351 = vpack.c.bf16 %v239, %v232
    %v352 = vpack.c.bf16 %v240, %v233
    %v353 = vpack.c.bf16 %v241, %v234
    %v354 = vpack.c.bf16 %v242, %v235
    %v355 = vpack.c.bf16 %v243, %v236
    %v356 = vpack.c.bf16 %v244, %v237
    %v357 = vpack.c.bf16 %v245, %v238
    %v358 = vld [vmem:[%s1] sm:$0xff]
    %v359 = vld [vmem:[%s1 + $0x8] sm:$0xff]
    %v360 = vld [vmem:[%s1 + $0x10] sm:$0xff]
    %v361 = vld [vmem:[%s1 + $0x18] sm:$0xff]
    %v362 = vld [vmem:[%s1 + $0x20] sm:$0xff]
    %v363 = vld [vmem:[%s1 + $0x28] sm:$0xff]
    %v364 = vld [vmem:[%s1 + $0x30] sm:$0xff]
    %v365 = vld [vmem:[%s1 + $0x38] sm:$0xff]
    %v366 = vld [vmem:[%s1 + $0x40] sm:$0xff]
    %v367 = vld [vmem:[%s1 + $0x48] sm:$0xff]
    %v368 = vld [vmem:[%s1 + $0x50] sm:$0xff]
    %v369 = vld [vmem:[%s1 + $0x58] sm:$0xff]
    %v370 = vld [vmem:[%s1 + $0x60] sm:$0xff]
    %v371 = vld [vmem:[%s1 + $0x68] sm:$0xff]
    %v372 = vld [vmem:[%s1 + $0x70] sm:$0xff]
    %v373 = vld [vmem:[%s1 + $0x78] sm:$0xff]
    %v374 = vld [vmem:[%s1 + $0x80] sm:$0xff]
    %v375 = vld [vmem:[%s1 + $0x88] sm:$0xff]
    %v376 = vld [vmem:[%s1 + $0x90] sm:$0xff]
    %v377 = vld [vmem:[%s1 + $0x98] sm:$0xff]
    %v378 = vld [vmem:[%s1 + $0xa0] sm:$0xff]
    %v379 = vld [vmem:[%s1 + $0xa8] sm:$0xff]
    %v380 = vld [vmem:[%s1 + $0xb0] sm:$0xff]
    %v381 = vld [vmem:[%s1 + $0xb8] sm:$0xff]
    %v382 = vld [vmem:[%s1 + $0xc0] sm:$0xff]
    %v383 = vld [vmem:[%s1 + $0xc8] sm:$0xff]
    %v384 = vld [vmem:[%s1 + $0xd0] sm:$0xff]
    %v385 = vld [vmem:[%s1 + $0xd8] sm:$0xff]
    %v386 = vld [vmem:[%s1 + $0xe0] sm:$0xff]
    %v387 = vld [vmem:[%s1 + $0xe8] sm:$0xff]
    %v388 = vld [vmem:[%s1 + $0xf0] sm:$0xff]
    %v389 = vld [vmem:[%s1 + $0xf8] sm:$0xff]
    %v390 = vld [vmem:[%s1 + $0x100] sm:$0xff]
    %v391 = vld [vmem:[%s1 + $0x108] sm:$0xff]
    %v392 = vld [vmem:[%s1 + $0x110] sm:$0xff]
    %v393 = vld [vmem:[%s1 + $0x118] sm:$0xff]
    %v394 = vld [vmem:[%s1 + $0x120] sm:$0xff]
    %v395 = vld [vmem:[%s1 + $0x128] sm:$0xff]
    %v396 = vld [vmem:[%s1 + $0x130] sm:$0xff]
    %v397 = vld [vmem:[%s1 + $0x138] sm:$0xff]
    %v398 = vld [vmem:[%s1 + $0x140] sm:$0xff]
    %v399 = vld [vmem:[%s1 + $0x148] sm:$0xff]
    %v400 = vld [vmem:[%s1 + $0x150] sm:$0xff]
    %v401 = vld [vmem:[%s1 + $0x158] sm:$0xff]
    %v402 = vld [vmem:[%s1 + $0x160] sm:$0xff]
    %v403 = vld [vmem:[%s1 + $0x168] sm:$0xff]
    %v404 = vld [vmem:[%s1 + $0x170] sm:$0xff]
    %v405 = vld [vmem:[%s1 + $0x178] sm:$0xff]
    %v406 = vld [vmem:[%s1 + $0x180] sm:$0xff]
    %v407 = vld [vmem:[%s1 + $0x188] sm:$0xff]
    %v408 = vld [vmem:[%s1 + $0x190] sm:$0xff]
    %v409 = vld [vmem:[%s1 + $0x198] sm:$0xff]
    %v410 = vld [vmem:[%s1 + $0x1a0] sm:$0xff]
    %v411 = vld [vmem:[%s1 + $0x1a8] sm:$0xff]
    %v412 = vld [vmem:[%s1 + $0x1b0] sm:$0xff]
    %v413 = vld [vmem:[%s1 + $0x1b8] sm:$0xff]
    %v414 = vld [vmem:[%s1 + $0x1c0] sm:$0xff]
    %v415 = vld [vmem:[%s1 + $0x1c8] sm:$0xff]
    %v416 = vld [vmem:[%s1 + $0x1d0] sm:$0xff]
    %v417 = vld [vmem:[%s1 + $0x1d8] sm:$0xff]
    %v418 = vld [vmem:[%s1 + $0x1e0] sm:$0xff]
    %v419 = vld [vmem:[%s1 + $0x1e8] sm:$0xff]
    %v420 = vld [vmem:[%s1 + $0x1f0] sm:$0xff]
    %v421 = vld [vmem:[%s1 + $0x1f8] sm:$0xff]
    %v422 = vld [vmem:[%s1 + $0x200] sm:$0xff]
    %v423 = vld [vmem:[%s1 + $0x208] sm:$0xff]
    %v424 = vld [vmem:[%s1 + $0x210] sm:$0xff]
    %v425 = vld [vmem:[%s1 + $0x218] sm:$0xff]
    %v426 = vld [vmem:[%s1 + $0x220] sm:$0xff]
    %v427 = vld [vmem:[%s1 + $0x228] sm:$0xff]
    %v428 = vld [vmem:[%s1 + $0x230] sm:$0xff]
    %v429 = vld [vmem:[%s1 + $0x238] sm:$0xff]
    %v430 = vld [vmem:[%s1 + $0x240] sm:$0xff]
    %v431 = vld [vmem:[%s1 + $0x248] sm:$0xff]
    %v432 = vld [vmem:[%s1 + $0x250] sm:$0xff]
    %v433 = vld [vmem:[%s1 + $0x258] sm:$0xff]
    %v434 = vld [vmem:[%s1 + $0x260] sm:$0xff]
    %v435 = vld [vmem:[%s1 + $0x268] sm:$0xff]
    %v436 = vld [vmem:[%s1 + $0x270] sm:$0xff]
    %v437 = vld [vmem:[%s1 + $0x278] sm:$0xff]
    %v438 = vld [vmem:[%s1 + $0x280] sm:$0xff]
    %v439 = vld [vmem:[%s1 + $0x288] sm:$0xff]
    %v440 = vld [vmem:[%s1 + $0x290] sm:$0xff]
    %v441 = vld [vmem:[%s1 + $0x298] sm:$0xff]
    %v442 = vld [vmem:[%s1 + $0x2a0] sm:$0xff]
    %v443 = vld [vmem:[%s1 + $0x2a8] sm:$0xff]
    %v444 = vld [vmem:[%s1 + $0x2b0] sm:$0xff]
    %v445 = vld [vmem:[%s1 + $0x2b8] sm:$0xff]
    %v446 = vld [vmem:[%s1 + $0x2c0] sm:$0xff]
    %v447 = vld [vmem:[%s1 + $0x2c8] sm:$0xff]
    %v448 = vld [vmem:[%s1 + $0x2d0] sm:$0xff]
    %v449 = vld [vmem:[%s1 + $0x2d8] sm:$0xff]
    %v450 = vld [vmem:[%s1 + $0x2e0] sm:$0xff]
    %v451 = vld [vmem:[%s1 + $0x2e8] sm:$0xff]
    %v452 = vld [vmem:[%s1 + $0x2f0] sm:$0xff]
    %v453 = vld [vmem:[%s1 + $0x2f8] sm:$0xff]
    %v454 = vld [vmem:[%s1 + $0x300] sm:$0xff]
    %v455 = vld [vmem:[%s1 + $0x308] sm:$0xff]
    %v456 = vld [vmem:[%s4] ss:$4 sm:$0x3]
    %v458 = vperm.slane %v456, 0
    %v459 = vperm.slane %v456, 1
    %v560 = vunpack.c.l.b16 %v358
    %v561 = vunpack.c.h.b16 %v358
    %v562 = vunpack.c.l.b16 %v359
    %v563 = vunpack.c.h.b16 %v359
    %v564 = vunpack.c.l.b16 %v360
    %v565 = vunpack.c.h.b16 %v360
    %v566 = vunpack.c.l.b16 %v361
    %v567 = vunpack.c.h.b16 %v361
    %v568 = vunpack.c.l.b16 %v362
    %v569 = vunpack.c.h.b16 %v362
    %v570 = vunpack.c.l.b16 %v363
    %v571 = vunpack.c.h.b16 %v363
    %v572 = vunpack.c.l.b16 %v364
    %v573 = vunpack.c.h.b16 %v364
    %v574 = vunpack.c.l.b16 %v365
    %v575 = vunpack.c.h.b16 %v365
    %v576 = vunpack.c.l.b16 %v366
    %v577 = vunpack.c.h.b16 %v366
    %v578 = vunpack.c.l.b16 %v367
    %v579 = vunpack.c.h.b16 %v367
    %v580 = vunpack.c.l.b16 %v368
    %v581 = vunpack.c.h.b16 %v368
    %v582 = vunpack.c.l.b16 %v369
    %v583 = vunpack.c.h.b16 %v369
    %v584 = vunpack.c.l.b16 %v370
    %v585 = vunpack.c.h.b16 %v370
    %v586 = vunpack.c.l.b16 %v371
    %v587 = vunpack.c.h.b16 %v371
    %v588 = vunpack.c.l.b16 %v372
    %v589 = vunpack.c.h.b16 %v372
    %v590 = vunpack.c.l.b16 %v373
    %v591 = vunpack.c.h.b16 %v373
    %v592 = vunpack.c.l.b16 %v374
    %v593 = vunpack.c.h.b16 %v374
    %v594 = vunpack.c.l.b16 %v375
    %v595 = vunpack.c.h.b16 %v375
    %v596 = vunpack.c.l.b16 %v376
    %v597 = vunpack.c.h.b16 %v376
    %v598 = vunpack.c.l.b16 %v377
    %v599 = vunpack.c.h.b16 %v377
    %v600 = vunpack.c.l.b16 %v378
    %v601 = vunpack.c.h.b16 %v378
    %v602 = vunpack.c.l.b16 %v379
    %v603 = vunpack.c.h.b16 %v379
    %v604 = vunpack.c.l.b16 %v380
    %v605 = vunpack.c.h.b16 %v380
    %v606 = vunpack.c.l.b16 %v381
    %v607 = vunpack.c.h.b16 %v381
    %v608 = vunpack.c.l.b16 %v382
    %v609 = vunpack.c.h.b16 %v382
    %v610 = vunpack.c.l.b16 %v383
    %v611 = vunpack.c.h.b16 %v383
    %v612 = vunpack.c.l.b16 %v384
    %v613 = vunpack.c.h.b16 %v384
    %v614 = vunpack.c.l.b16 %v385
    %v615 = vunpack.c.h.b16 %v385
    %v616 = vunpack.c.l.b16 %v386
    %v617 = vunpack.c.h.b16 %v386
    %v618 = vunpack.c.l.b16 %v387
    %v619 = vunpack.c.h.b16 %v387
    %v620 = vunpack.c.l.b16 %v388
    %v621 = vunpack.c.h.b16 %v388
    %v622 = vunpack.c.l.b16 %v389
    %v623 = vunpack.c.h.b16 %v389
    %v624 = vunpack.c.l.b16 %v390
    %v625 = vunpack.c.h.b16 %v390
    %v626 = vunpack.c.l.b16 %v391
    %v627 = vunpack.c.h.b16 %v391
    %v628 = vunpack.c.l.b16 %v392
    %v629 = vunpack.c.h.b16 %v392
    %v630 = vunpack.c.l.b16 %v393
    %v631 = vunpack.c.h.b16 %v393
    %v632 = vunpack.c.l.b16 %v394
    %v633 = vunpack.c.h.b16 %v394
    %v634 = vunpack.c.l.b16 %v395
    %v635 = vunpack.c.h.b16 %v395
    %v636 = vunpack.c.l.b16 %v396
    %v637 = vunpack.c.h.b16 %v396
    %v638 = vunpack.c.l.b16 %v397
    %v639 = vunpack.c.h.b16 %v397
    %v640 = vunpack.c.l.b16 %v398
    %v641 = vunpack.c.h.b16 %v398
    %v642 = vunpack.c.l.b16 %v399
    %v643 = vunpack.c.h.b16 %v399
    %v644 = vunpack.c.l.b16 %v400
    %v645 = vunpack.c.h.b16 %v400
    %v646 = vunpack.c.l.b16 %v401
    %v647 = vunpack.c.h.b16 %v401
    %v648 = vunpack.c.l.b16 %v402
    %v649 = vunpack.c.h.b16 %v402
    %v650 = vunpack.c.l.b16 %v403
    %v651 = vunpack.c.h.b16 %v403
    %v652 = vunpack.c.l.b16 %v404
    %v653 = vunpack.c.h.b16 %v404
    %v654 = vunpack.c.l.b16 %v405
    %v655 = vunpack.c.h.b16 %v405
    %v656 = vunpack.c.l.b16 %v406
    %v657 = vunpack.c.h.b16 %v406
    %v658 = vunpack.c.l.b16 %v407
    %v659 = vunpack.c.h.b16 %v407
    %v660 = vunpack.c.l.b16 %v408
    %v661 = vunpack.c.h.b16 %v408
    %v662 = vunpack.c.l.b16 %v409
    %v663 = vunpack.c.h.b16 %v409
    %v664 = vunpack.c.l.b16 %v410
    %v665 = vunpack.c.h.b16 %v410
    %v666 = vunpack.c.l.b16 %v411
    %v667 = vunpack.c.h.b16 %v411
    %v668 = vunpack.c.l.b16 %v412
    %v669 = vunpack.c.h.b16 %v412
    %v670 = vunpack.c.l.b16 %v413
    %v671 = vunpack.c.h.b16 %v413
    %v672 = vunpack.c.l.b16 %v414
    %v673 = vunpack.c.h.b16 %v414
    %v674 = vunpack.c.l.b16 %v415
    %v675 = vunpack.c.h.b16 %v415
    %v676 = vunpack.c.l.b16 %v416
    %v677 = vunpack.c.h.b16 %v416
    %v678 = vunpack.c.l.b16 %v417
    %v679 = vunpack.c.h.b16 %v417
    %v680 = vunpack.c.l.b16 %v418
    %v681 = vunpack.c.h.b16 %v418
    %v682 = vunpack.c.l.b16 %v419
    %v683 = vunpack.c.h.b16 %v419
    %v684 = vunpack.c.l.b16 %v420
    %v685 = vunpack.c.h.b16 %v420
    %v686 = vunpack.c.l.b16 %v421
    %v687 = vunpack.c.h.b16 %v421
    %v688 = vunpack.c.l.b16 %v422
    %v689 = vunpack.c.h.b16 %v422
    %v690 = vunpack.c.l.b16 %v423
    %v691 = vunpack.c.h.b16 %v423
    %v692 = vunpack.c.l.b16 %v424
    %v693 = vunpack.c.h.b16 %v424
    %v694 = vunpack.c.l.b16 %v425
    %v695 = vunpack.c.h.b16 %v425
    %v696 = vunpack.c.l.b16 %v426
    %v697 = vunpack.c.h.b16 %v426
    %v698 = vunpack.c.l.b16 %v427
    %v699 = vunpack.c.h.b16 %v427
    %v700 = vunpack.c.l.b16 %v428
    %v701 = vunpack.c.h.b16 %v428
    %v702 = vunpack.c.l.b16 %v429
    %v703 = vunpack.c.h.b16 %v429
    %v704 = vunpack.c.l.b16 %v430
    %v705 = vunpack.c.h.b16 %v430
    %v706 = vunpack.c.l.b16 %v431
    %v707 = vunpack.c.h.b16 %v431
    %v708 = vunpack.c.l.b16 %v432
    %v709 = vunpack.c.h.b16 %v432
    %v710 = vunpack.c.l.b16 %v433
    %v711 = vunpack.c.h.b16 %v433
    %v712 = vunpack.c.l.b16 %v434
    %v713 = vunpack.c.h.b16 %v434
    %v714 = vunpack.c.l.b16 %v435
    %v715 = vunpack.c.h.b16 %v435
    %v716 = vunpack.c.l.b16 %v436
    %v717 = vunpack.c.h.b16 %v436
    %v718 = vunpack.c.l.b16 %v437
    %v719 = vunpack.c.h.b16 %v437
    %v720 = vunpack.c.l.b16 %v438
    %v721 = vunpack.c.h.b16 %v438
    %v722 = vunpack.c.l.b16 %v439
    %v723 = vunpack.c.h.b16 %v439
    %v724 = vunpack.c.l.b16 %v440
    %v725 = vunpack.c.h.b16 %v440
    %v726 = vunpack.c.l.b16 %v441
    %v727 = vunpack.c.h.b16 %v441
    %v728 = vunpack.c.l.b16 %v442
    %v729 = vunpack.c.h.b16 %v442
    %v730 = vunpack.c.l.b16 %v443
    %v731 = vunpack.c.h.b16 %v443
    %v732 = vunpack.c.l.b16 %v444
    %v733 = vunpack.c.h.b16 %v444
    %v734 = vunpack.c.l.b16 %v445
    %v735 = vunpack.c.h.b16 %v445
    %v736 = vunpack.c.l.b16 %v446
    %v737 = vunpack.c.h.b16 %v446
    %v738 = vunpack.c.l.b16 %v447
    %v739 = vunpack.c.h.b16 %v447
    %v740 = vunpack.c.l.b16 %v448
    %v741 = vunpack.c.h.b16 %v448
    %v742 = vunpack.c.l.b16 %v449
    %v743 = vunpack.c.h.b16 %v449
    %v744 = vunpack.c.l.b16 %v450
    %v745 = vunpack.c.h.b16 %v450
    %v746 = vunpack.c.l.b16 %v451
    %v747 = vunpack.c.h.b16 %v451
    %v748 = vunpack.c.l.b16 %v452
    %v749 = vunpack.c.h.b16 %v452
    %v750 = vunpack.c.l.b16 %v453
    %v751 = vunpack.c.h.b16 %v453
    %v752 = vunpack.c.l.b16 %v454
    %v753 = vunpack.c.h.b16 %v454
    %v754 = vunpack.c.l.b16 %v455
    %v755 = vunpack.c.h.b16 %v455
    %v756 = vpack.c.b16 %v562, %v560
    %v757 = vpack.c.b16 %v563, %v561
    %v758 = vpack.c.b16 %v566, %v564
    %v759 = vpack.c.b16 %v567, %v565
    %v760 = vpack.c.b16 %v570, %v568
    %v761 = vpack.c.b16 %v571, %v569
    %v762 = vpack.c.b16 %v574, %v572
    %v763 = vpack.c.b16 %v575, %v573
    %v764 = vpack.c.b16 %v578, %v576
    %v765 = vpack.c.b16 %v579, %v577
    %v766 = vpack.c.b16 %v582, %v580
    %v767 = vpack.c.b16 %v583, %v581
    %v768 = vpack.c.b16 %v586, %v584
    %v769 = vpack.c.b16 %v587, %v585
    %v770 = vpack.c.b16 %v590, %v588
    %v771 = vpack.c.b16 %v591, %v589
    %v772 = vpack.c.b16 %v594, %v592
    %v773 = vpack.c.b16 %v595, %v593
    %v774 = vpack.c.b16 %v598, %v596
    %v775 = vpack.c.b16 %v599, %v597
    %v776 = vpack.c.b16 %v602, %v600
    %v777 = vpack.c.b16 %v603, %v601
    %v778 = vpack.c.b16 %v606, %v604
    %v779 = vpack.c.b16 %v607, %v605
    %v780 = vpack.c.b16 %v610, %v608
    %v781 = vpack.c.b16 %v611, %v609
    %v782 = vpack.c.b16 %v614, %v612
    %v783 = vpack.c.b16 %v615, %v613
    %v784 = vpack.c.b16 %v618, %v616
    %v785 = vpack.c.b16 %v619, %v617
    %v786 = vpack.c.b16 %v622, %v620
    %v787 = vpack.c.b16 %v623, %v621
    %v788 = vpack.c.b16 %v626, %v624
    %v789 = vpack.c.b16 %v627, %v625
    %v790 = vpack.c.b16 %v630, %v628
    %v791 = vpack.c.b16 %v631, %v629
    %v792 = vpack.c.b16 %v634, %v632
    %v793 = vpack.c.b16 %v635, %v633
    %v794 = vpack.c.b16 %v638, %v636
    %v795 = vpack.c.b16 %v639, %v637
    %v796 = vpack.c.b16 %v642, %v640
    %v797 = vpack.c.b16 %v643, %v641
    %v798 = vpack.c.b16 %v646, %v644
    %v799 = vpack.c.b16 %v647, %v645
    %v800 = vpack.c.b16 %v650, %v648
    %v801 = vpack.c.b16 %v651, %v649
    %v802 = vpack.c.b16 %v654, %v652
    %v803 = vpack.c.b16 %v655, %v653
    %v804 = vpack.c.b16 %v658, %v656
    %v805 = vpack.c.b16 %v659, %v657
    %v806 = vpack.c.b16 %v662, %v660
    %v807 = vpack.c.b16 %v663, %v661
    %v808 = vpack.c.b16 %v666, %v664
    %v809 = vpack.c.b16 %v667, %v665
    %v810 = vpack.c.b16 %v670, %v668
    %v811 = vpack.c.b16 %v671, %v669
    %v812 = vpack.c.b16 %v674, %v672
    %v813 = vpack.c.b16 %v675, %v673
    %v814 = vpack.c.b16 %v678, %v676
    %v815 = vpack.c.b16 %v679, %v677
    %v816 = vpack.c.b16 %v682, %v680
    %v817 = vpack.c.b16 %v683, %v681
    %v818 = vpack.c.b16 %v686, %v684
    %v819 = vpack.c.b16 %v687, %v685
    %v820 = vpack.c.b16 %v690, %v688
    %v821 = vpack.c.b16 %v691, %v689
    %v822 = vpack.c.b16 %v694, %v692
    %v823 = vpack.c.b16 %v695, %v693
    %v824 = vpack.c.b16 %v698, %v696
    %v825 = vpack.c.b16 %v699, %v697
    %v826 = vpack.c.b16 %v702, %v700
    %v827 = vpack.c.b16 %v703, %v701
    %v828 = vpack.c.b16 %v706, %v704
    %v829 = vpack.c.b16 %v707, %v705
    %v830 = vpack.c.b16 %v710, %v708
    %v831 = vpack.c.b16 %v711, %v709
    %v832 = vpack.c.b16 %v714, %v712
    %v833 = vpack.c.b16 %v715, %v713
    %v834 = vpack.c.b16 %v718, %v716
    %v835 = vpack.c.b16 %v719, %v717
    %v836 = vpack.c.b16 %v722, %v720
    %v837 = vpack.c.b16 %v723, %v721
    %v838 = vpack.c.b16 %v726, %v724
    %v839 = vpack.c.b16 %v727, %v725
    %v840 = vpack.c.b16 %v730, %v728
    %v841 = vpack.c.b16 %v731, %v729
    %v842 = vpack.c.b16 %v734, %v732
    %v843 = vpack.c.b16 %v735, %v733
    %v844 = vpack.c.b16 %v738, %v736
    %v845 = vpack.c.b16 %v739, %v737
    %v846 = vpack.c.b16 %v742, %v740
    %v847 = vpack.c.b16 %v743, %v741
    %v848 = vpack.c.b16 %v746, %v744
    %v849 = vpack.c.b16 %v747, %v745
    %v850 = vpack.c.b16 %v750, %v748
    %v851 = vpack.c.b16 %v751, %v749
    %v852 = vpack.c.b16 %v754, %v752
    %v853 = vpack.c.b16 %v755, %v753
    %vm952 = vcmask 130048
    %v954 = vsel %vm952, %v252, 0
    %v957 = vsel %vm952, %v259, 0
    %v960 = vsel %vm952, %v266, 0
    %v963 = vsel %vm952, %v273, 0
    %v966 = vsel %vm952, %v280, 0
    %v969 = vsel %vm952, %v287, 0
    %v972 = vsel %vm952, %v294, 0
    %v975 = vsel %vm952, %v301, 0
    %v978 = vsel %vm952, %v308, 0
    %v981 = vsel %vm952, %v315, 0
    %v984 = vsel %vm952, %v322, 0
    %v987 = vsel %vm952, %v329, 0
    %v990 = vsel %vm952, %v336, 0
    %v993 = vsel %vm952, %v343, 0
    %v996 = vsel %vm952, %v350, 0
    %v999 = vsel %vm952, %v357, 0
    %1001 = vmatpush.bf16.msra.mxu0 %v770
    %1002 = vmatpush.bf16.msra.mxu0 %v768
    %1003 = vmatpush.bf16.msra.mxu0 %v766
    %1004 = vmatpush.bf16.msra.mxu0 %v764
    %1005 = vmatpush.bf16.msra.mxu0 %v762
    %1006 = vmatpush.bf16.msra.mxu0 %v760
    %1007 = vmatpush.bf16.msra.mxu0 %v758
    %1008 = vmatpush.bf16.msra.mxu0 %v756
    %1009 = vmatmul.bf16.gmra.mxu0 %v246
    %v1010 = vpop.f32.mrf.mxu0
    %v1011 = vadd.f32 %v458, %v1010
    %v1012 = vpop.f32.mrf.mxu0
    %v1013 = vadd.f32 %v458, %v1012
    %1014 = vmatmul.bf16.gmra.mxu0 %v253
    %v1015 = vpop.f32.mrf.mxu0
    %v1016 = vadd.f32 %v458, %v1015
    %v1017 = vpop.f32.mrf.mxu0
    %v1018 = vadd.f32 %v458, %v1017
    %1019 = vmatmul.bf16.gmra.mxu0 %v260
    %v1020 = vpop.f32.mrf.mxu0
    %v1021 = vadd.f32 %v458, %v1020
    %v1022 = vpop.f32.mrf.mxu0
    %v1023 = vadd.f32 %v458, %v1022
    %1024 = vmatmul.bf16.gmra.mxu0 %v267
    %v1025 = vpop.f32.mrf.mxu0
    %v1026 = vadd.f32 %v458, %v1025
    %v1027 = vpop.f32.mrf.mxu0
    %v1028 = vadd.f32 %v458, %v1027
    %1029 = vmatmul.bf16.gmra.mxu0 %v274
    %v1030 = vpop.f32.mrf.mxu0
    %v1031 = vadd.f32 %v458, %v1030
    %v1032 = vpop.f32.mrf.mxu0
    %v1033 = vadd.f32 %v458, %v1032
    %1034 = vmatmul.bf16.gmra.mxu0 %v281
    %v1035 = vpop.f32.mrf.mxu0
    %v1036 = vadd.f32 %v458, %v1035
    %v1037 = vpop.f32.mrf.mxu0
    %v1038 = vadd.f32 %v458, %v1037
    %1039 = vmatmul.bf16.gmra.mxu0 %v288
    %v1040 = vpop.f32.mrf.mxu0
    %v1041 = vadd.f32 %v458, %v1040
    %v1042 = vpop.f32.mrf.mxu0
    %v1043 = vadd.f32 %v458, %v1042
    %1044 = vmatmul.bf16.gmra.mxu0 %v295
    %v1045 = vpop.f32.mrf.mxu0
    %v1046 = vadd.f32 %v458, %v1045
    %v1047 = vpop.f32.mrf.mxu0
    %v1048 = vadd.f32 %v458, %v1047
    %1049 = vmatmul.bf16.gmra.mxu0 %v302
    %v1050 = vpop.f32.mrf.mxu0
    %v1051 = vadd.f32 %v458, %v1050
    %v1052 = vpop.f32.mrf.mxu0
    %v1053 = vadd.f32 %v458, %v1052
    %1054 = vmatmul.bf16.gmra.mxu0 %v309
    %v1055 = vpop.f32.mrf.mxu0
    %v1056 = vadd.f32 %v458, %v1055
    %v1057 = vpop.f32.mrf.mxu0
    %v1058 = vadd.f32 %v458, %v1057
    %1059 = vmatmul.bf16.gmra.mxu0 %v316
    %v1060 = vpop.f32.mrf.mxu0
    %v1061 = vadd.f32 %v458, %v1060
    %v1062 = vpop.f32.mrf.mxu0
    %v1063 = vadd.f32 %v458, %v1062
    %1064 = vmatmul.bf16.gmra.mxu0 %v323
    %v1065 = vpop.f32.mrf.mxu0
    %v1066 = vadd.f32 %v458, %v1065
    %v1067 = vpop.f32.mrf.mxu0
    %v1068 = vadd.f32 %v458, %v1067
    %1069 = vmatmul.bf16.gmra.mxu0 %v330
    %v1070 = vpop.f32.mrf.mxu0
    %v1071 = vadd.f32 %v458, %v1070
    %v1072 = vpop.f32.mrf.mxu0
    %v1073 = vadd.f32 %v458, %v1072
    %1074 = vmatmul.bf16.gmra.mxu0 %v337
    %v1075 = vpop.f32.mrf.mxu0
    %v1076 = vadd.f32 %v458, %v1075
    %v1077 = vpop.f32.mrf.mxu0
    %v1078 = vadd.f32 %v458, %v1077
    %1079 = vmatmul.bf16.gmra.mxu0 %v344
    %v1080 = vpop.f32.mrf.mxu0
    %v1081 = vadd.f32 %v458, %v1080
    %v1082 = vpop.f32.mrf.mxu0
    %v1083 = vadd.f32 %v458, %v1082
    %1084 = vmatmul.bf16.gmra.mxu0 %v351
    %v1085 = vpop.f32.mrf.mxu0
    %v1086 = vadd.f32 %v458, %v1085
    %v1087 = vpop.f32.mrf.mxu0
    %v1088 = vadd.f32 %v458, %v1087
    %1089 = vdwg.mxu0
    %1090 = vmatpush.bf16.msra.mxu0 %v786
    %1091 = vmatpush.bf16.msra.mxu0 %v784
    %1092 = vmatpush.bf16.msra.mxu0 %v782
    %1093 = vmatpush.bf16.msra.mxu0 %v780
    %1094 = vmatpush.bf16.msra.mxu0 %v778
    %1095 = vmatpush.bf16.msra.mxu0 %v776
    %1096 = vmatpush.bf16.msra.mxu0 %v774
    %1097 = vmatpush.bf16.msra.mxu0 %v772
    %1098 = vmatmul.bf16.gmra.mxu0 %v247
    %v1099 = vpop.f32.mrf.mxu0
    %v1100 = vadd.f32 %v1011, %v1099
    %v1101 = vpop.f32.mrf.mxu0
    %v1102 = vadd.f32 %v1013, %v1101
    %1103 = vmatmul.bf16.gmra.mxu0 %v254
    %v1104 = vpop.f32.mrf.mxu0
    %v1105 = vadd.f32 %v1016, %v1104
    %v1106 = vpop.f32.mrf.mxu0
    %v1107 = vadd.f32 %v1018, %v1106
    %1108 = vmatmul.bf16.gmra.mxu0 %v261
    %v1109 = vpop.f32.mrf.mxu0
    %v1110 = vadd.f32 %v1021, %v1109
    %v1111 = vpop.f32.mrf.mxu0
    %v1112 = vadd.f32 %v1023, %v1111
    %1113 = vmatmul.bf16.gmra.mxu0 %v268
    %v1114 = vpop.f32.mrf.mxu0
    %v1115 = vadd.f32 %v1026, %v1114
    %v1116 = vpop.f32.mrf.mxu0
    %v1117 = vadd.f32 %v1028, %v1116
    %1118 = vmatmul.bf16.gmra.mxu0 %v275
    %v1119 = vpop.f32.mrf.mxu0
    %v1120 = vadd.f32 %v1031, %v1119
    %v1121 = vpop.f32.mrf.mxu0
    %v1122 = vadd.f32 %v1033, %v1121
    %1123 = vmatmul.bf16.gmra.mxu0 %v282
    %v1124 = vpop.f32.mrf.mxu0
    %v1125 = vadd.f32 %v1036, %v1124
    %v1126 = vpop.f32.mrf.mxu0
    %v1127 = vadd.f32 %v1038, %v1126
    %1128 = vmatmul.bf16.gmra.mxu0 %v289
    %v1129 = vpop.f32.mrf.mxu0
    %v1130 = vadd.f32 %v1041, %v1129
    %v1131 = vpop.f32.mrf.mxu0
    %v1132 = vadd.f32 %v1043, %v1131
    %1133 = vmatmul.bf16.gmra.mxu0 %v296
    %v1134 = vpop.f32.mrf.mxu0
    %v1135 = vadd.f32 %v1046, %v1134
    %v1136 = vpop.f32.mrf.mxu0
    %v1137 = vadd.f32 %v1048, %v1136
    %1138 = vmatmul.bf16.gmra.mxu0 %v303
    %v1139 = vpop.f32.mrf.mxu0
    %v1140 = vadd.f32 %v1051, %v1139
    %v1141 = vpop.f32.mrf.mxu0
    %v1142 = vadd.f32 %v1053, %v1141
    %1143 = vmatmul.bf16.gmra.mxu0 %v310
    %v1144 = vpop.f32.mrf.mxu0
    %v1145 = vadd.f32 %v1056, %v1144
    %v1146 = vpop.f32.mrf.mxu0
    %v1147 = vadd.f32 %v1058, %v1146
    %1148 = vmatmul.bf16.gmra.mxu0 %v317
    %v1149 = vpop.f32.mrf.mxu0
    %v1150 = vadd.f32 %v1061, %v1149
    %v1151 = vpop.f32.mrf.mxu0
    %v1152 = vadd.f32 %v1063, %v1151
    %1153 = vmatmul.bf16.gmra.mxu0 %v324
    %v1154 = vpop.f32.mrf.mxu0
    %v1155 = vadd.f32 %v1066, %v1154
    %v1156 = vpop.f32.mrf.mxu0
    %v1157 = vadd.f32 %v1068, %v1156
    %1158 = vmatmul.bf16.gmra.mxu0 %v331
    %v1159 = vpop.f32.mrf.mxu0
    %v1160 = vadd.f32 %v1071, %v1159
    %v1161 = vpop.f32.mrf.mxu0
    %v1162 = vadd.f32 %v1073, %v1161
    %1163 = vmatmul.bf16.gmra.mxu0 %v338
    %v1164 = vpop.f32.mrf.mxu0
    %v1165 = vadd.f32 %v1076, %v1164
    %v1166 = vpop.f32.mrf.mxu0
    %v1167 = vadd.f32 %v1078, %v1166
    %1168 = vmatmul.bf16.gmra.mxu0 %v345
    %v1169 = vpop.f32.mrf.mxu0
    %v1170 = vadd.f32 %v1081, %v1169
    %v1171 = vpop.f32.mrf.mxu0
    %v1172 = vadd.f32 %v1083, %v1171
    %1173 = vmatmul.bf16.gmra.mxu0 %v352
    %v1174 = vpop.f32.mrf.mxu0
    %v1175 = vadd.f32 %v1086, %v1174
    %v1176 = vpop.f32.mrf.mxu0
    %v1177 = vadd.f32 %v1088, %v1176
    %1178 = vdwg.mxu0
    %1179 = vmatpush.bf16.msra.mxu0 %v802
    %1180 = vmatpush.bf16.msra.mxu0 %v800
    %1181 = vmatpush.bf16.msra.mxu0 %v798
    %1182 = vmatpush.bf16.msra.mxu0 %v796
    %1183 = vmatpush.bf16.msra.mxu0 %v794
    %1184 = vmatpush.bf16.msra.mxu0 %v792
    %1185 = vmatpush.bf16.msra.mxu0 %v790
    %1186 = vmatpush.bf16.msra.mxu0 %v788
    %1187 = vmatmul.bf16.gmra.mxu0 %v248
    %v1188 = vpop.f32.mrf.mxu0
    %v1189 = vadd.f32 %v1100, %v1188
    %v1190 = vpop.f32.mrf.mxu0
    %v1191 = vadd.f32 %v1102, %v1190
    %1192 = vmatmul.bf16.gmra.mxu0 %v255
    %v1193 = vpop.f32.mrf.mxu0
    %v1194 = vadd.f32 %v1105, %v1193
    %v1195 = vpop.f32.mrf.mxu0
    %v1196 = vadd.f32 %v1107, %v1195
    %1197 = vmatmul.bf16.gmra.mxu0 %v262
    %v1198 = vpop.f32.mrf.mxu0
    %v1199 = vadd.f32 %v1110, %v1198
    %v1200 = vpop.f32.mrf.mxu0
    %v1201 = vadd.f32 %v1112, %v1200
    %1202 = vmatmul.bf16.gmra.mxu0 %v269
    %v1203 = vpop.f32.mrf.mxu0
    %v1204 = vadd.f32 %v1115, %v1203
    %v1205 = vpop.f32.mrf.mxu0
    %v1206 = vadd.f32 %v1117, %v1205
    %1207 = vmatmul.bf16.gmra.mxu0 %v276
    %v1208 = vpop.f32.mrf.mxu0
    %v1209 = vadd.f32 %v1120, %v1208
    %v1210 = vpop.f32.mrf.mxu0
    %v1211 = vadd.f32 %v1122, %v1210
    %1212 = vmatmul.bf16.gmra.mxu0 %v283
    %v1213 = vpop.f32.mrf.mxu0
    %v1214 = vadd.f32 %v1125, %v1213
    %v1215 = vpop.f32.mrf.mxu0
    %v1216 = vadd.f32 %v1127, %v1215
    %1217 = vmatmul.bf16.gmra.mxu0 %v290
    %v1218 = vpop.f32.mrf.mxu0
    %v1219 = vadd.f32 %v1130, %v1218
    %v1220 = vpop.f32.mrf.mxu0
    %v1221 = vadd.f32 %v1132, %v1220
    %1222 = vmatmul.bf16.gmra.mxu0 %v297
    %v1223 = vpop.f32.mrf.mxu0
    %v1224 = vadd.f32 %v1135, %v1223
    %v1225 = vpop.f32.mrf.mxu0
    %v1226 = vadd.f32 %v1137, %v1225
    %1227 = vmatmul.bf16.gmra.mxu0 %v304
    %v1228 = vpop.f32.mrf.mxu0
    %v1229 = vadd.f32 %v1140, %v1228
    %v1230 = vpop.f32.mrf.mxu0
    %v1231 = vadd.f32 %v1142, %v1230
    %1232 = vmatmul.bf16.gmra.mxu0 %v311
    %v1233 = vpop.f32.mrf.mxu0
    %v1234 = vadd.f32 %v1145, %v1233
    %v1235 = vpop.f32.mrf.mxu0
    %v1236 = vadd.f32 %v1147, %v1235
    %1237 = vmatmul.bf16.gmra.mxu0 %v318
    %v1238 = vpop.f32.mrf.mxu0
    %v1239 = vadd.f32 %v1150, %v1238
    %v1240 = vpop.f32.mrf.mxu0
    %v1241 = vadd.f32 %v1152, %v1240
    %1242 = vmatmul.bf16.gmra.mxu0 %v325
    %v1243 = vpop.f32.mrf.mxu0
    %v1244 = vadd.f32 %v1155, %v1243
    %v1245 = vpop.f32.mrf.mxu0
    %v1246 = vadd.f32 %v1157, %v1245
    %1247 = vmatmul.bf16.gmra.mxu0 %v332
    %v1248 = vpop.f32.mrf.mxu0
    %v1249 = vadd.f32 %v1160, %v1248
    %v1250 = vpop.f32.mrf.mxu0
    %v1251 = vadd.f32 %v1162, %v1250
    %1252 = vmatmul.bf16.gmra.mxu0 %v339
    %v1253 = vpop.f32.mrf.mxu0
    %v1254 = vadd.f32 %v1165, %v1253
    %v1255 = vpop.f32.mrf.mxu0
    %v1256 = vadd.f32 %v1167, %v1255
    %1257 = vmatmul.bf16.gmra.mxu0 %v346
    %v1258 = vpop.f32.mrf.mxu0
    %v1259 = vadd.f32 %v1170, %v1258
    %v1260 = vpop.f32.mrf.mxu0
    %v1261 = vadd.f32 %v1172, %v1260
    %1262 = vmatmul.bf16.gmra.mxu0 %v353
    %v1263 = vpop.f32.mrf.mxu0
    %v1264 = vadd.f32 %v1175, %v1263
    %v1265 = vpop.f32.mrf.mxu0
    %v1266 = vadd.f32 %v1177, %v1265
    %1267 = vdwg.mxu0
    %1268 = vmatpush.bf16.msra.mxu0 %v818
    %1269 = vmatpush.bf16.msra.mxu0 %v816
    %1270 = vmatpush.bf16.msra.mxu0 %v814
    %1271 = vmatpush.bf16.msra.mxu0 %v812
    %1272 = vmatpush.bf16.msra.mxu0 %v810
    %1273 = vmatpush.bf16.msra.mxu0 %v808
    %1274 = vmatpush.bf16.msra.mxu0 %v806
    %1275 = vmatpush.bf16.msra.mxu0 %v804
    %1276 = vmatmul.bf16.gmra.mxu0 %v249
    %v1277 = vpop.f32.mrf.mxu0
    %v1278 = vadd.f32 %v1189, %v1277
    %v1279 = vpop.f32.mrf.mxu0
    %v1280 = vadd.f32 %v1191, %v1279
    %1281 = vmatmul.bf16.gmra.mxu0 %v256
    %v1282 = vpop.f32.mrf.mxu0
    %v1283 = vadd.f32 %v1194, %v1282
    %v1284 = vpop.f32.mrf.mxu0
    %v1285 = vadd.f32 %v1196, %v1284
    %1286 = vmatmul.bf16.gmra.mxu0 %v263
    %v1287 = vpop.f32.mrf.mxu0
    %v1288 = vadd.f32 %v1199, %v1287
    %v1289 = vpop.f32.mrf.mxu0
    %v1290 = vadd.f32 %v1201, %v1289
    %1291 = vmatmul.bf16.gmra.mxu0 %v270
    %v1292 = vpop.f32.mrf.mxu0
    %v1293 = vadd.f32 %v1204, %v1292
    %v1294 = vpop.f32.mrf.mxu0
    %v1295 = vadd.f32 %v1206, %v1294
    %1296 = vmatmul.bf16.gmra.mxu0 %v277
    %v1297 = vpop.f32.mrf.mxu0
    %v1298 = vadd.f32 %v1209, %v1297
    %v1299 = vpop.f32.mrf.mxu0
    %v1300 = vadd.f32 %v1211, %v1299
    %1301 = vmatmul.bf16.gmra.mxu0 %v284
    %v1302 = vpop.f32.mrf.mxu0
    %v1303 = vadd.f32 %v1214, %v1302
    %v1304 = vpop.f32.mrf.mxu0
    %v1305 = vadd.f32 %v1216, %v1304
    %1306 = vmatmul.bf16.gmra.mxu0 %v291
    %v1307 = vpop.f32.mrf.mxu0
    %v1308 = vadd.f32 %v1219, %v1307
    %v1309 = vpop.f32.mrf.mxu0
    %v1310 = vadd.f32 %v1221, %v1309
    %1311 = vmatmul.bf16.gmra.mxu0 %v298
    %v1312 = vpop.f32.mrf.mxu0
    %v1313 = vadd.f32 %v1224, %v1312
    %v1314 = vpop.f32.mrf.mxu0
    %v1315 = vadd.f32 %v1226, %v1314
    %1316 = vmatmul.bf16.gmra.mxu0 %v305
    %v1317 = vpop.f32.mrf.mxu0
    %v1318 = vadd.f32 %v1229, %v1317
    %v1319 = vpop.f32.mrf.mxu0
    %v1320 = vadd.f32 %v1231, %v1319
    %1321 = vmatmul.bf16.gmra.mxu0 %v312
    %v1322 = vpop.f32.mrf.mxu0
    %v1323 = vadd.f32 %v1234, %v1322
    %v1324 = vpop.f32.mrf.mxu0
    %v1325 = vadd.f32 %v1236, %v1324
    %1326 = vmatmul.bf16.gmra.mxu0 %v319
    %v1327 = vpop.f32.mrf.mxu0
    %v1328 = vadd.f32 %v1239, %v1327
    %v1329 = vpop.f32.mrf.mxu0
    %v1330 = vadd.f32 %v1241, %v1329
    %1331 = vmatmul.bf16.gmra.mxu0 %v326
    %v1332 = vpop.f32.mrf.mxu0
    %v1333 = vadd.f32 %v1244, %v1332
    %v1334 = vpop.f32.mrf.mxu0
    %v1335 = vadd.f32 %v1246, %v1334
    %1336 = vmatmul.bf16.gmra.mxu0 %v333
    %v1337 = vpop.f32.mrf.mxu0
    %v1338 = vadd.f32 %v1249, %v1337
    %v1339 = vpop.f32.mrf.mxu0
    %v1340 = vadd.f32 %v1251, %v1339
    %1341 = vmatmul.bf16.gmra.mxu0 %v340
    %v1342 = vpop.f32.mrf.mxu0
    %v1343 = vadd.f32 %v1254, %v1342
    %v1344 = vpop.f32.mrf.mxu0
    %v1345 = vadd.f32 %v1256, %v1344
    %1346 = vmatmul.bf16.gmra.mxu0 %v347
    %v1347 = vpop.f32.mrf.mxu0
    %v1348 = vadd.f32 %v1259, %v1347
    %v1349 = vpop.f32.mrf.mxu0
    %v1350 = vadd.f32 %v1261, %v1349
    %1351 = vmatmul.bf16.gmra.mxu0 %v354
    %v1352 = vpop.f32.mrf.mxu0
    %v1353 = vadd.f32 %v1264, %v1352
    %v1354 = vpop.f32.mrf.mxu0
    %v1355 = vadd.f32 %v1266, %v1354
    %1356 = vdwg.mxu0
    %1357 = vmatpush.bf16.msra.mxu0 %v834
    %1358 = vmatpush.bf16.msra.mxu0 %v832
    %1359 = vmatpush.bf16.msra.mxu0 %v830
    %1360 = vmatpush.bf16.msra.mxu0 %v828
    %1361 = vmatpush.bf16.msra.mxu0 %v826
    %1362 = vmatpush.bf16.msra.mxu0 %v824
    %1363 = vmatpush.bf16.msra.mxu0 %v822
    %1364 = vmatpush.bf16.msra.mxu0 %v820
    %1365 = vmatmul.bf16.gmra.mxu0 %v250
    %v1366 = vpop.f32.mrf.mxu0
    %v1367 = vadd.f32 %v1278, %v1366
    %v1368 = vpop.f32.mrf.mxu0
    %v1369 = vadd.f32 %v1280, %v1368
    %1370 = vmatmul.bf16.gmra.mxu0 %v257
    %v1371 = vpop.f32.mrf.mxu0
    %v1372 = vadd.f32 %v1283, %v1371
    %v1373 = vpop.f32.mrf.mxu0
    %v1374 = vadd.f32 %v1285, %v1373
    %1375 = vmatmul.bf16.gmra.mxu0 %v264
    %v1376 = vpop.f32.mrf.mxu0
    %v1377 = vadd.f32 %v1288, %v1376
    %v1378 = vpop.f32.mrf.mxu0
    %v1379 = vadd.f32 %v1290, %v1378
    %1380 = vmatmul.bf16.gmra.mxu0 %v271
    %v1381 = vpop.f32.mrf.mxu0
    %v1382 = vadd.f32 %v1293, %v1381
    %v1383 = vpop.f32.mrf.mxu0
    %v1384 = vadd.f32 %v1295, %v1383
    %1385 = vmatmul.bf16.gmra.mxu0 %v278
    %v1386 = vpop.f32.mrf.mxu0
    %v1387 = vadd.f32 %v1298, %v1386
    %v1388 = vpop.f32.mrf.mxu0
    %v1389 = vadd.f32 %v1300, %v1388
    %1390 = vmatmul.bf16.gmra.mxu0 %v285
    %v1391 = vpop.f32.mrf.mxu0
    %v1392 = vadd.f32 %v1303, %v1391
    %v1393 = vpop.f32.mrf.mxu0
    %v1394 = vadd.f32 %v1305, %v1393
    %1395 = vmatmul.bf16.gmra.mxu0 %v292
    %v1396 = vpop.f32.mrf.mxu0
    %v1397 = vadd.f32 %v1308, %v1396
    %v1398 = vpop.f32.mrf.mxu0
    %v1399 = vadd.f32 %v1310, %v1398
    %1400 = vmatmul.bf16.gmra.mxu0 %v299
    %v1401 = vpop.f32.mrf.mxu0
    %v1402 = vadd.f32 %v1313, %v1401
    %v1403 = vpop.f32.mrf.mxu0
    %v1404 = vadd.f32 %v1315, %v1403
    %1405 = vmatmul.bf16.gmra.mxu0 %v306
    %v1406 = vpop.f32.mrf.mxu0
    %v1407 = vadd.f32 %v1318, %v1406
    %v1408 = vpop.f32.mrf.mxu0
    %v1409 = vadd.f32 %v1320, %v1408
    %1410 = vmatmul.bf16.gmra.mxu0 %v313
    %v1411 = vpop.f32.mrf.mxu0
    %v1412 = vadd.f32 %v1323, %v1411
    %v1413 = vpop.f32.mrf.mxu0
    %v1414 = vadd.f32 %v1325, %v1413
    %1415 = vmatmul.bf16.gmra.mxu0 %v320
    %v1416 = vpop.f32.mrf.mxu0
    %v1417 = vadd.f32 %v1328, %v1416
    %v1418 = vpop.f32.mrf.mxu0
    %v1419 = vadd.f32 %v1330, %v1418
    %1420 = vmatmul.bf16.gmra.mxu0 %v327
    %v1421 = vpop.f32.mrf.mxu0
    %v1422 = vadd.f32 %v1333, %v1421
    %v1423 = vpop.f32.mrf.mxu0
    %v1424 = vadd.f32 %v1335, %v1423
    %1425 = vmatmul.bf16.gmra.mxu0 %v334
    %v1426 = vpop.f32.mrf.mxu0
    %v1427 = vadd.f32 %v1338, %v1426
    %v1428 = vpop.f32.mrf.mxu0
    %v1429 = vadd.f32 %v1340, %v1428
    %1430 = vmatmul.bf16.gmra.mxu0 %v341
    %v1431 = vpop.f32.mrf.mxu0
    %v1432 = vadd.f32 %v1343, %v1431
    %v1433 = vpop.f32.mrf.mxu0
    %v1434 = vadd.f32 %v1345, %v1433
    %1435 = vmatmul.bf16.gmra.mxu0 %v348
    %v1436 = vpop.f32.mrf.mxu0
    %v1437 = vadd.f32 %v1348, %v1436
    %v1438 = vpop.f32.mrf.mxu0
    %v1439 = vadd.f32 %v1350, %v1438
    %1440 = vmatmul.bf16.gmra.mxu0 %v355
    %v1441 = vpop.f32.mrf.mxu0
    %v1442 = vadd.f32 %v1353, %v1441
    %v1443 = vpop.f32.mrf.mxu0
    %v1444 = vadd.f32 %v1355, %v1443
    %1445 = vdwg.mxu0
    %1446 = vmatpush.bf16.msra.mxu0 %v850
    %1447 = vmatpush.bf16.msra.mxu0 %v848
    %1448 = vmatpush.bf16.msra.mxu0 %v846
    %1449 = vmatpush.bf16.msra.mxu0 %v844
    %1450 = vmatpush.bf16.msra.mxu0 %v842
    %1451 = vmatpush.bf16.msra.mxu0 %v840
    %1452 = vmatpush.bf16.msra.mxu0 %v838
    %1453 = vmatpush.bf16.msra.mxu0 %v836
    %1454 = vmatmul.bf16.gmra.mxu0 %v251
    %v1455 = vpop.f32.mrf.mxu0
    %v1456 = vadd.f32 %v1367, %v1455
    %v1457 = vpop.f32.mrf.mxu0
    %v1458 = vadd.f32 %v1369, %v1457
    %1459 = vmatmul.bf16.gmra.mxu0 %v258
    %v1460 = vpop.f32.mrf.mxu0
    %v1461 = vadd.f32 %v1372, %v1460
    %v1462 = vpop.f32.mrf.mxu0
    %v1463 = vadd.f32 %v1374, %v1462
    %1464 = vmatmul.bf16.gmra.mxu0 %v265
    %v1465 = vpop.f32.mrf.mxu0
    %v1466 = vadd.f32 %v1377, %v1465
    %v1467 = vpop.f32.mrf.mxu0
    %v1468 = vadd.f32 %v1379, %v1467
    %1469 = vmatmul.bf16.gmra.mxu0 %v272
    %v1470 = vpop.f32.mrf.mxu0
    %v1471 = vadd.f32 %v1382, %v1470
    %v1472 = vpop.f32.mrf.mxu0
    %v1473 = vadd.f32 %v1384, %v1472
    %1474 = vmatmul.bf16.gmra.mxu0 %v279
    %v1475 = vpop.f32.mrf.mxu0
    %v1476 = vadd.f32 %v1387, %v1475
    %v1477 = vpop.f32.mrf.mxu0
    %v1478 = vadd.f32 %v1389, %v1477
    %1479 = vmatmul.bf16.gmra.mxu0 %v286
    %v1480 = vpop.f32.mrf.mxu0
    %v1481 = vadd.f32 %v1392, %v1480
    %v1482 = vpop.f32.mrf.mxu0
    %v1483 = vadd.f32 %v1394, %v1482
    %1484 = vmatmul.bf16.gmra.mxu0 %v293
    %v1485 = vpop.f32.mrf.mxu0
    %v1486 = vadd.f32 %v1397, %v1485
    %v1487 = vpop.f32.mrf.mxu0
    %v1488 = vadd.f32 %v1399, %v1487
    %1489 = vmatmul.bf16.gmra.mxu0 %v300
    %v1490 = vpop.f32.mrf.mxu0
    %v1491 = vadd.f32 %v1402, %v1490
    %v1492 = vpop.f32.mrf.mxu0
    %v1493 = vadd.f32 %v1404, %v1492
    %1494 = vmatmul.bf16.gmra.mxu0 %v307
    %v1495 = vpop.f32.mrf.mxu0
    %v1496 = vadd.f32 %v1407, %v1495
    %v1497 = vpop.f32.mrf.mxu0
    %v1498 = vadd.f32 %v1409, %v1497
    %1499 = vmatmul.bf16.gmra.mxu0 %v314
    %v1500 = vpop.f32.mrf.mxu0
    %v1501 = vadd.f32 %v1412, %v1500
    %v1502 = vpop.f32.mrf.mxu0
    %v1503 = vadd.f32 %v1414, %v1502
    %1504 = vmatmul.bf16.gmra.mxu0 %v321
    %v1505 = vpop.f32.mrf.mxu0
    %v1506 = vadd.f32 %v1417, %v1505
    %v1507 = vpop.f32.mrf.mxu0
    %v1508 = vadd.f32 %v1419, %v1507
    %1509 = vmatmul.bf16.gmra.mxu0 %v328
    %v1510 = vpop.f32.mrf.mxu0
    %v1511 = vadd.f32 %v1422, %v1510
    %v1512 = vpop.f32.mrf.mxu0
    %v1513 = vadd.f32 %v1424, %v1512
    %1514 = vmatmul.bf16.gmra.mxu0 %v335
    %v1515 = vpop.f32.mrf.mxu0
    %v1516 = vadd.f32 %v1427, %v1515
    %v1517 = vpop.f32.mrf.mxu0
    %v1518 = vadd.f32 %v1429, %v1517
    %1519 = vmatmul.bf16.gmra.mxu0 %v342
    %v1520 = vpop.f32.mrf.mxu0
    %v1521 = vadd.f32 %v1432, %v1520
    %v1522 = vpop.f32.mrf.mxu0
    %v1523 = vadd.f32 %v1434, %v1522
    %1524 = vmatmul.bf16.gmra.mxu0 %v349
    %v1525 = vpop.f32.mrf.mxu0
    %v1526 = vadd.f32 %v1437, %v1525
    %v1527 = vpop.f32.mrf.mxu0
    %v1528 = vadd.f32 %v1439, %v1527
    %1529 = vmatmul.bf16.gmra.mxu0 %v356
    %v1530 = vpop.f32.mrf.mxu0
    %v1531 = vadd.f32 %v1442, %v1530
    %v1532 = vpop.f32.mrf.mxu0
    %v1533 = vadd.f32 %v1444, %v1532
    %1534 = vdwg.mxu0
    %1535 = vmatpush.bf16.msra.mxu0 0
    %1536 = vmatpush.bf16.msra.mxu0 0
    %1537 = vmatpush.bf16.msra.mxu0 0
    %1538 = vmatpush.bf16.msra.mxu0 0
    %1539 = vmatpush.bf16.msra.mxu0 0
    %1540 = vmatpush.bf16.msra.mxu0 0
    %1541 = vmatpush.bf16.msra.mxu0 0
    %1542 = vmatpush.bf16.msra.mxu0 %v852
    %1543 = vmatmul.bf16.gmra.mxu0 %v954
    %v1544 = vpop.f32.mrf.mxu0
    %v1545 = vadd.f32 %v1456, %v1544
    %v1546 = vpop.f32.mrf.mxu0
    %v1547 = vadd.f32 %v1458, %v1546
    %1548 = vmatmul.bf16.gmra.mxu0 %v957
    %v1549 = vpop.f32.mrf.mxu0
    %v1550 = vadd.f32 %v1461, %v1549
    %v1551 = vpop.f32.mrf.mxu0
    %v1552 = vadd.f32 %v1463, %v1551
    %1553 = vmatmul.bf16.gmra.mxu0 %v960
    %v1554 = vpop.f32.mrf.mxu0
    %v1555 = vadd.f32 %v1466, %v1554
    %v1556 = vpop.f32.mrf.mxu0
    %v1557 = vadd.f32 %v1468, %v1556
    %1558 = vmatmul.bf16.gmra.mxu0 %v963
    %v1559 = vpop.f32.mrf.mxu0
    %v1560 = vadd.f32 %v1471, %v1559
    %v1561 = vpop.f32.mrf.mxu0
    %v1562 = vadd.f32 %v1473, %v1561
    %1563 = vmatmul.bf16.gmra.mxu0 %v966
    %v1564 = vpop.f32.mrf.mxu0
    %v1565 = vadd.f32 %v1476, %v1564
    %v1566 = vpop.f32.mrf.mxu0
    %v1567 = vadd.f32 %v1478, %v1566
    %1568 = vmatmul.bf16.gmra.mxu0 %v969
    %v1569 = vpop.f32.mrf.mxu0
    %v1570 = vadd.f32 %v1481, %v1569
    %v1571 = vpop.f32.mrf.mxu0
    %v1572 = vadd.f32 %v1483, %v1571
    %1573 = vmatmul.bf16.gmra.mxu0 %v972
    %v1574 = vpop.f32.mrf.mxu0
    %v1575 = vadd.f32 %v1486, %v1574
    %v1576 = vpop.f32.mrf.mxu0
    %v1577 = vadd.f32 %v1488, %v1576
    %1578 = vmatmul.bf16.gmra.mxu0 %v975
    %v1579 = vpop.f32.mrf.mxu0
    %v1580 = vadd.f32 %v1491, %v1579
    %v1581 = vpop.f32.mrf.mxu0
    %v1582 = vadd.f32 %v1493, %v1581
    %1583 = vmatmul.bf16.gmra.mxu0 %v978
    %v1584 = vpop.f32.mrf.mxu0
    %v1585 = vadd.f32 %v1496, %v1584
    %v1586 = vpop.f32.mrf.mxu0
    %v1587 = vadd.f32 %v1498, %v1586
    %1588 = vmatmul.bf16.gmra.mxu0 %v981
    %v1589 = vpop.f32.mrf.mxu0
    %v1590 = vadd.f32 %v1501, %v1589
    %v1591 = vpop.f32.mrf.mxu0
    %v1592 = vadd.f32 %v1503, %v1591
    %1593 = vmatmul.bf16.gmra.mxu0 %v984
    %v1594 = vpop.f32.mrf.mxu0
    %v1595 = vadd.f32 %v1506, %v1594
    %v1596 = vpop.f32.mrf.mxu0
    %v1597 = vadd.f32 %v1508, %v1596
    %1598 = vmatmul.bf16.gmra.mxu0 %v987
    %v1599 = vpop.f32.mrf.mxu0
    %v1600 = vadd.f32 %v1511, %v1599
    %v1601 = vpop.f32.mrf.mxu0
    %v1602 = vadd.f32 %v1513, %v1601
    %1603 = vmatmul.bf16.gmra.mxu0 %v990
    %v1604 = vpop.f32.mrf.mxu0
    %v1605 = vadd.f32 %v1516, %v1604
    %v1606 = vpop.f32.mrf.mxu0
    %v1607 = vadd.f32 %v1518, %v1606
    %1608 = vmatmul.bf16.gmra.mxu0 %v993
    %v1609 = vpop.f32.mrf.mxu0
    %v1610 = vadd.f32 %v1521, %v1609
    %v1611 = vpop.f32.mrf.mxu0
    %v1612 = vadd.f32 %v1523, %v1611
    %1613 = vmatmul.bf16.gmra.mxu0 %v996
    %v1614 = vpop.f32.mrf.mxu0
    %v1615 = vadd.f32 %v1526, %v1614
    %v1616 = vpop.f32.mrf.mxu0
    %v1617 = vadd.f32 %v1528, %v1616
    %1618 = vmatmul.bf16.gmra.mxu0 %v999
    %v1619 = vpop.f32.mrf.mxu0
    %v1620 = vadd.f32 %v1531, %v1619
    %v1621 = vpop.f32.mrf.mxu0
    %v1622 = vadd.f32 %v1533, %v1621
    %1623 = vdwg.mxu0
    %1624 = vmatpush.bf16.msra.mxu0 %v771
    %1625 = vmatpush.bf16.msra.mxu0 %v769
    %1626 = vmatpush.bf16.msra.mxu0 %v767
    %1627 = vmatpush.bf16.msra.mxu0 %v765
    %1628 = vmatpush.bf16.msra.mxu0 %v763
    %1629 = vmatpush.bf16.msra.mxu0 %v761
    %1630 = vmatpush.bf16.msra.mxu0 %v759
    %1631 = vmatpush.bf16.msra.mxu0 %v757
    %1632 = vmatmul.bf16.gmra.mxu0 %v246
    %v1633 = vpop.f32.mrf.mxu0
    %v1634 = vadd.f32 %v459, %v1633
    %v1635 = vpop.f32.mrf.mxu0
    %v1636 = vadd.f32 %v459, %v1635
    %1637 = vmatmul.bf16.gmra.mxu0 %v253
    %v1638 = vpop.f32.mrf.mxu0
    %v1639 = vadd.f32 %v459, %v1638
    %v1640 = vpop.f32.mrf.mxu0
    %v1641 = vadd.f32 %v459, %v1640
    %1642 = vmatmul.bf16.gmra.mxu0 %v260
    %v1643 = vpop.f32.mrf.mxu0
    %v1644 = vadd.f32 %v459, %v1643
    %v1645 = vpop.f32.mrf.mxu0
    %v1646 = vadd.f32 %v459, %v1645
    %1647 = vmatmul.bf16.gmra.mxu0 %v267
    %v1648 = vpop.f32.mrf.mxu0
    %v1649 = vadd.f32 %v459, %v1648
    %v1650 = vpop.f32.mrf.mxu0
    %v1651 = vadd.f32 %v459, %v1650
    %1652 = vmatmul.bf16.gmra.mxu0 %v274
    %v1653 = vpop.f32.mrf.mxu0
    %v1654 = vadd.f32 %v459, %v1653
    %v1655 = vpop.f32.mrf.mxu0
    %v1656 = vadd.f32 %v459, %v1655
    %1657 = vmatmul.bf16.gmra.mxu0 %v281
    %v1658 = vpop.f32.mrf.mxu0
    %v1659 = vadd.f32 %v459, %v1658
    %v1660 = vpop.f32.mrf.mxu0
    %v1661 = vadd.f32 %v459, %v1660
    %1662 = vmatmul.bf16.gmra.mxu0 %v288
    %v1663 = vpop.f32.mrf.mxu0
    %v1664 = vadd.f32 %v459, %v1663
    %v1665 = vpop.f32.mrf.mxu0
    %v1666 = vadd.f32 %v459, %v1665
    %1667 = vmatmul.bf16.gmra.mxu0 %v295
    %v1668 = vpop.f32.mrf.mxu0
    %v1669 = vadd.f32 %v459, %v1668
    %v1670 = vpop.f32.mrf.mxu0
    %v1671 = vadd.f32 %v459, %v1670
    %1672 = vmatmul.bf16.gmra.mxu0 %v302
    %v1673 = vpop.f32.mrf.mxu0
    %v1674 = vadd.f32 %v459, %v1673
    %v1675 = vpop.f32.mrf.mxu0
    %v1676 = vadd.f32 %v459, %v1675
    %1677 = vmatmul.bf16.gmra.mxu0 %v309
    %v1678 = vpop.f32.mrf.mxu0
    %v1679 = vadd.f32 %v459, %v1678
    %v1680 = vpop.f32.mrf.mxu0
    %v1681 = vadd.f32 %v459, %v1680
    %1682 = vmatmul.bf16.gmra.mxu0 %v316
    %v1683 = vpop.f32.mrf.mxu0
    %v1684 = vadd.f32 %v459, %v1683
    %v1685 = vpop.f32.mrf.mxu0
    %v1686 = vadd.f32 %v459, %v1685
    %1687 = vmatmul.bf16.gmra.mxu0 %v323
    %v1688 = vpop.f32.mrf.mxu0
    %v1689 = vadd.f32 %v459, %v1688
    %v1690 = vpop.f32.mrf.mxu0
    %v1691 = vadd.f32 %v459, %v1690
    %1692 = vmatmul.bf16.gmra.mxu0 %v330
    %v1693 = vpop.f32.mrf.mxu0
    %v1694 = vadd.f32 %v459, %v1693
    %v1695 = vpop.f32.mrf.mxu0
    %v1696 = vadd.f32 %v459, %v1695
    %1697 = vmatmul.bf16.gmra.mxu0 %v337
    %v1698 = vpop.f32.mrf.mxu0
    %v1699 = vadd.f32 %v459, %v1698
    %v1700 = vpop.f32.mrf.mxu0
    %v1701 = vadd.f32 %v459, %v1700
    %1702 = vmatmul.bf16.gmra.mxu0 %v344
    %v1703 = vpop.f32.mrf.mxu0
    %v1704 = vadd.f32 %v459, %v1703
    %v1705 = vpop.f32.mrf.mxu0
    %v1706 = vadd.f32 %v459, %v1705
    %1707 = vmatmul.bf16.gmra.mxu0 %v351
    %v1708 = vpop.f32.mrf.mxu0
    %v1709 = vadd.f32 %v459, %v1708
    %v1710 = vpop.f32.mrf.mxu0
    %v1711 = vadd.f32 %v459, %v1710
    %1712 = vdwg.mxu0
    %1713 = vmatpush.bf16.msra.mxu0 %v787
    %1714 = vmatpush.bf16.msra.mxu0 %v785
    %1715 = vmatpush.bf16.msra.mxu0 %v783
    %1716 = vmatpush.bf16.msra.mxu0 %v781
    %1717 = vmatpush.bf16.msra.mxu0 %v779
    %1718 = vmatpush.bf16.msra.mxu0 %v777
    %1719 = vmatpush.bf16.msra.mxu0 %v775
    %1720 = vmatpush.bf16.msra.mxu0 %v773
    %1721 = vmatmul.bf16.gmra.mxu0 %v247
    %v1722 = vpop.f32.mrf.mxu0
    %v1723 = vadd.f32 %v1634, %v1722
    %v1724 = vpop.f32.mrf.mxu0
    %v1725 = vadd.f32 %v1636, %v1724
    %1726 = vmatmul.bf16.gmra.mxu0 %v254
    %v1727 = vpop.f32.mrf.mxu0
    %v1728 = vadd.f32 %v1639, %v1727
    %v1729 = vpop.f32.mrf.mxu0
    %v1730 = vadd.f32 %v1641, %v1729
    %1731 = vmatmul.bf16.gmra.mxu0 %v261
    %v1732 = vpop.f32.mrf.mxu0
    %v1733 = vadd.f32 %v1644, %v1732
    %v1734 = vpop.f32.mrf.mxu0
    %v1735 = vadd.f32 %v1646, %v1734
    %1736 = vmatmul.bf16.gmra.mxu0 %v268
    %v1737 = vpop.f32.mrf.mxu0
    %v1738 = vadd.f32 %v1649, %v1737
    %v1739 = vpop.f32.mrf.mxu0
    %v1740 = vadd.f32 %v1651, %v1739
    %1741 = vmatmul.bf16.gmra.mxu0 %v275
    %v1742 = vpop.f32.mrf.mxu0
    %v1743 = vadd.f32 %v1654, %v1742
    %v1744 = vpop.f32.mrf.mxu0
    %v1745 = vadd.f32 %v1656, %v1744
    %1746 = vmatmul.bf16.gmra.mxu0 %v282
    %v1747 = vpop.f32.mrf.mxu0
    %v1748 = vadd.f32 %v1659, %v1747
    %v1749 = vpop.f32.mrf.mxu0
    %v1750 = vadd.f32 %v1661, %v1749
    %1751 = vmatmul.bf16.gmra.mxu0 %v289
    %v1752 = vpop.f32.mrf.mxu0
    %v1753 = vadd.f32 %v1664, %v1752
    %v1754 = vpop.f32.mrf.mxu0
    %v1755 = vadd.f32 %v1666, %v1754
    %1756 = vmatmul.bf16.gmra.mxu0 %v296
    %v1757 = vpop.f32.mrf.mxu0
    %v1758 = vadd.f32 %v1669, %v1757
    %v1759 = vpop.f32.mrf.mxu0
    %v1760 = vadd.f32 %v1671, %v1759
    %1761 = vmatmul.bf16.gmra.mxu0 %v303
    %v1762 = vpop.f32.mrf.mxu0
    %v1763 = vadd.f32 %v1674, %v1762
    %v1764 = vpop.f32.mrf.mxu0
    %v1765 = vadd.f32 %v1676, %v1764
    %1766 = vmatmul.bf16.gmra.mxu0 %v310
    %v1767 = vpop.f32.mrf.mxu0
    %v1768 = vadd.f32 %v1679, %v1767
    %v1769 = vpop.f32.mrf.mxu0
    %v1770 = vadd.f32 %v1681, %v1769
    %1771 = vmatmul.bf16.gmra.mxu0 %v317
    %v1772 = vpop.f32.mrf.mxu0
    %v1773 = vadd.f32 %v1684, %v1772
    %v1774 = vpop.f32.mrf.mxu0
    %v1775 = vadd.f32 %v1686, %v1774
    %1776 = vmatmul.bf16.gmra.mxu0 %v324
    %v1777 = vpop.f32.mrf.mxu0
    %v1778 = vadd.f32 %v1689, %v1777
    %v1779 = vpop.f32.mrf.mxu0
    %v1780 = vadd.f32 %v1691, %v1779
    %1781 = vmatmul.bf16.gmra.mxu0 %v331
    %v1782 = vpop.f32.mrf.mxu0
    %v1783 = vadd.f32 %v1694, %v1782
    %v1784 = vpop.f32.mrf.mxu0
    %v1785 = vadd.f32 %v1696, %v1784
    %1786 = vmatmul.bf16.gmra.mxu0 %v338
    %v1787 = vpop.f32.mrf.mxu0
    %v1788 = vadd.f32 %v1699, %v1787
    %v1789 = vpop.f32.mrf.mxu0
    %v1790 = vadd.f32 %v1701, %v1789
    %1791 = vmatmul.bf16.gmra.mxu0 %v345
    %v1792 = vpop.f32.mrf.mxu0
    %v1793 = vadd.f32 %v1704, %v1792
    %v1794 = vpop.f32.mrf.mxu0
    %v1795 = vadd.f32 %v1706, %v1794
    %1796 = vmatmul.bf16.gmra.mxu0 %v352
    %v1797 = vpop.f32.mrf.mxu0
    %v1798 = vadd.f32 %v1709, %v1797
    %v1799 = vpop.f32.mrf.mxu0
    %v1800 = vadd.f32 %v1711, %v1799
    %1801 = vdwg.mxu0
    %1802 = vmatpush.bf16.msra.mxu0 %v803
    %1803 = vmatpush.bf16.msra.mxu0 %v801
    %1804 = vmatpush.bf16.msra.mxu0 %v799
    %1805 = vmatpush.bf16.msra.mxu0 %v797
    %1806 = vmatpush.bf16.msra.mxu0 %v795
    %1807 = vmatpush.bf16.msra.mxu0 %v793
    %1808 = vmatpush.bf16.msra.mxu0 %v791
    %1809 = vmatpush.bf16.msra.mxu0 %v789
    %1810 = vmatmul.bf16.gmra.mxu0 %v248
    %v1811 = vpop.f32.mrf.mxu0
    %v1812 = vadd.f32 %v1723, %v1811
    %v1813 = vpop.f32.mrf.mxu0
    %v1814 = vadd.f32 %v1725, %v1813
    %1815 = vmatmul.bf16.gmra.mxu0 %v255
    %v1816 = vpop.f32.mrf.mxu0
    %v1817 = vadd.f32 %v1728, %v1816
    %v1818 = vpop.f32.mrf.mxu0
    %v1819 = vadd.f32 %v1730, %v1818
    %1820 = vmatmul.bf16.gmra.mxu0 %v262
    %v1821 = vpop.f32.mrf.mxu0
    %v1822 = vadd.f32 %v1733, %v1821
    %v1823 = vpop.f32.mrf.mxu0
    %v1824 = vadd.f32 %v1735, %v1823
    %1825 = vmatmul.bf16.gmra.mxu0 %v269
    %v1826 = vpop.f32.mrf.mxu0
    %v1827 = vadd.f32 %v1738, %v1826
    %v1828 = vpop.f32.mrf.mxu0
    %v1829 = vadd.f32 %v1740, %v1828
    %1830 = vmatmul.bf16.gmra.mxu0 %v276
    %v1831 = vpop.f32.mrf.mxu0
    %v1832 = vadd.f32 %v1743, %v1831
    %v1833 = vpop.f32.mrf.mxu0
    %v1834 = vadd.f32 %v1745, %v1833
    %1835 = vmatmul.bf16.gmra.mxu0 %v283
    %v1836 = vpop.f32.mrf.mxu0
    %v1837 = vadd.f32 %v1748, %v1836
    %v1838 = vpop.f32.mrf.mxu0
    %v1839 = vadd.f32 %v1750, %v1838
    %1840 = vmatmul.bf16.gmra.mxu0 %v290
    %v1841 = vpop.f32.mrf.mxu0
    %v1842 = vadd.f32 %v1753, %v1841
    %v1843 = vpop.f32.mrf.mxu0
    %v1844 = vadd.f32 %v1755, %v1843
    %1845 = vmatmul.bf16.gmra.mxu0 %v297
    %v1846 = vpop.f32.mrf.mxu0
    %v1847 = vadd.f32 %v1758, %v1846
    %v1848 = vpop.f32.mrf.mxu0
    %v1849 = vadd.f32 %v1760, %v1848
    %1850 = vmatmul.bf16.gmra.mxu0 %v304
    %v1851 = vpop.f32.mrf.mxu0
    %v1852 = vadd.f32 %v1763, %v1851
    %v1853 = vpop.f32.mrf.mxu0
    %v1854 = vadd.f32 %v1765, %v1853
    %1855 = vmatmul.bf16.gmra.mxu0 %v311
    %v1856 = vpop.f32.mrf.mxu0
    %v1857 = vadd.f32 %v1768, %v1856
    %v1858 = vpop.f32.mrf.mxu0
    %v1859 = vadd.f32 %v1770, %v1858
    %1860 = vmatmul.bf16.gmra.mxu0 %v318
    %v1861 = vpop.f32.mrf.mxu0
    %v1862 = vadd.f32 %v1773, %v1861
    %v1863 = vpop.f32.mrf.mxu0
    %v1864 = vadd.f32 %v1775, %v1863
    %1865 = vmatmul.bf16.gmra.mxu0 %v325
    %v1866 = vpop.f32.mrf.mxu0
    %v1867 = vadd.f32 %v1778, %v1866
    %v1868 = vpop.f32.mrf.mxu0
    %v1869 = vadd.f32 %v1780, %v1868
    %1870 = vmatmul.bf16.gmra.mxu0 %v332
    %v1871 = vpop.f32.mrf.mxu0
    %v1872 = vadd.f32 %v1783, %v1871
    %v1873 = vpop.f32.mrf.mxu0
    %v1874 = vadd.f32 %v1785, %v1873
    %1875 = vmatmul.bf16.gmra.mxu0 %v339
    %v1876 = vpop.f32.mrf.mxu0
    %v1877 = vadd.f32 %v1788, %v1876
    %v1878 = vpop.f32.mrf.mxu0
    %v1879 = vadd.f32 %v1790, %v1878
    %1880 = vmatmul.bf16.gmra.mxu0 %v346
    %v1881 = vpop.f32.mrf.mxu0
    %v1882 = vadd.f32 %v1793, %v1881
    %v1883 = vpop.f32.mrf.mxu0
    %v1884 = vadd.f32 %v1795, %v1883
    %1885 = vmatmul.bf16.gmra.mxu0 %v353
    %v1886 = vpop.f32.mrf.mxu0
    %v1887 = vadd.f32 %v1798, %v1886
    %v1888 = vpop.f32.mrf.mxu0
    %v1889 = vadd.f32 %v1800, %v1888
    %1890 = vdwg.mxu0
    %1891 = vmatpush.bf16.msra.mxu0 %v819
    %1892 = vmatpush.bf16.msra.mxu0 %v817
    %1893 = vmatpush.bf16.msra.mxu0 %v815
    %1894 = vmatpush.bf16.msra.mxu0 %v813
    %1895 = vmatpush.bf16.msra.mxu0 %v811
    %1896 = vmatpush.bf16.msra.mxu0 %v809
    %1897 = vmatpush.bf16.msra.mxu0 %v807
    %1898 = vmatpush.bf16.msra.mxu0 %v805
    %1899 = vmatmul.bf16.gmra.mxu0 %v249
    %v1900 = vpop.f32.mrf.mxu0
    %v1901 = vadd.f32 %v1812, %v1900
    %v1902 = vpop.f32.mrf.mxu0
    %v1903 = vadd.f32 %v1814, %v1902
    %1904 = vmatmul.bf16.gmra.mxu0 %v256
    %v1905 = vpop.f32.mrf.mxu0
    %v1906 = vadd.f32 %v1817, %v1905
    %v1907 = vpop.f32.mrf.mxu0
    %v1908 = vadd.f32 %v1819, %v1907
    %1909 = vmatmul.bf16.gmra.mxu0 %v263
    %v1910 = vpop.f32.mrf.mxu0
    %v1911 = vadd.f32 %v1822, %v1910
    %v1912 = vpop.f32.mrf.mxu0
    %v1913 = vadd.f32 %v1824, %v1912
    %1914 = vmatmul.bf16.gmra.mxu0 %v270
    %v1915 = vpop.f32.mrf.mxu0
    %v1916 = vadd.f32 %v1827, %v1915
    %v1917 = vpop.f32.mrf.mxu0
    %v1918 = vadd.f32 %v1829, %v1917
    %1919 = vmatmul.bf16.gmra.mxu0 %v277
    %v1920 = vpop.f32.mrf.mxu0
    %v1921 = vadd.f32 %v1832, %v1920
    %v1922 = vpop.f32.mrf.mxu0
    %v1923 = vadd.f32 %v1834, %v1922
    %1924 = vmatmul.bf16.gmra.mxu0 %v284
    %v1925 = vpop.f32.mrf.mxu0
    %v1926 = vadd.f32 %v1837, %v1925
    %v1927 = vpop.f32.mrf.mxu0
    %v1928 = vadd.f32 %v1839, %v1927
    %1929 = vmatmul.bf16.gmra.mxu0 %v291
    %v1930 = vpop.f32.mrf.mxu0
    %v1931 = vadd.f32 %v1842, %v1930
    %v1932 = vpop.f32.mrf.mxu0
    %v1933 = vadd.f32 %v1844, %v1932
    %1934 = vmatmul.bf16.gmra.mxu0 %v298
    %v1935 = vpop.f32.mrf.mxu0
    %v1936 = vadd.f32 %v1847, %v1935
    %v1937 = vpop.f32.mrf.mxu0
    %v1938 = vadd.f32 %v1849, %v1937
    %1939 = vmatmul.bf16.gmra.mxu0 %v305
    %v1940 = vpop.f32.mrf.mxu0
    %v1941 = vadd.f32 %v1852, %v1940
    %v1942 = vpop.f32.mrf.mxu0
    %v1943 = vadd.f32 %v1854, %v1942
    %1944 = vmatmul.bf16.gmra.mxu0 %v312
    %v1945 = vpop.f32.mrf.mxu0
    %v1946 = vadd.f32 %v1857, %v1945
    %v1947 = vpop.f32.mrf.mxu0
    %v1948 = vadd.f32 %v1859, %v1947
    %1949 = vmatmul.bf16.gmra.mxu0 %v319
    %v1950 = vpop.f32.mrf.mxu0
    %v1951 = vadd.f32 %v1862, %v1950
    %v1952 = vpop.f32.mrf.mxu0
    %v1953 = vadd.f32 %v1864, %v1952
    %1954 = vmatmul.bf16.gmra.mxu0 %v326
    %v1955 = vpop.f32.mrf.mxu0
    %v1956 = vadd.f32 %v1867, %v1955
    %v1957 = vpop.f32.mrf.mxu0
    %v1958 = vadd.f32 %v1869, %v1957
    %1959 = vmatmul.bf16.gmra.mxu0 %v333
    %v1960 = vpop.f32.mrf.mxu0
    %v1961 = vadd.f32 %v1872, %v1960
    %v1962 = vpop.f32.mrf.mxu0
    %v1963 = vadd.f32 %v1874, %v1962
    %1964 = vmatmul.bf16.gmra.mxu0 %v340
    %v1965 = vpop.f32.mrf.mxu0
    %v1966 = vadd.f32 %v1877, %v1965
    %v1967 = vpop.f32.mrf.mxu0
    %v1968 = vadd.f32 %v1879, %v1967
    %1969 = vmatmul.bf16.gmra.mxu0 %v347
    %v1970 = vpop.f32.mrf.mxu0
    %v1971 = vadd.f32 %v1882, %v1970
    %v1972 = vpop.f32.mrf.mxu0
    %v1973 = vadd.f32 %v1884, %v1972
    %1974 = vmatmul.bf16.gmra.mxu0 %v354
    %v1975 = vpop.f32.mrf.mxu0
    %v1976 = vadd.f32 %v1887, %v1975
    %v1977 = vpop.f32.mrf.mxu0
    %v1978 = vadd.f32 %v1889, %v1977
    %1979 = vdwg.mxu0
    %1980 = vmatpush.bf16.msra.mxu0 %v835
    %1981 = vmatpush.bf16.msra.mxu0 %v833
    %1982 = vmatpush.bf16.msra.mxu0 %v831
    %1983 = vmatpush.bf16.msra.mxu0 %v829
    %1984 = vmatpush.bf16.msra.mxu0 %v827
    %1985 = vmatpush.bf16.msra.mxu0 %v825
    %1986 = vmatpush.bf16.msra.mxu0 %v823
    %1987 = vmatpush.bf16.msra.mxu0 %v821
    %1988 = vmatmul.bf16.gmra.mxu0 %v250
    %v1989 = vpop.f32.mrf.mxu0
    %v1990 = vadd.f32 %v1901, %v1989
    %v1991 = vpop.f32.mrf.mxu0
    %v1992 = vadd.f32 %v1903, %v1991
    %1993 = vmatmul.bf16.gmra.mxu0 %v257
    %v1994 = vpop.f32.mrf.mxu0
    %v1995 = vadd.f32 %v1906, %v1994
    %v1996 = vpop.f32.mrf.mxu0
    %v1997 = vadd.f32 %v1908, %v1996
    %1998 = vmatmul.bf16.gmra.mxu0 %v264
    %v1999 = vpop.f32.mrf.mxu0
    %v2000 = vadd.f32 %v1911, %v1999
    %v2001 = vpop.f32.mrf.mxu0
    %v2002 = vadd.f32 %v1913, %v2001
    %2003 = vmatmul.bf16.gmra.mxu0 %v271
    %v2004 = vpop.f32.mrf.mxu0
    %v2005 = vadd.f32 %v1916, %v2004
    %v2006 = vpop.f32.mrf.mxu0
    %v2007 = vadd.f32 %v1918, %v2006
    %2008 = vmatmul.bf16.gmra.mxu0 %v278
    %v2009 = vpop.f32.mrf.mxu0
    %v2010 = vadd.f32 %v1921, %v2009
    %v2011 = vpop.f32.mrf.mxu0
    %v2012 = vadd.f32 %v1923, %v2011
    %2013 = vmatmul.bf16.gmra.mxu0 %v285
    %v2014 = vpop.f32.mrf.mxu0
    %v2015 = vadd.f32 %v1926, %v2014
    %v2016 = vpop.f32.mrf.mxu0
    %v2017 = vadd.f32 %v1928, %v2016
    %2018 = vmatmul.bf16.gmra.mxu0 %v292
    %v2019 = vpop.f32.mrf.mxu0
    %v2020 = vadd.f32 %v1931, %v2019
    %v2021 = vpop.f32.mrf.mxu0
    %v2022 = vadd.f32 %v1933, %v2021
    %2023 = vmatmul.bf16.gmra.mxu0 %v299
    %v2024 = vpop.f32.mrf.mxu0
    %v2025 = vadd.f32 %v1936, %v2024
    %v2026 = vpop.f32.mrf.mxu0
    %v2027 = vadd.f32 %v1938, %v2026
    %2028 = vmatmul.bf16.gmra.mxu0 %v306
    %v2029 = vpop.f32.mrf.mxu0
    %v2030 = vadd.f32 %v1941, %v2029
    %v2031 = vpop.f32.mrf.mxu0
    %v2032 = vadd.f32 %v1943, %v2031
    %2033 = vmatmul.bf16.gmra.mxu0 %v313
    %v2034 = vpop.f32.mrf.mxu0
    %v2035 = vadd.f32 %v1946, %v2034
    %v2036 = vpop.f32.mrf.mxu0
    %v2037 = vadd.f32 %v1948, %v2036
    %2038 = vmatmul.bf16.gmra.mxu0 %v320
    %v2039 = vpop.f32.mrf.mxu0
    %v2040 = vadd.f32 %v1951, %v2039
    %v2041 = vpop.f32.mrf.mxu0
    %v2042 = vadd.f32 %v1953, %v2041
    %2043 = vmatmul.bf16.gmra.mxu0 %v327
    %v2044 = vpop.f32.mrf.mxu0
    %v2045 = vadd.f32 %v1956, %v2044
    %v2046 = vpop.f32.mrf.mxu0
    %v2047 = vadd.f32 %v1958, %v2046
    %2048 = vmatmul.bf16.gmra.mxu0 %v334
    %v2049 = vpop.f32.mrf.mxu0
    %v2050 = vadd.f32 %v1961, %v2049
    %v2051 = vpop.f32.mrf.mxu0
    %v2052 = vadd.f32 %v1963, %v2051
    %2053 = vmatmul.bf16.gmra.mxu0 %v341
    %v2054 = vpop.f32.mrf.mxu0
    %v2055 = vadd.f32 %v1966, %v2054
    %v2056 = vpop.f32.mrf.mxu0
    %v2057 = vadd.f32 %v1968, %v2056
    %2058 = vmatmul.bf16.gmra.mxu0 %v348
    %v2059 = vpop.f32.mrf.mxu0
    %v2060 = vadd.f32 %v1971, %v2059
    %v2061 = vpop.f32.mrf.mxu0
    %v2062 = vadd.f32 %v1973, %v2061
    %2063 = vmatmul.bf16.gmra.mxu0 %v355
    %v2064 = vpop.f32.mrf.mxu0
    %v2065 = vadd.f32 %v1976, %v2064
    %v2066 = vpop.f32.mrf.mxu0
    %v2067 = vadd.f32 %v1978, %v2066
    %2068 = vdwg.mxu0
    %2069 = vmatpush.bf16.msra.mxu0 %v851
    %2070 = vmatpush.bf16.msra.mxu0 %v849
    %2071 = vmatpush.bf16.msra.mxu0 %v847
    %2072 = vmatpush.bf16.msra.mxu0 %v845
    %2073 = vmatpush.bf16.msra.mxu0 %v843
    %2074 = vmatpush.bf16.msra.mxu0 %v841
    %2075 = vmatpush.bf16.msra.mxu0 %v839
    %2076 = vmatpush.bf16.msra.mxu0 %v837
    %2077 = vmatmul.bf16.gmra.mxu0 %v251
    %v2078 = vpop.f32.mrf.mxu0
    %v2079 = vadd.f32 %v1990, %v2078
    %v2080 = vpop.f32.mrf.mxu0
    %v2081 = vadd.f32 %v1992, %v2080
    %2082 = vmatmul.bf16.gmra.mxu0 %v258
    %v2083 = vpop.f32.mrf.mxu0
    %v2084 = vadd.f32 %v1995, %v2083
    %v2085 = vpop.f32.mrf.mxu0
    %v2086 = vadd.f32 %v1997, %v2085
    %2087 = vmatmul.bf16.gmra.mxu0 %v265
    %v2088 = vpop.f32.mrf.mxu0
    %v2089 = vadd.f32 %v2000, %v2088
    %v2090 = vpop.f32.mrf.mxu0
    %v2091 = vadd.f32 %v2002, %v2090
    %2092 = vmatmul.bf16.gmra.mxu0 %v272
    %v2093 = vpop.f32.mrf.mxu0
    %v2094 = vadd.f32 %v2005, %v2093
    %v2095 = vpop.f32.mrf.mxu0
    %v2096 = vadd.f32 %v2007, %v2095
    %2097 = vmatmul.bf16.gmra.mxu0 %v279
    %v2098 = vpop.f32.mrf.mxu0
    %v2099 = vadd.f32 %v2010, %v2098
    %v2100 = vpop.f32.mrf.mxu0
    %v2101 = vadd.f32 %v2012, %v2100
    %2102 = vmatmul.bf16.gmra.mxu0 %v286
    %v2103 = vpop.f32.mrf.mxu0
    %v2104 = vadd.f32 %v2015, %v2103
    %v2105 = vpop.f32.mrf.mxu0
    %v2106 = vadd.f32 %v2017, %v2105
    %2107 = vmatmul.bf16.gmra.mxu0 %v293
    %v2108 = vpop.f32.mrf.mxu0
    %v2109 = vadd.f32 %v2020, %v2108
    %v2110 = vpop.f32.mrf.mxu0
    %v2111 = vadd.f32 %v2022, %v2110
    %2112 = vmatmul.bf16.gmra.mxu0 %v300
    %v2113 = vpop.f32.mrf.mxu0
    %v2114 = vadd.f32 %v2025, %v2113
    %v2115 = vpop.f32.mrf.mxu0
    %v2116 = vadd.f32 %v2027, %v2115
    %2117 = vmatmul.bf16.gmra.mxu0 %v307
    %v2118 = vpop.f32.mrf.mxu0
    %v2119 = vadd.f32 %v2030, %v2118
    %v2120 = vpop.f32.mrf.mxu0
    %v2121 = vadd.f32 %v2032, %v2120
    %2122 = vmatmul.bf16.gmra.mxu0 %v314
    %v2123 = vpop.f32.mrf.mxu0
    %v2124 = vadd.f32 %v2035, %v2123
    %v2125 = vpop.f32.mrf.mxu0
    %v2126 = vadd.f32 %v2037, %v2125
    %2127 = vmatmul.bf16.gmra.mxu0 %v321
    %v2128 = vpop.f32.mrf.mxu0
    %v2129 = vadd.f32 %v2040, %v2128
    %v2130 = vpop.f32.mrf.mxu0
    %v2131 = vadd.f32 %v2042, %v2130
    %2132 = vmatmul.bf16.gmra.mxu0 %v328
    %v2133 = vpop.f32.mrf.mxu0
    %v2134 = vadd.f32 %v2045, %v2133
    %v2135 = vpop.f32.mrf.mxu0
    %v2136 = vadd.f32 %v2047, %v2135
    %2137 = vmatmul.bf16.gmra.mxu0 %v335
    %v2138 = vpop.f32.mrf.mxu0
    %v2139 = vadd.f32 %v2050, %v2138
    %v2140 = vpop.f32.mrf.mxu0
    %v2141 = vadd.f32 %v2052, %v2140
    %2142 = vmatmul.bf16.gmra.mxu0 %v342
    %v2143 = vpop.f32.mrf.mxu0
    %v2144 = vadd.f32 %v2055, %v2143
    %v2145 = vpop.f32.mrf.mxu0
    %v2146 = vadd.f32 %v2057, %v2145
    %2147 = vmatmul.bf16.gmra.mxu0 %v349
    %v2148 = vpop.f32.mrf.mxu0
    %v2149 = vadd.f32 %v2060, %v2148
    %v2150 = vpop.f32.mrf.mxu0
    %v2151 = vadd.f32 %v2062, %v2150
    %2152 = vmatmul.bf16.gmra.mxu0 %v356
    %v2153 = vpop.f32.mrf.mxu0
    %v2154 = vadd.f32 %v2065, %v2153
    %v2155 = vpop.f32.mrf.mxu0
    %v2156 = vadd.f32 %v2067, %v2155
    %2157 = vdwg.mxu0
    %2158 = vmatpush.bf16.msra.mxu0 0
    %2159 = vmatpush.bf16.msra.mxu0 0
    %2160 = vmatpush.bf16.msra.mxu0 0
    %2161 = vmatpush.bf16.msra.mxu0 0
    %2162 = vmatpush.bf16.msra.mxu0 0
    %2163 = vmatpush.bf16.msra.mxu0 0
    %2164 = vmatpush.bf16.msra.mxu0 0
    %2165 = vmatpush.bf16.msra.mxu0 %v853
    %2166 = vmatmul.bf16.gmra.mxu0 %v954
    %v2167 = vpop.f32.mrf.mxu0
    %v2168 = vadd.f32 %v2079, %v2167
    %v2169 = vpop.f32.mrf.mxu0
    %v2170 = vadd.f32 %v2081, %v2169
    %2171 = vmatmul.bf16.gmra.mxu0 %v957
    %v2172 = vpop.f32.mrf.mxu0
    %v2173 = vadd.f32 %v2084, %v2172
    %v2174 = vpop.f32.mrf.mxu0
    %v2175 = vadd.f32 %v2086, %v2174
    %2176 = vmatmul.bf16.gmra.mxu0 %v960
    %v2177 = vpop.f32.mrf.mxu0
    %v2178 = vadd.f32 %v2089, %v2177
    %v2179 = vpop.f32.mrf.mxu0
    %v2180 = vadd.f32 %v2091, %v2179
    %2181 = vmatmul.bf16.gmra.mxu0 %v963
    %v2182 = vpop.f32.mrf.mxu0
    %v2183 = vadd.f32 %v2094, %v2182
    %v2184 = vpop.f32.mrf.mxu0
    %v2185 = vadd.f32 %v2096, %v2184
    %2186 = vmatmul.bf16.gmra.mxu0 %v966
    %v2187 = vpop.f32.mrf.mxu0
    %v2188 = vadd.f32 %v2099, %v2187
    %v2189 = vpop.f32.mrf.mxu0
    %v2190 = vadd.f32 %v2101, %v2189
    %2191 = vmatmul.bf16.gmra.mxu0 %v969
    %v2192 = vpop.f32.mrf.mxu0
    %v2193 = vadd.f32 %v2104, %v2192
    %v2194 = vpop.f32.mrf.mxu0
    %v2195 = vadd.f32 %v2106, %v2194
    %2196 = vmatmul.bf16.gmra.mxu0 %v972
    %v2197 = vpop.f32.mrf.mxu0
    %v2198 = vadd.f32 %v2109, %v2197
    %v2199 = vpop.f32.mrf.mxu0
    %v2200 = vadd.f32 %v2111, %v2199
    %2201 = vmatmul.bf16.gmra.mxu0 %v975
    %v2202 = vpop.f32.mrf.mxu0
    %v2203 = vadd.f32 %v2114, %v2202
    %v2204 = vpop.f32.mrf.mxu0
    %v2205 = vadd.f32 %v2116, %v2204
    %2206 = vmatmul.bf16.gmra.mxu0 %v978
    %v2207 = vpop.f32.mrf.mxu0
    %v2208 = vadd.f32 %v2119, %v2207
    %v2209 = vpop.f32.mrf.mxu0
    %v2210 = vadd.f32 %v2121, %v2209
    %2211 = vmatmul.bf16.gmra.mxu0 %v981
    %v2212 = vpop.f32.mrf.mxu0
    %v2213 = vadd.f32 %v2124, %v2212
    %v2214 = vpop.f32.mrf.mxu0
    %v2215 = vadd.f32 %v2126, %v2214
    %2216 = vmatmul.bf16.gmra.mxu0 %v984
    %v2217 = vpop.f32.mrf.mxu0
    %v2218 = vadd.f32 %v2129, %v2217
    %v2219 = vpop.f32.mrf.mxu0
    %v2220 = vadd.f32 %v2131, %v2219
    %2221 = vmatmul.bf16.gmra.mxu0 %v987
    %v2222 = vpop.f32.mrf.mxu0
    %v2223 = vadd.f32 %v2134, %v2222
    %v2224 = vpop.f32.mrf.mxu0
    %v2225 = vadd.f32 %v2136, %v2224
    %2226 = vmatmul.bf16.gmra.mxu0 %v990
    %v2227 = vpop.f32.mrf.mxu0
    %v2228 = vadd.f32 %v2139, %v2227
    %v2229 = vpop.f32.mrf.mxu0
    %v2230 = vadd.f32 %v2141, %v2229
    %2231 = vmatmul.bf16.gmra.mxu0 %v993
    %v2232 = vpop.f32.mrf.mxu0
    %v2233 = vadd.f32 %v2144, %v2232
    %v2234 = vpop.f32.mrf.mxu0
    %v2235 = vadd.f32 %v2146, %v2234
    %2236 = vmatmul.bf16.gmra.mxu0 %v996
    %v2237 = vpop.f32.mrf.mxu0
    %v2238 = vadd.f32 %v2149, %v2237
    %v2239 = vpop.f32.mrf.mxu0
    %v2240 = vadd.f32 %v2151, %v2239
    %2241 = vmatmul.bf16.gmra.mxu0 %v999
    %v2242 = vpop.f32.mrf.mxu0
    %v2243 = vadd.f32 %v2154, %v2242
    %v2244 = vpop.f32.mrf.mxu0
    %v2245 = vadd.f32 %v2156, %v2244
    %2246 = vdwg.mxu0
    %v2247 = vmax.f32 %v1545, 0.0
    %v2248 = vmax.f32 %v2168, 0.0
    %v2249 = vmax.f32 %v1547, 0.0
    %v2250 = vmax.f32 %v2170, 0.0
    %v2251 = vmax.f32 %v1550, 0.0
    %v2252 = vmax.f32 %v2173, 0.0
    %v2253 = vmax.f32 %v1552, 0.0
    %v2254 = vmax.f32 %v2175, 0.0
    %v2255 = vmax.f32 %v1555, 0.0
    %v2256 = vmax.f32 %v2178, 0.0
    %v2257 = vmax.f32 %v1557, 0.0
    %v2258 = vmax.f32 %v2180, 0.0
    %v2259 = vmax.f32 %v1560, 0.0
    %v2260 = vmax.f32 %v2183, 0.0
    %v2261 = vmax.f32 %v1562, 0.0
    %v2262 = vmax.f32 %v2185, 0.0
    %v2263 = vmax.f32 %v1565, 0.0
    %v2264 = vmax.f32 %v2188, 0.0
    %v2265 = vmax.f32 %v1567, 0.0
    %v2266 = vmax.f32 %v2190, 0.0
    %v2267 = vmax.f32 %v1570, 0.0
    %v2268 = vmax.f32 %v2193, 0.0
    %v2269 = vmax.f32 %v1572, 0.0
    %v2270 = vmax.f32 %v2195, 0.0
    %v2271 = vmax.f32 %v1575, 0.0
    %v2272 = vmax.f32 %v2198, 0.0
    %v2273 = vmax.f32 %v1577, 0.0
    %v2274 = vmax.f32 %v2200, 0.0
    %v2275 = vmax.f32 %v1580, 0.0
    %v2276 = vmax.f32 %v2203, 0.0
    %v2277 = vmax.f32 %v1582, 0.0
    %v2278 = vmax.f32 %v2205, 0.0
    %v2279 = vmax.f32 %v1585, 0.0
    %v2280 = vmax.f32 %v2208, 0.0
    %v2281 = vmax.f32 %v1587, 0.0
    %v2282 = vmax.f32 %v2210, 0.0
    %v2283 = vmax.f32 %v1590, 0.0
    %v2284 = vmax.f32 %v2213, 0.0
    %v2285 = vmax.f32 %v1592, 0.0
    %v2286 = vmax.f32 %v2215, 0.0
    %v2287 = vmax.f32 %v1595, 0.0
    %v2288 = vmax.f32 %v2218, 0.0
    %v2289 = vmax.f32 %v1597, 0.0
    %v2290 = vmax.f32 %v2220, 0.0
    %v2291 = vmax.f32 %v1600, 0.0
    %v2292 = vmax.f32 %v2223, 0.0
    %v2293 = vmax.f32 %v1602, 0.0
    %v2294 = vmax.f32 %v2225, 0.0
    %v2295 = vmax.f32 %v1605, 0.0
    %v2296 = vmax.f32 %v2228, 0.0
    %v2297 = vmax.f32 %v1607, 0.0
    %v2298 = vmax.f32 %v2230, 0.0
    %v2299 = vmax.f32 %v1610, 0.0
    %v2300 = vmax.f32 %v2233, 0.0
    %v2301 = vmax.f32 %v1612, 0.0
    %v2302 = vmax.f32 %v2235, 0.0
    %v2303 = vmax.f32 %v1615, 0.0
    %v2304 = vmax.f32 %v2238, 0.0
    %v2305 = vmax.f32 %v1617, 0.0
    %v2306 = vmax.f32 %v2240, 0.0
    %v2307 = vmax.f32 %v1620, 0.0
    %v2308 = vmax.f32 %v2243, 0.0
    %v2309 = vmax.f32 %v1622, 0.0
    %v2310 = vmax.f32 %v2245, 0.0
    %v2311 = vpack.c.bf16 %v2249, %v2247
    %v2312 = vpack.c.bf16 %v2250, %v2248
    %v2313 = vpack.c.bf16 %v2253, %v2251
    %v2314 = vpack.c.bf16 %v2254, %v2252
    %v2315 = vpack.c.bf16 %v2257, %v2255
    %v2316 = vpack.c.bf16 %v2258, %v2256
    %v2317 = vpack.c.bf16 %v2261, %v2259
    %v2318 = vpack.c.bf16 %v2262, %v2260
    %v2319 = vpack.c.bf16 %v2265, %v2263
    %v2320 = vpack.c.bf16 %v2266, %v2264
    %v2321 = vpack.c.bf16 %v2269, %v2267
    %v2322 = vpack.c.bf16 %v2270, %v2268
    %v2323 = vpack.c.bf16 %v2273, %v2271
    %v2324 = vpack.c.bf16 %v2274, %v2272
    %v2325 = vpack.c.bf16 %v2277, %v2275
    %v2326 = vpack.c.bf16 %v2278, %v2276
    %v2327 = vpack.c.bf16 %v2281, %v2279
    %v2328 = vpack.c.bf16 %v2282, %v2280
    %v2329 = vpack.c.bf16 %v2285, %v2283
    %v2330 = vpack.c.bf16 %v2286, %v2284
    %v2331 = vpack.c.bf16 %v2289, %v2287
    %v2332 = vpack.c.bf16 %v2290, %v2288
    %v2333 = vpack.c.bf16 %v2293, %v2291
    %v2334 = vpack.c.bf16 %v2294, %v2292
    %v2335 = vpack.c.bf16 %v2297, %v2295
    %v2336 = vpack.c.bf16 %v2298, %v2296
    %v2337 = vpack.c.bf16 %v2301, %v2299
    %v2338 = vpack.c.bf16 %v2302, %v2300
    %v2339 = vpack.c.bf16 %v2305, %v2303
    %v2340 = vpack.c.bf16 %v2306, %v2304
    %v2341 = vpack.c.bf16 %v2309, %v2307
    %v2342 = vpack.c.bf16 %v2310, %v2308
    %v2343 = vld [vmem:[%s2] sm:$0xff]
    %v2344 = vld [vmem:[%s2 + $0x8] sm:$0xff]
    %v2345 = vld [vmem:[%s2 + $0x10] sm:$0xff]
    %v2346 = vld [vmem:[%s2 + $0x18] sm:$0xff]
    %v2347 = vld [vmem:[%s2 + $0x20] sm:$0xff]
    %v2348 = vld [vmem:[%s2 + $0x28] sm:$0xff]
    %v2349 = vld [vmem:[%s2 + $0x30] sm:$0xff]
    %v2350 = vld [vmem:[%s2 + $0x38] sm:$0xff]
    %v2351 = vld [vmem:[%s2 + $0x40] sm:$0xff]
    %v2352 = vld [vmem:[%s2 + $0x48] sm:$0xff]
    %v2353 = vld [vmem:[%s2 + $0x50] sm:$0xff]
    %v2354 = vld [vmem:[%s2 + $0x58] sm:$0xff]
    %v2355 = vld [vmem:[%s2 + $0x60] sm:$0xff]
    %v2356 = vld [vmem:[%s2 + $0x68] sm:$0xff]
    %v2357 = vld [vmem:[%s2 + $0x70] sm:$0xff]
    %v2358 = vld [vmem:[%s2 + $0x78] sm:$0xff]
    %v2359 = vld [vmem:[%s2 + $0x80] sm:$0xff]
    %v2360 = vld [vmem:[%s2 + $0x88] sm:$0xff]
    %v2361 = vld [vmem:[%s2 + $0x90] sm:$0xff]
    %v2362 = vld [vmem:[%s2 + $0x98] sm:$0xff]
    %v2363 = vld [vmem:[%s2 + $0xa0] sm:$0xff]
    %v2364 = vld [vmem:[%s2 + $0xa8] sm:$0xff]
    %v2365 = vld [vmem:[%s2 + $0xb0] sm:$0xff]
    %v2366 = vld [vmem:[%s2 + $0xb8] sm:$0xff]
    %v2367 = vld [vmem:[%s2 + $0xc0] sm:$0xff]
    %v2368 = vld [vmem:[%s2 + $0xc8] sm:$0xff]
    %v2369 = vld [vmem:[%s2 + $0xd0] sm:$0xff]
    %v2370 = vld [vmem:[%s2 + $0xd8] sm:$0xff]
    %v2371 = vld [vmem:[%s2 + $0xe0] sm:$0xff]
    %v2372 = vld [vmem:[%s2 + $0xe8] sm:$0xff]
    %v2373 = vld [vmem:[%s2 + $0xf0] sm:$0xff]
    %v2374 = vld [vmem:[%s2 + $0xf8] sm:$0xff]
    %s2375 = scalar_lea.vmem %s4, 1
    %v2376 = vld [vmem:[%s2375] ss:$4 sm:$0x3]
    %v2378 = vperm.slane %v2376, 0
    %v2379 = vperm.slane %v2376, 1
    %v2414 = vunpack.c.l.b16 %v2343
    %v2415 = vunpack.c.h.b16 %v2343
    %v2416 = vunpack.c.l.b16 %v2344
    %v2417 = vunpack.c.h.b16 %v2344
    %v2418 = vunpack.c.l.b16 %v2345
    %v2419 = vunpack.c.h.b16 %v2345
    %v2420 = vunpack.c.l.b16 %v2346
    %v2421 = vunpack.c.h.b16 %v2346
    %v2422 = vunpack.c.l.b16 %v2347
    %v2423 = vunpack.c.h.b16 %v2347
    %v2424 = vunpack.c.l.b16 %v2348
    %v2425 = vunpack.c.h.b16 %v2348
    %v2426 = vunpack.c.l.b16 %v2349
    %v2427 = vunpack.c.h.b16 %v2349
    %v2428 = vunpack.c.l.b16 %v2350
    %v2429 = vunpack.c.h.b16 %v2350
    %v2430 = vunpack.c.l.b16 %v2351
    %v2431 = vunpack.c.h.b16 %v2351
    %v2432 = vunpack.c.l.b16 %v2352
    %v2433 = vunpack.c.h.b16 %v2352
    %v2434 = vunpack.c.l.b16 %v2353
    %v2435 = vunpack.c.h.b16 %v2353
    %v2436 = vunpack.c.l.b16 %v2354
    %v2437 = vunpack.c.h.b16 %v2354
    %v2438 = vunpack.c.l.b16 %v2355
    %v2439 = vunpack.c.h.b16 %v2355
    %v2440 = vunpack.c.l.b16 %v2356
    %v2441 = vunpack.c.h.b16 %v2356
    %v2442 = vunpack.c.l.b16 %v2357
    %v2443 = vunpack.c.h.b16 %v2357
    %v2444 = vunpack.c.l.b16 %v2358
    %v2445 = vunpack.c.h.b16 %v2358
    %v2446 = vunpack.c.l.b16 %v2359
    %v2447 = vunpack.c.h.b16 %v2359
    %v2448 = vunpack.c.l.b16 %v2360
    %v2449 = vunpack.c.h.b16 %v2360
    %v2450 = vunpack.c.l.b16 %v2361
    %v2451 = vunpack.c.h.b16 %v2361
    %v2452 = vunpack.c.l.b16 %v2362
    %v2453 = vunpack.c.h.b16 %v2362
    %v2454 = vunpack.c.l.b16 %v2363
    %v2455 = vunpack.c.h.b16 %v2363
    %v2456 = vunpack.c.l.b16 %v2364
    %v2457 = vunpack.c.h.b16 %v2364
    %v2458 = vunpack.c.l.b16 %v2365
    %v2459 = vunpack.c.h.b16 %v2365
    %v2460 = vunpack.c.l.b16 %v2366
    %v2461 = vunpack.c.h.b16 %v2366
    %v2462 = vunpack.c.l.b16 %v2367
    %v2463 = vunpack.c.h.b16 %v2367
    %v2464 = vunpack.c.l.b16 %v2368
    %v2465 = vunpack.c.h.b16 %v2368
    %v2466 = vunpack.c.l.b16 %v2369
    %v2467 = vunpack.c.h.b16 %v2369
    %v2468 = vunpack.c.l.b16 %v2370
    %v2469 = vunpack.c.h.b16 %v2370
    %v2470 = vunpack.c.l.b16 %v2371
    %v2471 = vunpack.c.h.b16 %v2371
    %v2472 = vunpack.c.l.b16 %v2372
    %v2473 = vunpack.c.h.b16 %v2372
    %v2474 = vunpack.c.l.b16 %v2373
    %v2475 = vunpack.c.h.b16 %v2373
    %v2476 = vunpack.c.l.b16 %v2374
    %v2477 = vunpack.c.h.b16 %v2374
    %v2478 = vpack.c.b16 %v2416, %v2414
    %v2479 = vpack.c.b16 %v2417, %v2415
    %v2480 = vpack.c.b16 %v2420, %v2418
    %v2481 = vpack.c.b16 %v2421, %v2419
    %v2482 = vpack.c.b16 %v2424, %v2422
    %v2483 = vpack.c.b16 %v2425, %v2423
    %v2484 = vpack.c.b16 %v2428, %v2426
    %v2485 = vpack.c.b16 %v2429, %v2427
    %v2486 = vpack.c.b16 %v2432, %v2430
    %v2487 = vpack.c.b16 %v2433, %v2431
    %v2488 = vpack.c.b16 %v2436, %v2434
    %v2489 = vpack.c.b16 %v2437, %v2435
    %v2490 = vpack.c.b16 %v2440, %v2438
    %v2491 = vpack.c.b16 %v2441, %v2439
    %v2492 = vpack.c.b16 %v2444, %v2442
    %v2493 = vpack.c.b16 %v2445, %v2443
    %v2494 = vpack.c.b16 %v2448, %v2446
    %v2495 = vpack.c.b16 %v2449, %v2447
    %v2496 = vpack.c.b16 %v2452, %v2450
    %v2497 = vpack.c.b16 %v2453, %v2451
    %v2498 = vpack.c.b16 %v2456, %v2454
    %v2499 = vpack.c.b16 %v2457, %v2455
    %v2500 = vpack.c.b16 %v2460, %v2458
    %v2501 = vpack.c.b16 %v2461, %v2459
    %v2502 = vpack.c.b16 %v2464, %v2462
    %v2503 = vpack.c.b16 %v2465, %v2463
    %v2504 = vpack.c.b16 %v2468, %v2466
    %v2505 = vpack.c.b16 %v2469, %v2467
    %v2506 = vpack.c.b16 %v2472, %v2470
    %v2507 = vpack.c.b16 %v2473, %v2471
    %v2508 = vpack.c.b16 %v2476, %v2474
    %v2509 = vpack.c.b16 %v2477, %v2475
    %2542 = vmatpush.bf16.msra.mxu0 %v2492
    %2543 = vmatpush.bf16.msra.mxu0 %v2490
    %2544 = vmatpush.bf16.msra.mxu0 %v2488
    %2545 = vmatpush.bf16.msra.mxu0 %v2486
    %2546 = vmatpush.bf16.msra.mxu0 %v2484
    %2547 = vmatpush.bf16.msra.mxu0 %v2482
    %2548 = vmatpush.bf16.msra.mxu0 %v2480
    %2549 = vmatpush.bf16.msra.mxu0 %v2478
    %2550 = vmatmul.bf16.gmra.mxu0 %v2311
    %v2551 = vpop.f32.mrf.mxu0
    %v2552 = vadd.f32 %v2378, %v2551
    %v2553 = vpop.f32.mrf.mxu0
    %v2554 = vadd.f32 %v2378, %v2553
    %2555 = vmatmul.bf16.gmra.mxu0 %v2313
    %v2556 = vpop.f32.mrf.mxu0
    %v2557 = vadd.f32 %v2378, %v2556
    %v2558 = vpop.f32.mrf.mxu0
    %v2559 = vadd.f32 %v2378, %v2558
    %2560 = vmatmul.bf16.gmra.mxu0 %v2315
    %v2561 = vpop.f32.mrf.mxu0
    %v2562 = vadd.f32 %v2378, %v2561
    %v2563 = vpop.f32.mrf.mxu0
    %v2564 = vadd.f32 %v2378, %v2563
    %2565 = vmatmul.bf16.gmra.mxu0 %v2317
    %v2566 = vpop.f32.mrf.mxu0
    %v2567 = vadd.f32 %v2378, %v2566
    %v2568 = vpop.f32.mrf.mxu0
    %v2569 = vadd.f32 %v2378, %v2568
    %2570 = vmatmul.bf16.gmra.mxu0 %v2319
    %v2571 = vpop.f32.mrf.mxu0
    %v2572 = vadd.f32 %v2378, %v2571
    %v2573 = vpop.f32.mrf.mxu0
    %v2574 = vadd.f32 %v2378, %v2573
    %2575 = vmatmul.bf16.gmra.mxu0 %v2321
    %v2576 = vpop.f32.mrf.mxu0
    %v2577 = vadd.f32 %v2378, %v2576
    %v2578 = vpop.f32.mrf.mxu0
    %v2579 = vadd.f32 %v2378, %v2578
    %2580 = vmatmul.bf16.gmra.mxu0 %v2323
    %v2581 = vpop.f32.mrf.mxu0
    %v2582 = vadd.f32 %v2378, %v2581
    %v2583 = vpop.f32.mrf.mxu0
    %v2584 = vadd.f32 %v2378, %v2583
    %2585 = vmatmul.bf16.gmra.mxu0 %v2325
    %v2586 = vpop.f32.mrf.mxu0
    %v2587 = vadd.f32 %v2378, %v2586
    %v2588 = vpop.f32.mrf.mxu0
    %v2589 = vadd.f32 %v2378, %v2588
    %2590 = vmatmul.bf16.gmra.mxu0 %v2327
    %v2591 = vpop.f32.mrf.mxu0
    %v2592 = vadd.f32 %v2378, %v2591
    %v2593 = vpop.f32.mrf.mxu0
    %v2594 = vadd.f32 %v2378, %v2593
    %2595 = vmatmul.bf16.gmra.mxu0 %v2329
    %v2596 = vpop.f32.mrf.mxu0
    %v2597 = vadd.f32 %v2378, %v2596
    %v2598 = vpop.f32.mrf.mxu0
    %v2599 = vadd.f32 %v2378, %v2598
    %2600 = vmatmul.bf16.gmra.mxu0 %v2331
    %v2601 = vpop.f32.mrf.mxu0
    %v2602 = vadd.f32 %v2378, %v2601
    %v2603 = vpop.f32.mrf.mxu0
    %v2604 = vadd.f32 %v2378, %v2603
    %2605 = vmatmul.bf16.gmra.mxu0 %v2333
    %v2606 = vpop.f32.mrf.mxu0
    %v2607 = vadd.f32 %v2378, %v2606
    %v2608 = vpop.f32.mrf.mxu0
    %v2609 = vadd.f32 %v2378, %v2608
    %2610 = vmatmul.bf16.gmra.mxu0 %v2335
    %v2611 = vpop.f32.mrf.mxu0
    %v2612 = vadd.f32 %v2378, %v2611
    %v2613 = vpop.f32.mrf.mxu0
    %v2614 = vadd.f32 %v2378, %v2613
    %2615 = vmatmul.bf16.gmra.mxu0 %v2337
    %v2616 = vpop.f32.mrf.mxu0
    %v2617 = vadd.f32 %v2378, %v2616
    %v2618 = vpop.f32.mrf.mxu0
    %v2619 = vadd.f32 %v2378, %v2618
    %2620 = vmatmul.bf16.gmra.mxu0 %v2339
    %v2621 = vpop.f32.mrf.mxu0
    %v2622 = vadd.f32 %v2378, %v2621
    %v2623 = vpop.f32.mrf.mxu0
    %v2624 = vadd.f32 %v2378, %v2623
    %2625 = vmatmul.bf16.gmra.mxu0 %v2341
    %v2626 = vpop.f32.mrf.mxu0
    %v2627 = vadd.f32 %v2378, %v2626
    %v2628 = vpop.f32.mrf.mxu0
    %v2629 = vadd.f32 %v2378, %v2628
    %2630 = vdwg.mxu0
    %2631 = vmatpush.bf16.msra.mxu0 %v2508
    %2632 = vmatpush.bf16.msra.mxu0 %v2506
    %2633 = vmatpush.bf16.msra.mxu0 %v2504
    %2634 = vmatpush.bf16.msra.mxu0 %v2502
    %2635 = vmatpush.bf16.msra.mxu0 %v2500
    %2636 = vmatpush.bf16.msra.mxu0 %v2498
    %2637 = vmatpush.bf16.msra.mxu0 %v2496
    %2638 = vmatpush.bf16.msra.mxu0 %v2494
    %2639 = vmatmul.bf16.gmra.mxu0 %v2312
    %v2640 = vpop.f32.mrf.mxu0
    %v2641 = vadd.f32 %v2552, %v2640
    %v2642 = vpop.f32.mrf.mxu0
    %v2643 = vadd.f32 %v2554, %v2642
    %2644 = vmatmul.bf16.gmra.mxu0 %v2314
    %v2645 = vpop.f32.mrf.mxu0
    %v2646 = vadd.f32 %v2557, %v2645
    %v2647 = vpop.f32.mrf.mxu0
    %v2648 = vadd.f32 %v2559, %v2647
    %2649 = vmatmul.bf16.gmra.mxu0 %v2316
    %v2650 = vpop.f32.mrf.mxu0
    %v2651 = vadd.f32 %v2562, %v2650
    %v2652 = vpop.f32.mrf.mxu0
    %v2653 = vadd.f32 %v2564, %v2652
    %2654 = vmatmul.bf16.gmra.mxu0 %v2318
    %v2655 = vpop.f32.mrf.mxu0
    %v2656 = vadd.f32 %v2567, %v2655
    %v2657 = vpop.f32.mrf.mxu0
    %v2658 = vadd.f32 %v2569, %v2657
    %2659 = vmatmul.bf16.gmra.mxu0 %v2320
    %v2660 = vpop.f32.mrf.mxu0
    %v2661 = vadd.f32 %v2572, %v2660
    %v2662 = vpop.f32.mrf.mxu0
    %v2663 = vadd.f32 %v2574, %v2662
    %2664 = vmatmul.bf16.gmra.mxu0 %v2322
    %v2665 = vpop.f32.mrf.mxu0
    %v2666 = vadd.f32 %v2577, %v2665
    %v2667 = vpop.f32.mrf.mxu0
    %v2668 = vadd.f32 %v2579, %v2667
    %2669 = vmatmul.bf16.gmra.mxu0 %v2324
    %v2670 = vpop.f32.mrf.mxu0
    %v2671 = vadd.f32 %v2582, %v2670
    %v2672 = vpop.f32.mrf.mxu0
    %v2673 = vadd.f32 %v2584, %v2672
    %2674 = vmatmul.bf16.gmra.mxu0 %v2326
    %v2675 = vpop.f32.mrf.mxu0
    %v2676 = vadd.f32 %v2587, %v2675
    %v2677 = vpop.f32.mrf.mxu0
    %v2678 = vadd.f32 %v2589, %v2677
    %2679 = vmatmul.bf16.gmra.mxu0 %v2328
    %v2680 = vpop.f32.mrf.mxu0
    %v2681 = vadd.f32 %v2592, %v2680
    %v2682 = vpop.f32.mrf.mxu0
    %v2683 = vadd.f32 %v2594, %v2682
    %2684 = vmatmul.bf16.gmra.mxu0 %v2330
    %v2685 = vpop.f32.mrf.mxu0
    %v2686 = vadd.f32 %v2597, %v2685
    %v2687 = vpop.f32.mrf.mxu0
    %v2688 = vadd.f32 %v2599, %v2687
    %2689 = vmatmul.bf16.gmra.mxu0 %v2332
    %v2690 = vpop.f32.mrf.mxu0
    %v2691 = vadd.f32 %v2602, %v2690
    %v2692 = vpop.f32.mrf.mxu0
    %v2693 = vadd.f32 %v2604, %v2692
    %2694 = vmatmul.bf16.gmra.mxu0 %v2334
    %v2695 = vpop.f32.mrf.mxu0
    %v2696 = vadd.f32 %v2607, %v2695
    %v2697 = vpop.f32.mrf.mxu0
    %v2698 = vadd.f32 %v2609, %v2697
    %2699 = vmatmul.bf16.gmra.mxu0 %v2336
    %v2700 = vpop.f32.mrf.mxu0
    %v2701 = vadd.f32 %v2612, %v2700
    %v2702 = vpop.f32.mrf.mxu0
    %v2703 = vadd.f32 %v2614, %v2702
    %2704 = vmatmul.bf16.gmra.mxu0 %v2338
    %v2705 = vpop.f32.mrf.mxu0
    %v2706 = vadd.f32 %v2617, %v2705
    %v2707 = vpop.f32.mrf.mxu0
    %v2708 = vadd.f32 %v2619, %v2707
    %2709 = vmatmul.bf16.gmra.mxu0 %v2340
    %v2710 = vpop.f32.mrf.mxu0
    %v2711 = vadd.f32 %v2622, %v2710
    %v2712 = vpop.f32.mrf.mxu0
    %v2713 = vadd.f32 %v2624, %v2712
    %2714 = vmatmul.bf16.gmra.mxu0 %v2342
    %v2715 = vpop.f32.mrf.mxu0
    %v2716 = vadd.f32 %v2627, %v2715
    %v2717 = vpop.f32.mrf.mxu0
    %v2718 = vadd.f32 %v2629, %v2717
    %2719 = vdwg.mxu0
    %2720 = vmatpush.bf16.msra.mxu0 %v2493
    %2721 = vmatpush.bf16.msra.mxu0 %v2491
    %2722 = vmatpush.bf16.msra.mxu0 %v2489
    %2723 = vmatpush.bf16.msra.mxu0 %v2487
    %2724 = vmatpush.bf16.msra.mxu0 %v2485
    %2725 = vmatpush.bf16.msra.mxu0 %v2483
    %2726 = vmatpush.bf16.msra.mxu0 %v2481
    %2727 = vmatpush.bf16.msra.mxu0 %v2479
    %2728 = vmatmul.bf16.gmra.mxu0 %v2311
    %v2729 = vpop.f32.mrf.mxu0
    %v2730 = vadd.f32 %v2379, %v2729
    %v2731 = vpop.f32.mrf.mxu0
    %v2732 = vadd.f32 %v2379, %v2731
    %2733 = vmatmul.bf16.gmra.mxu0 %v2313
    %v2734 = vpop.f32.mrf.mxu0
    %v2735 = vadd.f32 %v2379, %v2734
    %v2736 = vpop.f32.mrf.mxu0
    %v2737 = vadd.f32 %v2379, %v2736
    %2738 = vmatmul.bf16.gmra.mxu0 %v2315
    %v2739 = vpop.f32.mrf.mxu0
    %v2740 = vadd.f32 %v2379, %v2739
    %v2741 = vpop.f32.mrf.mxu0
    %v2742 = vadd.f32 %v2379, %v2741
    %2743 = vmatmul.bf16.gmra.mxu0 %v2317
    %v2744 = vpop.f32.mrf.mxu0
    %v2745 = vadd.f32 %v2379, %v2744
    %v2746 = vpop.f32.mrf.mxu0
    %v2747 = vadd.f32 %v2379, %v2746
    %2748 = vmatmul.bf16.gmra.mxu0 %v2319
    %v2749 = vpop.f32.mrf.mxu0
    %v2750 = vadd.f32 %v2379, %v2749
    %v2751 = vpop.f32.mrf.mxu0
    %v2752 = vadd.f32 %v2379, %v2751
    %2753 = vmatmul.bf16.gmra.mxu0 %v2321
    %v2754 = vpop.f32.mrf.mxu0
    %v2755 = vadd.f32 %v2379, %v2754
    %v2756 = vpop.f32.mrf.mxu0
    %v2757 = vadd.f32 %v2379, %v2756
    %2758 = vmatmul.bf16.gmra.mxu0 %v2323
    %v2759 = vpop.f32.mrf.mxu0
    %v2760 = vadd.f32 %v2379, %v2759
    %v2761 = vpop.f32.mrf.mxu0
    %v2762 = vadd.f32 %v2379, %v2761
    %2763 = vmatmul.bf16.gmra.mxu0 %v2325
    %v2764 = vpop.f32.mrf.mxu0
    %v2765 = vadd.f32 %v2379, %v2764
    %v2766 = vpop.f32.mrf.mxu0
    %v2767 = vadd.f32 %v2379, %v2766
    %2768 = vmatmul.bf16.gmra.mxu0 %v2327
    %v2769 = vpop.f32.mrf.mxu0
    %v2770 = vadd.f32 %v2379, %v2769
    %v2771 = vpop.f32.mrf.mxu0
    %v2772 = vadd.f32 %v2379, %v2771
    %2773 = vmatmul.bf16.gmra.mxu0 %v2329
    %v2774 = vpop.f32.mrf.mxu0
    %v2775 = vadd.f32 %v2379, %v2774
    %v2776 = vpop.f32.mrf.mxu0
    %v2777 = vadd.f32 %v2379, %v2776
    %2778 = vmatmul.bf16.gmra.mxu0 %v2331
    %v2779 = vpop.f32.mrf.mxu0
    %v2780 = vadd.f32 %v2379, %v2779
    %v2781 = vpop.f32.mrf.mxu0
    %v2782 = vadd.f32 %v2379, %v2781
    %2783 = vmatmul.bf16.gmra.mxu0 %v2333
    %v2784 = vpop.f32.mrf.mxu0
    %v2785 = vadd.f32 %v2379, %v2784
    %v2786 = vpop.f32.mrf.mxu0
    %v2787 = vadd.f32 %v2379, %v2786
    %2788 = vmatmul.bf16.gmra.mxu0 %v2335
    %v2789 = vpop.f32.mrf.mxu0
    %v2790 = vadd.f32 %v2379, %v2789
    %v2791 = vpop.f32.mrf.mxu0
    %v2792 = vadd.f32 %v2379, %v2791
    %2793 = vmatmul.bf16.gmra.mxu0 %v2337
    %v2794 = vpop.f32.mrf.mxu0
    %v2795 = vadd.f32 %v2379, %v2794
    %v2796 = vpop.f32.mrf.mxu0
    %v2797 = vadd.f32 %v2379, %v2796
    %2798 = vmatmul.bf16.gmra.mxu0 %v2339
    %v2799 = vpop.f32.mrf.mxu0
    %v2800 = vadd.f32 %v2379, %v2799
    %v2801 = vpop.f32.mrf.mxu0
    %v2802 = vadd.f32 %v2379, %v2801
    %2803 = vmatmul.bf16.gmra.mxu0 %v2341
    %v2804 = vpop.f32.mrf.mxu0
    %v2805 = vadd.f32 %v2379, %v2804
    %v2806 = vpop.f32.mrf.mxu0
    %v2807 = vadd.f32 %v2379, %v2806
    %2808 = vdwg.mxu0
    %2809 = vmatpush.bf16.msra.mxu0 %v2509
    %2810 = vmatpush.bf16.msra.mxu0 %v2507
    %2811 = vmatpush.bf16.msra.mxu0 %v2505
    %2812 = vmatpush.bf16.msra.mxu0 %v2503
    %2813 = vmatpush.bf16.msra.mxu0 %v2501
    %2814 = vmatpush.bf16.msra.mxu0 %v2499
    %2815 = vmatpush.bf16.msra.mxu0 %v2497
    %2816 = vmatpush.bf16.msra.mxu0 %v2495
    %2817 = vmatmul.bf16.gmra.mxu0 %v2312
    %v2818 = vpop.f32.mrf.mxu0
    %v2819 = vadd.f32 %v2730, %v2818
    %v2820 = vpop.f32.mrf.mxu0
    %v2821 = vadd.f32 %v2732, %v2820
    %2822 = vmatmul.bf16.gmra.mxu0 %v2314
    %v2823 = vpop.f32.mrf.mxu0
    %v2824 = vadd.f32 %v2735, %v2823
    %v2825 = vpop.f32.mrf.mxu0
    %v2826 = vadd.f32 %v2737, %v2825
    %2827 = vmatmul.bf16.gmra.mxu0 %v2316
    %v2828 = vpop.f32.mrf.mxu0
    %v2829 = vadd.f32 %v2740, %v2828
    %v2830 = vpop.f32.mrf.mxu0
    %v2831 = vadd.f32 %v2742, %v2830
    %2832 = vmatmul.bf16.gmra.mxu0 %v2318
    %v2833 = vpop.f32.mrf.mxu0
    %v2834 = vadd.f32 %v2745, %v2833
    %v2835 = vpop.f32.mrf.mxu0
    %v2836 = vadd.f32 %v2747, %v2835
    %2837 = vmatmul.bf16.gmra.mxu0 %v2320
    %v2838 = vpop.f32.mrf.mxu0
    %v2839 = vadd.f32 %v2750, %v2838
    %v2840 = vpop.f32.mrf.mxu0
    %v2841 = vadd.f32 %v2752, %v2840
    %2842 = vmatmul.bf16.gmra.mxu0 %v2322
    %v2843 = vpop.f32.mrf.mxu0
    %v2844 = vadd.f32 %v2755, %v2843
    %v2845 = vpop.f32.mrf.mxu0
    %v2846 = vadd.f32 %v2757, %v2845
    %2847 = vmatmul.bf16.gmra.mxu0 %v2324
    %v2848 = vpop.f32.mrf.mxu0
    %v2849 = vadd.f32 %v2760, %v2848
    %v2850 = vpop.f32.mrf.mxu0
    %v2851 = vadd.f32 %v2762, %v2850
    %2852 = vmatmul.bf16.gmra.mxu0 %v2326
    %v2853 = vpop.f32.mrf.mxu0
    %v2854 = vadd.f32 %v2765, %v2853
    %v2855 = vpop.f32.mrf.mxu0
    %v2856 = vadd.f32 %v2767, %v2855
    %2857 = vmatmul.bf16.gmra.mxu0 %v2328
    %v2858 = vpop.f32.mrf.mxu0
    %v2859 = vadd.f32 %v2770, %v2858
    %v2860 = vpop.f32.mrf.mxu0
    %v2861 = vadd.f32 %v2772, %v2860
    %2862 = vmatmul.bf16.gmra.mxu0 %v2330
    %v2863 = vpop.f32.mrf.mxu0
    %v2864 = vadd.f32 %v2775, %v2863
    %v2865 = vpop.f32.mrf.mxu0
    %v2866 = vadd.f32 %v2777, %v2865
    %2867 = vmatmul.bf16.gmra.mxu0 %v2332
    %v2868 = vpop.f32.mrf.mxu0
    %v2869 = vadd.f32 %v2780, %v2868
    %v2870 = vpop.f32.mrf.mxu0
    %v2871 = vadd.f32 %v2782, %v2870
    %2872 = vmatmul.bf16.gmra.mxu0 %v2334
    %v2873 = vpop.f32.mrf.mxu0
    %v2874 = vadd.f32 %v2785, %v2873
    %v2875 = vpop.f32.mrf.mxu0
    %v2876 = vadd.f32 %v2787, %v2875
    %2877 = vmatmul.bf16.gmra.mxu0 %v2336
    %v2878 = vpop.f32.mrf.mxu0
    %v2879 = vadd.f32 %v2790, %v2878
    %v2880 = vpop.f32.mrf.mxu0
    %v2881 = vadd.f32 %v2792, %v2880
    %2882 = vmatmul.bf16.gmra.mxu0 %v2338
    %v2883 = vpop.f32.mrf.mxu0
    %v2884 = vadd.f32 %v2795, %v2883
    %v2885 = vpop.f32.mrf.mxu0
    %v2886 = vadd.f32 %v2797, %v2885
    %2887 = vmatmul.bf16.gmra.mxu0 %v2340
    %v2888 = vpop.f32.mrf.mxu0
    %v2889 = vadd.f32 %v2800, %v2888
    %v2890 = vpop.f32.mrf.mxu0
    %v2891 = vadd.f32 %v2802, %v2890
    %2892 = vmatmul.bf16.gmra.mxu0 %v2342
    %v2893 = vpop.f32.mrf.mxu0
    %v2894 = vadd.f32 %v2805, %v2893
    %v2895 = vpop.f32.mrf.mxu0
    %v2896 = vadd.f32 %v2807, %v2895
    %2897 = vdwg.mxu0
    %v2898 = vmax.f32 %v2641, 0.0
    %v2899 = vmax.f32 %v2819, 0.0
    %v2900 = vmax.f32 %v2643, 0.0
    %v2901 = vmax.f32 %v2821, 0.0
    %v2902 = vmax.f32 %v2646, 0.0
    %v2903 = vmax.f32 %v2824, 0.0
    %v2904 = vmax.f32 %v2648, 0.0
    %v2905 = vmax.f32 %v2826, 0.0
    %v2906 = vmax.f32 %v2651, 0.0
    %v2907 = vmax.f32 %v2829, 0.0
    %v2908 = vmax.f32 %v2653, 0.0
    %v2909 = vmax.f32 %v2831, 0.0
    %v2910 = vmax.f32 %v2656, 0.0
    %v2911 = vmax.f32 %v2834, 0.0
    %v2912 = vmax.f32 %v2658, 0.0
    %v2913 = vmax.f32 %v2836, 0.0
    %v2914 = vmax.f32 %v2661, 0.0
    %v2915 = vmax.f32 %v2839, 0.0
    %v2916 = vmax.f32 %v2663, 0.0
    %v2917 = vmax.f32 %v2841, 0.0
    %v2918 = vmax.f32 %v2666, 0.0
    %v2919 = vmax.f32 %v2844, 0.0
    %v2920 = vmax.f32 %v2668, 0.0
    %v2921 = vmax.f32 %v2846, 0.0
    %v2922 = vmax.f32 %v2671, 0.0
    %v2923 = vmax.f32 %v2849, 0.0
    %v2924 = vmax.f32 %v2673, 0.0
    %v2925 = vmax.f32 %v2851, 0.0
    %v2926 = vmax.f32 %v2676, 0.0
    %v2927 = vmax.f32 %v2854, 0.0
    %v2928 = vmax.f32 %v2678, 0.0
    %v2929 = vmax.f32 %v2856, 0.0
    %v2930 = vmax.f32 %v2681, 0.0
    %v2931 = vmax.f32 %v2859, 0.0
    %v2932 = vmax.f32 %v2683, 0.0
    %v2933 = vmax.f32 %v2861, 0.0
    %v2934 = vmax.f32 %v2686, 0.0
    %v2935 = vmax.f32 %v2864, 0.0
    %v2936 = vmax.f32 %v2688, 0.0
    %v2937 = vmax.f32 %v2866, 0.0
    %v2938 = vmax.f32 %v2691, 0.0
    %v2939 = vmax.f32 %v2869, 0.0
    %v2940 = vmax.f32 %v2693, 0.0
    %v2941 = vmax.f32 %v2871, 0.0
    %v2942 = vmax.f32 %v2696, 0.0
    %v2943 = vmax.f32 %v2874, 0.0
    %v2944 = vmax.f32 %v2698, 0.0
    %v2945 = vmax.f32 %v2876, 0.0
    %v2946 = vmax.f32 %v2701, 0.0
    %v2947 = vmax.f32 %v2879, 0.0
    %v2948 = vmax.f32 %v2703, 0.0
    %v2949 = vmax.f32 %v2881, 0.0
    %v2950 = vmax.f32 %v2706, 0.0
    %v2951 = vmax.f32 %v2884, 0.0
    %v2952 = vmax.f32 %v2708, 0.0
    %v2953 = vmax.f32 %v2886, 0.0
    %v2954 = vmax.f32 %v2711, 0.0
    %v2955 = vmax.f32 %v2889, 0.0
    %v2956 = vmax.f32 %v2713, 0.0
    %v2957 = vmax.f32 %v2891, 0.0
    %v2958 = vmax.f32 %v2716, 0.0
    %v2959 = vmax.f32 %v2894, 0.0
    %v2960 = vmax.f32 %v2718, 0.0
    %v2961 = vmax.f32 %v2896, 0.0
    %v2962 = vpack.c.bf16 %v2900, %v2898
    %v2963 = vpack.c.bf16 %v2901, %v2899
    %v2964 = vpack.c.bf16 %v2904, %v2902
    %v2965 = vpack.c.bf16 %v2905, %v2903
    %v2966 = vpack.c.bf16 %v2908, %v2906
    %v2967 = vpack.c.bf16 %v2909, %v2907
    %v2968 = vpack.c.bf16 %v2912, %v2910
    %v2969 = vpack.c.bf16 %v2913, %v2911
    %v2970 = vpack.c.bf16 %v2916, %v2914
    %v2971 = vpack.c.bf16 %v2917, %v2915
    %v2972 = vpack.c.bf16 %v2920, %v2918
    %v2973 = vpack.c.bf16 %v2921, %v2919
    %v2974 = vpack.c.bf16 %v2924, %v2922
    %v2975 = vpack.c.bf16 %v2925, %v2923
    %v2976 = vpack.c.bf16 %v2928, %v2926
    %v2977 = vpack.c.bf16 %v2929, %v2927
    %v2978 = vpack.c.bf16 %v2932, %v2930
    %v2979 = vpack.c.bf16 %v2933, %v2931
    %v2980 = vpack.c.bf16 %v2936, %v2934
    %v2981 = vpack.c.bf16 %v2937, %v2935
    %v2982 = vpack.c.bf16 %v2940, %v2938
    %v2983 = vpack.c.bf16 %v2941, %v2939
    %v2984 = vpack.c.bf16 %v2944, %v2942
    %v2985 = vpack.c.bf16 %v2945, %v2943
    %v2986 = vpack.c.bf16 %v2948, %v2946
    %v2987 = vpack.c.bf16 %v2949, %v2947
    %v2988 = vpack.c.bf16 %v2952, %v2950
    %v2989 = vpack.c.bf16 %v2953, %v2951
    %v2990 = vpack.c.bf16 %v2956, %v2954
    %v2991 = vpack.c.bf16 %v2957, %v2955
    %v2992 = vpack.c.bf16 %v2960, %v2958
    %v2993 = vpack.c.bf16 %v2961, %v2959
    %s2994 = scalar_lea.vmem %s2, 256
    %v2995 = vld [vmem:[%s2994] sm:$0xff]
    %v2996 = vld [vmem:[%s2994 + $0x8] sm:$0xff]
    %v2997 = vld [vmem:[%s2994 + $0x10] sm:$0xff]
    %v2998 = vld [vmem:[%s2994 + $0x18] sm:$0xff]
    %v2999 = vld [vmem:[%s2994 + $0x20] sm:$0xff]
    %v3000 = vld [vmem:[%s2994 + $0x28] sm:$0xff]
    %v3001 = vld [vmem:[%s2994 + $0x30] sm:$0xff]
    %v3002 = vld [vmem:[%s2994 + $0x38] sm:$0xff]
    %v3003 = vld [vmem:[%s2994 + $0x40] sm:$0xff]
    %v3004 = vld [vmem:[%s2994 + $0x48] sm:$0xff]
    %v3005 = vld [vmem:[%s2994 + $0x50] sm:$0xff]
    %v3006 = vld [vmem:[%s2994 + $0x58] sm:$0xff]
    %v3007 = vld [vmem:[%s2994 + $0x60] sm:$0xff]
    %v3008 = vld [vmem:[%s2994 + $0x68] sm:$0xff]
    %v3009 = vld [vmem:[%s2994 + $0x70] sm:$0xff]
    %v3010 = vld [vmem:[%s2994 + $0x78] sm:$0xff]
    %v3011 = vld [vmem:[%s2994 + $0x80] sm:$0xff]
    %v3012 = vld [vmem:[%s2994 + $0x88] sm:$0xff]
    %v3013 = vld [vmem:[%s2994 + $0x90] sm:$0xff]
    %v3014 = vld [vmem:[%s2994 + $0x98] sm:$0xff]
    %v3015 = vld [vmem:[%s2994 + $0xa0] sm:$0xff]
    %v3016 = vld [vmem:[%s2994 + $0xa8] sm:$0xff]
    %v3017 = vld [vmem:[%s2994 + $0xb0] sm:$0xff]
    %v3018 = vld [vmem:[%s2994 + $0xb8] sm:$0xff]
    %v3019 = vld [vmem:[%s2994 + $0xc0] sm:$0xff]
    %v3020 = vld [vmem:[%s2994 + $0xc8] sm:$0xff]
    %v3021 = vld [vmem:[%s2994 + $0xd0] sm:$0xff]
    %v3022 = vld [vmem:[%s2994 + $0xd8] sm:$0xff]
    %v3023 = vld [vmem:[%s2994 + $0xe0] sm:$0xff]
    %v3024 = vld [vmem:[%s2994 + $0xe8] sm:$0xff]
    %v3025 = vld [vmem:[%s2994 + $0xf0] sm:$0xff]
    %v3026 = vld [vmem:[%s2994 + $0xf8] sm:$0xff]
    %s3027 = scalar_lea.vmem %s4, 2
    %v3028 = vld [vmem:[%s3027] ss:$4 sm:$0x3]
    %v3030 = vperm.slane %v3028, 0
    %v3031 = vperm.slane %v3028, 1
    %v3066 = vunpack.c.l.b16 %v2995
    %v3067 = vunpack.c.h.b16 %v2995
    %v3068 = vunpack.c.l.b16 %v2996
    %v3069 = vunpack.c.h.b16 %v2996
    %v3070 = vunpack.c.l.b16 %v2997
    %v3071 = vunpack.c.h.b16 %v2997
    %v3072 = vunpack.c.l.b16 %v2998
    %v3073 = vunpack.c.h.b16 %v2998
    %v3074 = vunpack.c.l.b16 %v2999
    %v3075 = vunpack.c.h.b16 %v2999
    %v3076 = vunpack.c.l.b16 %v3000
    %v3077 = vunpack.c.h.b16 %v3000
    %v3078 = vunpack.c.l.b16 %v3001
    %v3079 = vunpack.c.h.b16 %v3001
    %v3080 = vunpack.c.l.b16 %v3002
    %v3081 = vunpack.c.h.b16 %v3002
    %v3082 = vunpack.c.l.b16 %v3003
    %v3083 = vunpack.c.h.b16 %v3003
    %v3084 = vunpack.c.l.b16 %v3004
    %v3085 = vunpack.c.h.b16 %v3004
    %v3086 = vunpack.c.l.b16 %v3005
    %v3087 = vunpack.c.h.b16 %v3005
    %v3088 = vunpack.c.l.b16 %v3006
    %v3089 = vunpack.c.h.b16 %v3006
    %v3090 = vunpack.c.l.b16 %v3007
    %v3091 = vunpack.c.h.b16 %v3007
    %v3092 = vunpack.c.l.b16 %v3008
    %v3093 = vunpack.c.h.b16 %v3008
    %v3094 = vunpack.c.l.b16 %v3009
    %v3095 = vunpack.c.h.b16 %v3009
    %v3096 = vunpack.c.l.b16 %v3010
    %v3097 = vunpack.c.h.b16 %v3010
    %v3098 = vunpack.c.l.b16 %v3011
    %v3099 = vunpack.c.h.b16 %v3011
    %v3100 = vunpack.c.l.b16 %v3012
    %v3101 = vunpack.c.h.b16 %v3012
    %v3102 = vunpack.c.l.b16 %v3013
    %v3103 = vunpack.c.h.b16 %v3013
    %v3104 = vunpack.c.l.b16 %v3014
    %v3105 = vunpack.c.h.b16 %v3014
    %v3106 = vunpack.c.l.b16 %v3015
    %v3107 = vunpack.c.h.b16 %v3015
    %v3108 = vunpack.c.l.b16 %v3016
    %v3109 = vunpack.c.h.b16 %v3016
    %v3110 = vunpack.c.l.b16 %v3017
    %v3111 = vunpack.c.h.b16 %v3017
    %v3112 = vunpack.c.l.b16 %v3018
    %v3113 = vunpack.c.h.b16 %v3018
    %v3114 = vunpack.c.l.b16 %v3019
    %v3115 = vunpack.c.h.b16 %v3019
    %v3116 = vunpack.c.l.b16 %v3020
    %v3117 = vunpack.c.h.b16 %v3020
    %v3118 = vunpack.c.l.b16 %v3021
    %v3119 = vunpack.c.h.b16 %v3021
    %v3120 = vunpack.c.l.b16 %v3022
    %v3121 = vunpack.c.h.b16 %v3022
    %v3122 = vunpack.c.l.b16 %v3023
    %v3123 = vunpack.c.h.b16 %v3023
    %v3124 = vunpack.c.l.b16 %v3024
    %v3125 = vunpack.c.h.b16 %v3024
    %v3126 = vunpack.c.l.b16 %v3025
    %v3127 = vunpack.c.h.b16 %v3025
    %v3128 = vunpack.c.l.b16 %v3026
    %v3129 = vunpack.c.h.b16 %v3026
    %v3130 = vpack.c.b16 %v3068, %v3066
    %v3131 = vpack.c.b16 %v3069, %v3067
    %v3132 = vpack.c.b16 %v3072, %v3070
    %v3133 = vpack.c.b16 %v3073, %v3071
    %v3134 = vpack.c.b16 %v3076, %v3074
    %v3135 = vpack.c.b16 %v3077, %v3075
    %v3136 = vpack.c.b16 %v3080, %v3078
    %v3137 = vpack.c.b16 %v3081, %v3079
    %v3138 = vpack.c.b16 %v3084, %v3082
    %v3139 = vpack.c.b16 %v3085, %v3083
    %v3140 = vpack.c.b16 %v3088, %v3086
    %v3141 = vpack.c.b16 %v3089, %v3087
    %v3142 = vpack.c.b16 %v3092, %v3090
    %v3143 = vpack.c.b16 %v3093, %v3091
    %v3144 = vpack.c.b16 %v3096, %v3094
    %v3145 = vpack.c.b16 %v3097, %v3095
    %v3146 = vpack.c.b16 %v3100, %v3098
    %v3147 = vpack.c.b16 %v3101, %v3099
    %v3148 = vpack.c.b16 %v3104, %v3102
    %v3149 = vpack.c.b16 %v3105, %v3103
    %v3150 = vpack.c.b16 %v3108, %v3106
    %v3151 = vpack.c.b16 %v3109, %v3107
    %v3152 = vpack.c.b16 %v3112, %v3110
    %v3153 = vpack.c.b16 %v3113, %v3111
    %v3154 = vpack.c.b16 %v3116, %v3114
    %v3155 = vpack.c.b16 %v3117, %v3115
    %v3156 = vpack.c.b16 %v3120, %v3118
    %v3157 = vpack.c.b16 %v3121, %v3119
    %v3158 = vpack.c.b16 %v3124, %v3122
    %v3159 = vpack.c.b16 %v3125, %v3123
    %v3160 = vpack.c.b16 %v3128, %v3126
    %v3161 = vpack.c.b16 %v3129, %v3127
    %3194 = vmatpush.bf16.msra.mxu0 %v3144
    %3195 = vmatpush.bf16.msra.mxu0 %v3142
    %3196 = vmatpush.bf16.msra.mxu0 %v3140
    %3197 = vmatpush.bf16.msra.mxu0 %v3138
    %3198 = vmatpush.bf16.msra.mxu0 %v3136
    %3199 = vmatpush.bf16.msra.mxu0 %v3134
    %3200 = vmatpush.bf16.msra.mxu0 %v3132
    %3201 = vmatpush.bf16.msra.mxu0 %v3130
    %3202 = vmatmul.bf16.gmra.mxu0 %v2962
    %v3203 = vpop.f32.mrf.mxu0
    %v3204 = vadd.f32 %v3030, %v3203
    %v3205 = vpop.f32.mrf.mxu0
    %v3206 = vadd.f32 %v3030, %v3205
    %3207 = vmatmul.bf16.gmra.mxu0 %v2964
    %v3208 = vpop.f32.mrf.mxu0
    %v3209 = vadd.f32 %v3030, %v3208
    %v3210 = vpop.f32.mrf.mxu0
    %v3211 = vadd.f32 %v3030, %v3210
    %3212 = vmatmul.bf16.gmra.mxu0 %v2966
    %v3213 = vpop.f32.mrf.mxu0
    %v3214 = vadd.f32 %v3030, %v3213
    %v3215 = vpop.f32.mrf.mxu0
    %v3216 = vadd.f32 %v3030, %v3215
    %3217 = vmatmul.bf16.gmra.mxu0 %v2968
    %v3218 = vpop.f32.mrf.mxu0
    %v3219 = vadd.f32 %v3030, %v3218
    %v3220 = vpop.f32.mrf.mxu0
    %v3221 = vadd.f32 %v3030, %v3220
    %3222 = vmatmul.bf16.gmra.mxu0 %v2970
    %v3223 = vpop.f32.mrf.mxu0
    %v3224 = vadd.f32 %v3030, %v3223
    %v3225 = vpop.f32.mrf.mxu0
    %v3226 = vadd.f32 %v3030, %v3225
    %3227 = vmatmul.bf16.gmra.mxu0 %v2972
    %v3228 = vpop.f32.mrf.mxu0
    %v3229 = vadd.f32 %v3030, %v3228
    %v3230 = vpop.f32.mrf.mxu0
    %v3231 = vadd.f32 %v3030, %v3230
    %3232 = vmatmul.bf16.gmra.mxu0 %v2974
    %v3233 = vpop.f32.mrf.mxu0
    %v3234 = vadd.f32 %v3030, %v3233
    %v3235 = vpop.f32.mrf.mxu0
    %v3236 = vadd.f32 %v3030, %v3235
    %3237 = vmatmul.bf16.gmra.mxu0 %v2976
    %v3238 = vpop.f32.mrf.mxu0
    %v3239 = vadd.f32 %v3030, %v3238
    %v3240 = vpop.f32.mrf.mxu0
    %v3241 = vadd.f32 %v3030, %v3240
    %3242 = vmatmul.bf16.gmra.mxu0 %v2978
    %v3243 = vpop.f32.mrf.mxu0
    %v3244 = vadd.f32 %v3030, %v3243
    %v3245 = vpop.f32.mrf.mxu0
    %v3246 = vadd.f32 %v3030, %v3245
    %3247 = vmatmul.bf16.gmra.mxu0 %v2980
    %v3248 = vpop.f32.mrf.mxu0
    %v3249 = vadd.f32 %v3030, %v3248
    %v3250 = vpop.f32.mrf.mxu0
    %v3251 = vadd.f32 %v3030, %v3250
    %3252 = vmatmul.bf16.gmra.mxu0 %v2982
    %v3253 = vpop.f32.mrf.mxu0
    %v3254 = vadd.f32 %v3030, %v3253
    %v3255 = vpop.f32.mrf.mxu0
    %v3256 = vadd.f32 %v3030, %v3255
    %3257 = vmatmul.bf16.gmra.mxu0 %v2984
    %v3258 = vpop.f32.mrf.mxu0
    %v3259 = vadd.f32 %v3030, %v3258
    %v3260 = vpop.f32.mrf.mxu0
    %v3261 = vadd.f32 %v3030, %v3260
    %3262 = vmatmul.bf16.gmra.mxu0 %v2986
    %v3263 = vpop.f32.mrf.mxu0
    %v3264 = vadd.f32 %v3030, %v3263
    %v3265 = vpop.f32.mrf.mxu0
    %v3266 = vadd.f32 %v3030, %v3265
    %3267 = vmatmul.bf16.gmra.mxu0 %v2988
    %v3268 = vpop.f32.mrf.mxu0
    %v3269 = vadd.f32 %v3030, %v3268
    %v3270 = vpop.f32.mrf.mxu0
    %v3271 = vadd.f32 %v3030, %v3270
    %3272 = vmatmul.bf16.gmra.mxu0 %v2990
    %v3273 = vpop.f32.mrf.mxu0
    %v3274 = vadd.f32 %v3030, %v3273
    %v3275 = vpop.f32.mrf.mxu0
    %v3276 = vadd.f32 %v3030, %v3275
    %3277 = vmatmul.bf16.gmra.mxu0 %v2992
    %v3278 = vpop.f32.mrf.mxu0
    %v3279 = vadd.f32 %v3030, %v3278
    %v3280 = vpop.f32.mrf.mxu0
    %v3281 = vadd.f32 %v3030, %v3280
    %3282 = vdwg.mxu0
    %3283 = vmatpush.bf16.msra.mxu0 %v3160
    %3284 = vmatpush.bf16.msra.mxu0 %v3158
    %3285 = vmatpush.bf16.msra.mxu0 %v3156
    %3286 = vmatpush.bf16.msra.mxu0 %v3154
    %3287 = vmatpush.bf16.msra.mxu0 %v3152
    %3288 = vmatpush.bf16.msra.mxu0 %v3150
    %3289 = vmatpush.bf16.msra.mxu0 %v3148
    %3290 = vmatpush.bf16.msra.mxu0 %v3146
    %3291 = vmatmul.bf16.gmra.mxu0 %v2963
    %v3292 = vpop.f32.mrf.mxu0
    %v3293 = vadd.f32 %v3204, %v3292
    %v3294 = vpop.f32.mrf.mxu0
    %v3295 = vadd.f32 %v3206, %v3294
    %3296 = vmatmul.bf16.gmra.mxu0 %v2965
    %v3297 = vpop.f32.mrf.mxu0
    %v3298 = vadd.f32 %v3209, %v3297
    %v3299 = vpop.f32.mrf.mxu0
    %v3300 = vadd.f32 %v3211, %v3299
    %3301 = vmatmul.bf16.gmra.mxu0 %v2967
    %v3302 = vpop.f32.mrf.mxu0
    %v3303 = vadd.f32 %v3214, %v3302
    %v3304 = vpop.f32.mrf.mxu0
    %v3305 = vadd.f32 %v3216, %v3304
    %3306 = vmatmul.bf16.gmra.mxu0 %v2969
    %v3307 = vpop.f32.mrf.mxu0
    %v3308 = vadd.f32 %v3219, %v3307
    %v3309 = vpop.f32.mrf.mxu0
    %v3310 = vadd.f32 %v3221, %v3309
    %3311 = vmatmul.bf16.gmra.mxu0 %v2971
    %v3312 = vpop.f32.mrf.mxu0
    %v3313 = vadd.f32 %v3224, %v3312
    %v3314 = vpop.f32.mrf.mxu0
    %v3315 = vadd.f32 %v3226, %v3314
    %3316 = vmatmul.bf16.gmra.mxu0 %v2973
    %v3317 = vpop.f32.mrf.mxu0
    %v3318 = vadd.f32 %v3229, %v3317
    %v3319 = vpop.f32.mrf.mxu0
    %v3320 = vadd.f32 %v3231, %v3319
    %3321 = vmatmul.bf16.gmra.mxu0 %v2975
    %v3322 = vpop.f32.mrf.mxu0
    %v3323 = vadd.f32 %v3234, %v3322
    %v3324 = vpop.f32.mrf.mxu0
    %v3325 = vadd.f32 %v3236, %v3324
    %3326 = vmatmul.bf16.gmra.mxu0 %v2977
    %v3327 = vpop.f32.mrf.mxu0
    %v3328 = vadd.f32 %v3239, %v3327
    %v3329 = vpop.f32.mrf.mxu0
    %v3330 = vadd.f32 %v3241, %v3329
    %3331 = vmatmul.bf16.gmra.mxu0 %v2979
    %v3332 = vpop.f32.mrf.mxu0
    %v3333 = vadd.f32 %v3244, %v3332
    %v3334 = vpop.f32.mrf.mxu0
    %v3335 = vadd.f32 %v3246, %v3334
    %3336 = vmatmul.bf16.gmra.mxu0 %v2981
    %v3337 = vpop.f32.mrf.mxu0
    %v3338 = vadd.f32 %v3249, %v3337
    %v3339 = vpop.f32.mrf.mxu0
    %v3340 = vadd.f32 %v3251, %v3339
    %3341 = vmatmul.bf16.gmra.mxu0 %v2983
    %v3342 = vpop.f32.mrf.mxu0
    %v3343 = vadd.f32 %v3254, %v3342
    %v3344 = vpop.f32.mrf.mxu0
    %v3345 = vadd.f32 %v3256, %v3344
    %3346 = vmatmul.bf16.gmra.mxu0 %v2985
    %v3347 = vpop.f32.mrf.mxu0
    %v3348 = vadd.f32 %v3259, %v3347
    %v3349 = vpop.f32.mrf.mxu0
    %v3350 = vadd.f32 %v3261, %v3349
    %3351 = vmatmul.bf16.gmra.mxu0 %v2987
    %v3352 = vpop.f32.mrf.mxu0
    %v3353 = vadd.f32 %v3264, %v3352
    %v3354 = vpop.f32.mrf.mxu0
    %v3355 = vadd.f32 %v3266, %v3354
    %3356 = vmatmul.bf16.gmra.mxu0 %v2989
    %v3357 = vpop.f32.mrf.mxu0
    %v3358 = vadd.f32 %v3269, %v3357
    %v3359 = vpop.f32.mrf.mxu0
    %v3360 = vadd.f32 %v3271, %v3359
    %3361 = vmatmul.bf16.gmra.mxu0 %v2991
    %v3362 = vpop.f32.mrf.mxu0
    %v3363 = vadd.f32 %v3274, %v3362
    %v3364 = vpop.f32.mrf.mxu0
    %v3365 = vadd.f32 %v3276, %v3364
    %3366 = vmatmul.bf16.gmra.mxu0 %v2993
    %v3367 = vpop.f32.mrf.mxu0
    %v3368 = vadd.f32 %v3279, %v3367
    %v3369 = vpop.f32.mrf.mxu0
    %v3370 = vadd.f32 %v3281, %v3369
    %3371 = vdwg.mxu0
    %3372 = vmatpush.bf16.msra.mxu0 %v3145
    %3373 = vmatpush.bf16.msra.mxu0 %v3143
    %3374 = vmatpush.bf16.msra.mxu0 %v3141
    %3375 = vmatpush.bf16.msra.mxu0 %v3139
    %3376 = vmatpush.bf16.msra.mxu0 %v3137
    %3377 = vmatpush.bf16.msra.mxu0 %v3135
    %3378 = vmatpush.bf16.msra.mxu0 %v3133
    %3379 = vmatpush.bf16.msra.mxu0 %v3131
    %3380 = vmatmul.bf16.gmra.mxu0 %v2962
    %v3381 = vpop.f32.mrf.mxu0
    %v3382 = vadd.f32 %v3031, %v3381
    %v3383 = vpop.f32.mrf.mxu0
    %v3384 = vadd.f32 %v3031, %v3383
    %3385 = vmatmul.bf16.gmra.mxu0 %v2964
    %v3386 = vpop.f32.mrf.mxu0
    %v3387 = vadd.f32 %v3031, %v3386
    %v3388 = vpop.f32.mrf.mxu0
    %v3389 = vadd.f32 %v3031, %v3388
    %3390 = vmatmul.bf16.gmra.mxu0 %v2966
    %v3391 = vpop.f32.mrf.mxu0
    %v3392 = vadd.f32 %v3031, %v3391
    %v3393 = vpop.f32.mrf.mxu0
    %v3394 = vadd.f32 %v3031, %v3393
    %3395 = vmatmul.bf16.gmra.mxu0 %v2968
    %v3396 = vpop.f32.mrf.mxu0
    %v3397 = vadd.f32 %v3031, %v3396
    %v3398 = vpop.f32.mrf.mxu0
    %v3399 = vadd.f32 %v3031, %v3398
    %3400 = vmatmul.bf16.gmra.mxu0 %v2970
    %v3401 = vpop.f32.mrf.mxu0
    %v3402 = vadd.f32 %v3031, %v3401
    %v3403 = vpop.f32.mrf.mxu0
    %v3404 = vadd.f32 %v3031, %v3403
    %3405 = vmatmul.bf16.gmra.mxu0 %v2972
    %v3406 = vpop.f32.mrf.mxu0
    %v3407 = vadd.f32 %v3031, %v3406
    %v3408 = vpop.f32.mrf.mxu0
    %v3409 = vadd.f32 %v3031, %v3408
    %3410 = vmatmul.bf16.gmra.mxu0 %v2974
    %v3411 = vpop.f32.mrf.mxu0
    %v3412 = vadd.f32 %v3031, %v3411
    %v3413 = vpop.f32.mrf.mxu0
    %v3414 = vadd.f32 %v3031, %v3413
    %3415 = vmatmul.bf16.gmra.mxu0 %v2976
    %v3416 = vpop.f32.mrf.mxu0
    %v3417 = vadd.f32 %v3031, %v3416
    %v3418 = vpop.f32.mrf.mxu0
    %v3419 = vadd.f32 %v3031, %v3418
    %3420 = vmatmul.bf16.gmra.mxu0 %v2978
    %v3421 = vpop.f32.mrf.mxu0
    %v3422 = vadd.f32 %v3031, %v3421
    %v3423 = vpop.f32.mrf.mxu0
    %v3424 = vadd.f32 %v3031, %v3423
    %3425 = vmatmul.bf16.gmra.mxu0 %v2980
    %v3426 = vpop.f32.mrf.mxu0
    %v3427 = vadd.f32 %v3031, %v3426
    %v3428 = vpop.f32.mrf.mxu0
    %v3429 = vadd.f32 %v3031, %v3428
    %3430 = vmatmul.bf16.gmra.mxu0 %v2982
    %v3431 = vpop.f32.mrf.mxu0
    %v3432 = vadd.f32 %v3031, %v3431
    %v3433 = vpop.f32.mrf.mxu0
    %v3434 = vadd.f32 %v3031, %v3433
    %3435 = vmatmul.bf16.gmra.mxu0 %v2984
    %v3436 = vpop.f32.mrf.mxu0
    %v3437 = vadd.f32 %v3031, %v3436
    %v3438 = vpop.f32.mrf.mxu0
    %v3439 = vadd.f32 %v3031, %v3438
    %3440 = vmatmul.bf16.gmra.mxu0 %v2986
    %v3441 = vpop.f32.mrf.mxu0
    %v3442 = vadd.f32 %v3031, %v3441
    %v3443 = vpop.f32.mrf.mxu0
    %v3444 = vadd.f32 %v3031, %v3443
    %3445 = vmatmul.bf16.gmra.mxu0 %v2988
    %v3446 = vpop.f32.mrf.mxu0
    %v3447 = vadd.f32 %v3031, %v3446
    %v3448 = vpop.f32.mrf.mxu0
    %v3449 = vadd.f32 %v3031, %v3448
    %3450 = vmatmul.bf16.gmra.mxu0 %v2990
    %v3451 = vpop.f32.mrf.mxu0
    %v3452 = vadd.f32 %v3031, %v3451
    %v3453 = vpop.f32.mrf.mxu0
    %v3454 = vadd.f32 %v3031, %v3453
    %3455 = vmatmul.bf16.gmra.mxu0 %v2992
    %v3456 = vpop.f32.mrf.mxu0
    %v3457 = vadd.f32 %v3031, %v3456
    %v3458 = vpop.f32.mrf.mxu0
    %v3459 = vadd.f32 %v3031, %v3458
    %3460 = vdwg.mxu0
    %3461 = vmatpush.bf16.msra.mxu0 %v3161
    %3462 = vmatpush.bf16.msra.mxu0 %v3159
    %3463 = vmatpush.bf16.msra.mxu0 %v3157
    %3464 = vmatpush.bf16.msra.mxu0 %v3155
    %3465 = vmatpush.bf16.msra.mxu0 %v3153
    %3466 = vmatpush.bf16.msra.mxu0 %v3151
    %3467 = vmatpush.bf16.msra.mxu0 %v3149
    %3468 = vmatpush.bf16.msra.mxu0 %v3147
    %3469 = vmatmul.bf16.gmra.mxu0 %v2963
    %v3470 = vpop.f32.mrf.mxu0
    %v3471 = vadd.f32 %v3382, %v3470
    %v3472 = vpop.f32.mrf.mxu0
    %v3473 = vadd.f32 %v3384, %v3472
    %3474 = vmatmul.bf16.gmra.mxu0 %v2965
    %v3475 = vpop.f32.mrf.mxu0
    %v3476 = vadd.f32 %v3387, %v3475
    %v3477 = vpop.f32.mrf.mxu0
    %v3478 = vadd.f32 %v3389, %v3477
    %3479 = vmatmul.bf16.gmra.mxu0 %v2967
    %v3480 = vpop.f32.mrf.mxu0
    %v3481 = vadd.f32 %v3392, %v3480
    %v3482 = vpop.f32.mrf.mxu0
    %v3483 = vadd.f32 %v3394, %v3482
    %3484 = vmatmul.bf16.gmra.mxu0 %v2969
    %v3485 = vpop.f32.mrf.mxu0
    %v3486 = vadd.f32 %v3397, %v3485
    %v3487 = vpop.f32.mrf.mxu0
    %v3488 = vadd.f32 %v3399, %v3487
    %3489 = vmatmul.bf16.gmra.mxu0 %v2971
    %v3490 = vpop.f32.mrf.mxu0
    %v3491 = vadd.f32 %v3402, %v3490
    %v3492 = vpop.f32.mrf.mxu0
    %v3493 = vadd.f32 %v3404, %v3492
    %3494 = vmatmul.bf16.gmra.mxu0 %v2973
    %v3495 = vpop.f32.mrf.mxu0
    %v3496 = vadd.f32 %v3407, %v3495
    %v3497 = vpop.f32.mrf.mxu0
    %v3498 = vadd.f32 %v3409, %v3497
    %3499 = vmatmul.bf16.gmra.mxu0 %v2975
    %v3500 = vpop.f32.mrf.mxu0
    %v3501 = vadd.f32 %v3412, %v3500
    %v3502 = vpop.f32.mrf.mxu0
    %v3503 = vadd.f32 %v3414, %v3502
    %3504 = vmatmul.bf16.gmra.mxu0 %v2977
    %v3505 = vpop.f32.mrf.mxu0
    %v3506 = vadd.f32 %v3417, %v3505
    %v3507 = vpop.f32.mrf.mxu0
    %v3508 = vadd.f32 %v3419, %v3507
    %3509 = vmatmul.bf16.gmra.mxu0 %v2979
    %v3510 = vpop.f32.mrf.mxu0
    %v3511 = vadd.f32 %v3422, %v3510
    %v3512 = vpop.f32.mrf.mxu0
    %v3513 = vadd.f32 %v3424, %v3512
    %3514 = vmatmul.bf16.gmra.mxu0 %v2981
    %v3515 = vpop.f32.mrf.mxu0
    %v3516 = vadd.f32 %v3427, %v3515
    %v3517 = vpop.f32.mrf.mxu0
    %v3518 = vadd.f32 %v3429, %v3517
    %3519 = vmatmul.bf16.gmra.mxu0 %v2983
    %v3520 = vpop.f32.mrf.mxu0
    %v3521 = vadd.f32 %v3432, %v3520
    %v3522 = vpop.f32.mrf.mxu0
    %v3523 = vadd.f32 %v3434, %v3522
    %3524 = vmatmul.bf16.gmra.mxu0 %v2985
    %v3525 = vpop.f32.mrf.mxu0
    %v3526 = vadd.f32 %v3437, %v3525
    %v3527 = vpop.f32.mrf.mxu0
    %v3528 = vadd.f32 %v3439, %v3527
    %3529 = vmatmul.bf16.gmra.mxu0 %v2987
    %v3530 = vpop.f32.mrf.mxu0
    %v3531 = vadd.f32 %v3442, %v3530
    %v3532 = vpop.f32.mrf.mxu0
    %v3533 = vadd.f32 %v3444, %v3532
    %3534 = vmatmul.bf16.gmra.mxu0 %v2989
    %v3535 = vpop.f32.mrf.mxu0
    %v3536 = vadd.f32 %v3447, %v3535
    %v3537 = vpop.f32.mrf.mxu0
    %v3538 = vadd.f32 %v3449, %v3537
    %3539 = vmatmul.bf16.gmra.mxu0 %v2991
    %v3540 = vpop.f32.mrf.mxu0
    %v3541 = vadd.f32 %v3452, %v3540
    %v3542 = vpop.f32.mrf.mxu0
    %v3543 = vadd.f32 %v3454, %v3542
    %3544 = vmatmul.bf16.gmra.mxu0 %v2993
    %v3545 = vpop.f32.mrf.mxu0
    %v3546 = vadd.f32 %v3457, %v3545
    %v3547 = vpop.f32.mrf.mxu0
    %v3548 = vadd.f32 %v3459, %v3547
    %3549 = vdwg.mxu0
    %v3550 = vmax.f32 %v3293, 0.0
    %v3551 = vmax.f32 %v3471, 0.0
    %v3552 = vmax.f32 %v3295, 0.0
    %v3553 = vmax.f32 %v3473, 0.0
    %v3554 = vmax.f32 %v3298, 0.0
    %v3555 = vmax.f32 %v3476, 0.0
    %v3556 = vmax.f32 %v3300, 0.0
    %v3557 = vmax.f32 %v3478, 0.0
    %v3558 = vmax.f32 %v3303, 0.0
    %v3559 = vmax.f32 %v3481, 0.0
    %v3560 = vmax.f32 %v3305, 0.0
    %v3561 = vmax.f32 %v3483, 0.0
    %v3562 = vmax.f32 %v3308, 0.0
    %v3563 = vmax.f32 %v3486, 0.0
    %v3564 = vmax.f32 %v3310, 0.0
    %v3565 = vmax.f32 %v3488, 0.0
    %v3566 = vmax.f32 %v3313, 0.0
    %v3567 = vmax.f32 %v3491, 0.0
    %v3568 = vmax.f32 %v3315, 0.0
    %v3569 = vmax.f32 %v3493, 0.0
    %v3570 = vmax.f32 %v3318, 0.0
    %v3571 = vmax.f32 %v3496, 0.0
    %v3572 = vmax.f32 %v3320, 0.0
    %v3573 = vmax.f32 %v3498, 0.0
    %v3574 = vmax.f32 %v3323, 0.0
    %v3575 = vmax.f32 %v3501, 0.0
    %v3576 = vmax.f32 %v3325, 0.0
    %v3577 = vmax.f32 %v3503, 0.0
    %v3578 = vmax.f32 %v3328, 0.0
    %v3579 = vmax.f32 %v3506, 0.0
    %v3580 = vmax.f32 %v3330, 0.0
    %v3581 = vmax.f32 %v3508, 0.0
    %v3582 = vmax.f32 %v3333, 0.0
    %v3583 = vmax.f32 %v3511, 0.0
    %v3584 = vmax.f32 %v3335, 0.0
    %v3585 = vmax.f32 %v3513, 0.0
    %v3586 = vmax.f32 %v3338, 0.0
    %v3587 = vmax.f32 %v3516, 0.0
    %v3588 = vmax.f32 %v3340, 0.0
    %v3589 = vmax.f32 %v3518, 0.0
    %v3590 = vmax.f32 %v3343, 0.0
    %v3591 = vmax.f32 %v3521, 0.0
    %v3592 = vmax.f32 %v3345, 0.0
    %v3593 = vmax.f32 %v3523, 0.0
    %v3594 = vmax.f32 %v3348, 0.0
    %v3595 = vmax.f32 %v3526, 0.0
    %v3596 = vmax.f32 %v3350, 0.0
    %v3597 = vmax.f32 %v3528, 0.0
    %v3598 = vmax.f32 %v3353, 0.0
    %v3599 = vmax.f32 %v3531, 0.0
    %v3600 = vmax.f32 %v3355, 0.0
    %v3601 = vmax.f32 %v3533, 0.0
    %v3602 = vmax.f32 %v3358, 0.0
    %v3603 = vmax.f32 %v3536, 0.0
    %v3604 = vmax.f32 %v3360, 0.0
    %v3605 = vmax.f32 %v3538, 0.0
    %v3606 = vmax.f32 %v3363, 0.0
    %v3607 = vmax.f32 %v3541, 0.0
    %v3608 = vmax.f32 %v3365, 0.0
    %v3609 = vmax.f32 %v3543, 0.0
    %v3610 = vmax.f32 %v3368, 0.0
    %v3611 = vmax.f32 %v3546, 0.0
    %v3612 = vmax.f32 %v3370, 0.0
    %v3613 = vmax.f32 %v3548, 0.0
    %v3614 = vpack.c.bf16 %v3552, %v3550
    %v3615 = vpack.c.bf16 %v3553, %v3551
    %v3616 = vpack.c.bf16 %v3556, %v3554
    %v3617 = vpack.c.bf16 %v3557, %v3555
    %v3618 = vpack.c.bf16 %v3560, %v3558
    %v3619 = vpack.c.bf16 %v3561, %v3559
    %v3620 = vpack.c.bf16 %v3564, %v3562
    %v3621 = vpack.c.bf16 %v3565, %v3563
    %v3622 = vpack.c.bf16 %v3568, %v3566
    %v3623 = vpack.c.bf16 %v3569, %v3567
    %v3624 = vpack.c.bf16 %v3572, %v3570
    %v3625 = vpack.c.bf16 %v3573, %v3571
    %v3626 = vpack.c.bf16 %v3576, %v3574
    %v3627 = vpack.c.bf16 %v3577, %v3575
    %v3628 = vpack.c.bf16 %v3580, %v3578
    %v3629 = vpack.c.bf16 %v3581, %v3579
    %v3630 = vpack.c.bf16 %v3584, %v3582
    %v3631 = vpack.c.bf16 %v3585, %v3583
    %v3632 = vpack.c.bf16 %v3588, %v3586
    %v3633 = vpack.c.bf16 %v3589, %v3587
    %v3634 = vpack.c.bf16 %v3592, %v3590
    %v3635 = vpack.c.bf16 %v3593, %v3591
    %v3636 = vpack.c.bf16 %v3596, %v3594
    %v3637 = vpack.c.bf16 %v3597, %v3595
    %v3638 = vpack.c.bf16 %v3600, %v3598
    %v3639 = vpack.c.bf16 %v3601, %v3599
    %v3640 = vpack.c.bf16 %v3604, %v3602
    %v3641 = vpack.c.bf16 %v3605, %v3603
    %v3642 = vpack.c.bf16 %v3608, %v3606
    %v3643 = vpack.c.bf16 %v3609, %v3607
    %v3644 = vpack.c.bf16 %v3612, %v3610
    %v3645 = vpack.c.bf16 %v3613, %v3611
    %v3646 = vld [vmem:[%s3] sm:$0xf]
    %v3647 = vld [vmem:[%s3 + $0x4] sm:$0xf]
    %v3648 = vld [vmem:[%s3 + $0x8] sm:$0xf]
    %v3649 = vld [vmem:[%s3 + $0xc] sm:$0xf]
    %v3650 = vld [vmem:[%s3 + $0x10] sm:$0xf]
    %v3651 = vld [vmem:[%s3 + $0x14] sm:$0xf]
    %v3652 = vld [vmem:[%s3 + $0x18] sm:$0xf]
    %v3653 = vld [vmem:[%s3 + $0x1c] sm:$0xf]
    %v3654 = vld [vmem:[%s3 + $0x20] sm:$0xf]
    %v3655 = vld [vmem:[%s3 + $0x24] sm:$0xf]
    %v3656 = vld [vmem:[%s3 + $0x28] sm:$0xf]
    %v3657 = vld [vmem:[%s3 + $0x2c] sm:$0xf]
    %v3658 = vld [vmem:[%s3 + $0x30] sm:$0xf]
    %v3659 = vld [vmem:[%s3 + $0x34] sm:$0xf]
    %v3660 = vld [vmem:[%s3 + $0x38] sm:$0xf]
    %v3661 = vld [vmem:[%s3 + $0x3c] sm:$0xf]
    %v3662 = vld [vmem:[%s3 + $0x40] sm:$0xf]
    %v3663 = vld [vmem:[%s3 + $0x44] sm:$0xf]
    %v3664 = vld [vmem:[%s3 + $0x48] sm:$0xf]
    %v3665 = vld [vmem:[%s3 + $0x4c] sm:$0xf]
    %v3666 = vld [vmem:[%s3 + $0x50] sm:$0xf]
    %v3667 = vld [vmem:[%s3 + $0x54] sm:$0xf]
    %v3668 = vld [vmem:[%s3 + $0x58] sm:$0xf]
    %v3669 = vld [vmem:[%s3 + $0x5c] sm:$0xf]
    %v3670 = vld [vmem:[%s3 + $0x60] sm:$0xf]
    %v3671 = vld [vmem:[%s3 + $0x64] sm:$0xf]
    %v3672 = vld [vmem:[%s3 + $0x68] sm:$0xf]
    %v3673 = vld [vmem:[%s3 + $0x6c] sm:$0xf]
    %v3674 = vld [vmem:[%s3 + $0x70] sm:$0xf]
    %v3675 = vld [vmem:[%s3 + $0x74] sm:$0xf]
    %v3676 = vld [vmem:[%s3 + $0x78] sm:$0xf]
    %v3677 = vld [vmem:[%s3 + $0x7c] sm:$0xf]
    %v3678 = vld [vmem:[%s4 + $0x3] sm:$0x1]
    %v3679 = vperm.slane %v3678, 0
    %v3712 = vunpack.c.l.b16 %v3646
    %v3713 = vunpack.c.l.b16 %v3647
    %v3714 = vunpack.c.l.b16 %v3648
    %v3715 = vunpack.c.l.b16 %v3649
    %v3716 = vunpack.c.l.b16 %v3650
    %v3717 = vunpack.c.l.b16 %v3651
    %v3718 = vunpack.c.l.b16 %v3652
    %v3719 = vunpack.c.l.b16 %v3653
    %v3720 = vunpack.c.l.b16 %v3654
    %v3721 = vunpack.c.l.b16 %v3655
    %v3722 = vunpack.c.l.b16 %v3656
    %v3723 = vunpack.c.l.b16 %v3657
    %v3724 = vunpack.c.l.b16 %v3658
    %v3725 = vunpack.c.l.b16 %v3659
    %v3726 = vunpack.c.l.b16 %v3660
    %v3727 = vunpack.c.l.b16 %v3661
    %v3728 = vunpack.c.l.b16 %v3662
    %v3729 = vunpack.c.l.b16 %v3663
    %v3730 = vunpack.c.l.b16 %v3664
    %v3731 = vunpack.c.l.b16 %v3665
    %v3732 = vunpack.c.l.b16 %v3666
    %v3733 = vunpack.c.l.b16 %v3667
    %v3734 = vunpack.c.l.b16 %v3668
    %v3735 = vunpack.c.l.b16 %v3669
    %v3736 = vunpack.c.l.b16 %v3670
    %v3737 = vunpack.c.l.b16 %v3671
    %v3738 = vunpack.c.l.b16 %v3672
    %v3739 = vunpack.c.l.b16 %v3673
    %v3740 = vunpack.c.l.b16 %v3674
    %v3741 = vunpack.c.l.b16 %v3675
    %v3742 = vunpack.c.l.b16 %v3676
    %v3743 = vunpack.c.l.b16 %v3677
    %v3744 = vpack.c.b16 %v3713, %v3712
    %v3745 = vpack.c.b16 %v3715, %v3714
    %v3746 = vpack.c.b16 %v3717, %v3716
    %v3747 = vpack.c.b16 %v3719, %v3718
    %v3748 = vpack.c.b16 %v3721, %v3720
    %v3749 = vpack.c.b16 %v3723, %v3722
    %v3750 = vpack.c.b16 %v3725, %v3724
    %v3751 = vpack.c.b16 %v3727, %v3726
    %v3752 = vpack.c.b16 %v3729, %v3728
    %v3753 = vpack.c.b16 %v3731, %v3730
    %v3754 = vpack.c.b16 %v3733, %v3732
    %v3755 = vpack.c.b16 %v3735, %v3734
    %v3756 = vpack.c.b16 %v3737, %v3736
    %v3757 = vpack.c.b16 %v3739, %v3738
    %v3758 = vpack.c.b16 %v3741, %v3740
    %v3759 = vpack.c.b16 %v3743, %v3742
    %3776 = vmatpush.bf16.msra.mxu0 %v3751
    %3777 = vmatpush.bf16.msra.mxu0 %v3750
    %3778 = vmatpush.bf16.msra.mxu0 %v3749
    %3779 = vmatpush.bf16.msra.mxu0 %v3748
    %3780 = vmatpush.bf16.msra.mxu0 %v3747
    %3781 = vmatpush.bf16.msra.mxu0 %v3746
    %3782 = vmatpush.bf16.msra.mxu0 %v3745
    %3783 = vmatpush.bf16.msra.mxu0 %v3744
    %3784 = vmatmul.bf16.gmra.mxu0 %v3614
    %v3785 = vpop.f32.mrf.mxu0
    %v3786 = vadd.f32 %v3679, %v3785
    %v3787 = vpop.f32.mrf.mxu0
    %v3788 = vadd.f32 %v3679, %v3787
    %3789 = vmatmul.bf16.gmra.mxu0 %v3616
    %v3790 = vpop.f32.mrf.mxu0
    %v3791 = vadd.f32 %v3679, %v3790
    %v3792 = vpop.f32.mrf.mxu0
    %v3793 = vadd.f32 %v3679, %v3792
    %3794 = vmatmul.bf16.gmra.mxu0 %v3618
    %v3795 = vpop.f32.mrf.mxu0
    %v3796 = vadd.f32 %v3679, %v3795
    %v3797 = vpop.f32.mrf.mxu0
    %v3798 = vadd.f32 %v3679, %v3797
    %3799 = vmatmul.bf16.gmra.mxu0 %v3620
    %v3800 = vpop.f32.mrf.mxu0
    %v3801 = vadd.f32 %v3679, %v3800
    %v3802 = vpop.f32.mrf.mxu0
    %v3803 = vadd.f32 %v3679, %v3802
    %3804 = vmatmul.bf16.gmra.mxu0 %v3622
    %v3805 = vpop.f32.mrf.mxu0
    %v3806 = vadd.f32 %v3679, %v3805
    %v3807 = vpop.f32.mrf.mxu0
    %v3808 = vadd.f32 %v3679, %v3807
    %3809 = vmatmul.bf16.gmra.mxu0 %v3624
    %v3810 = vpop.f32.mrf.mxu0
    %v3811 = vadd.f32 %v3679, %v3810
    %v3812 = vpop.f32.mrf.mxu0
    %v3813 = vadd.f32 %v3679, %v3812
    %3814 = vmatmul.bf16.gmra.mxu0 %v3626
    %v3815 = vpop.f32.mrf.mxu0
    %v3816 = vadd.f32 %v3679, %v3815
    %v3817 = vpop.f32.mrf.mxu0
    %v3818 = vadd.f32 %v3679, %v3817
    %3819 = vmatmul.bf16.gmra.mxu0 %v3628
    %v3820 = vpop.f32.mrf.mxu0
    %v3821 = vadd.f32 %v3679, %v3820
    %v3822 = vpop.f32.mrf.mxu0
    %v3823 = vadd.f32 %v3679, %v3822
    %3824 = vmatmul.bf16.gmra.mxu0 %v3630
    %v3825 = vpop.f32.mrf.mxu0
    %v3826 = vadd.f32 %v3679, %v3825
    %v3827 = vpop.f32.mrf.mxu0
    %v3828 = vadd.f32 %v3679, %v3827
    %3829 = vmatmul.bf16.gmra.mxu0 %v3632
    %v3830 = vpop.f32.mrf.mxu0
    %v3831 = vadd.f32 %v3679, %v3830
    %v3832 = vpop.f32.mrf.mxu0
    %v3833 = vadd.f32 %v3679, %v3832
    %3834 = vmatmul.bf16.gmra.mxu0 %v3634
    %v3835 = vpop.f32.mrf.mxu0
    %v3836 = vadd.f32 %v3679, %v3835
    %v3837 = vpop.f32.mrf.mxu0
    %v3838 = vadd.f32 %v3679, %v3837
    %3839 = vmatmul.bf16.gmra.mxu0 %v3636
    %v3840 = vpop.f32.mrf.mxu0
    %v3841 = vadd.f32 %v3679, %v3840
    %v3842 = vpop.f32.mrf.mxu0
    %v3843 = vadd.f32 %v3679, %v3842
    %3844 = vmatmul.bf16.gmra.mxu0 %v3638
    %v3845 = vpop.f32.mrf.mxu0
    %v3846 = vadd.f32 %v3679, %v3845
    %v3847 = vpop.f32.mrf.mxu0
    %v3848 = vadd.f32 %v3679, %v3847
    %3849 = vmatmul.bf16.gmra.mxu0 %v3640
    %v3850 = vpop.f32.mrf.mxu0
    %v3851 = vadd.f32 %v3679, %v3850
    %v3852 = vpop.f32.mrf.mxu0
    %v3853 = vadd.f32 %v3679, %v3852
    %3854 = vmatmul.bf16.gmra.mxu0 %v3642
    %v3855 = vpop.f32.mrf.mxu0
    %v3856 = vadd.f32 %v3679, %v3855
    %v3857 = vpop.f32.mrf.mxu0
    %v3858 = vadd.f32 %v3679, %v3857
    %3859 = vmatmul.bf16.gmra.mxu0 %v3644
    %v3860 = vpop.f32.mrf.mxu0
    %v3861 = vadd.f32 %v3679, %v3860
    %v3862 = vpop.f32.mrf.mxu0
    %v3863 = vadd.f32 %v3679, %v3862
    %3864 = vdwg.mxu0
    %3865 = vmatpush.bf16.msra.mxu0 %v3759
    %3866 = vmatpush.bf16.msra.mxu0 %v3758
    %3867 = vmatpush.bf16.msra.mxu0 %v3757
    %3868 = vmatpush.bf16.msra.mxu0 %v3756
    %3869 = vmatpush.bf16.msra.mxu0 %v3755
    %3870 = vmatpush.bf16.msra.mxu0 %v3754
    %3871 = vmatpush.bf16.msra.mxu0 %v3753
    %3872 = vmatpush.bf16.msra.mxu0 %v3752
    %3873 = vmatmul.bf16.gmra.mxu0 %v3615
    %v3874 = vpop.f32.mrf.mxu0
    %v3875 = vadd.f32 %v3786, %v3874
    %v3876 = vpop.f32.mrf.mxu0
    %v3877 = vadd.f32 %v3788, %v3876
    %3878 = vmatmul.bf16.gmra.mxu0 %v3617
    %v3879 = vpop.f32.mrf.mxu0
    %v3880 = vadd.f32 %v3791, %v3879
    %v3881 = vpop.f32.mrf.mxu0
    %v3882 = vadd.f32 %v3793, %v3881
    %3883 = vmatmul.bf16.gmra.mxu0 %v3619
    %v3884 = vpop.f32.mrf.mxu0
    %v3885 = vadd.f32 %v3796, %v3884
    %v3886 = vpop.f32.mrf.mxu0
    %v3887 = vadd.f32 %v3798, %v3886
    %3888 = vmatmul.bf16.gmra.mxu0 %v3621
    %v3889 = vpop.f32.mrf.mxu0
    %v3890 = vadd.f32 %v3801, %v3889
    %v3891 = vpop.f32.mrf.mxu0
    %v3892 = vadd.f32 %v3803, %v3891
    %3893 = vmatmul.bf16.gmra.mxu0 %v3623
    %v3894 = vpop.f32.mrf.mxu0
    %v3895 = vadd.f32 %v3806, %v3894
    %v3896 = vpop.f32.mrf.mxu0
    %v3897 = vadd.f32 %v3808, %v3896
    %3898 = vmatmul.bf16.gmra.mxu0 %v3625
    %v3899 = vpop.f32.mrf.mxu0
    %v3900 = vadd.f32 %v3811, %v3899
    %v3901 = vpop.f32.mrf.mxu0
    %v3902 = vadd.f32 %v3813, %v3901
    %3903 = vmatmul.bf16.gmra.mxu0 %v3627
    %v3904 = vpop.f32.mrf.mxu0
    %v3905 = vadd.f32 %v3816, %v3904
    %v3906 = vpop.f32.mrf.mxu0
    %v3907 = vadd.f32 %v3818, %v3906
    %3908 = vmatmul.bf16.gmra.mxu0 %v3629
    %v3909 = vpop.f32.mrf.mxu0
    %v3910 = vadd.f32 %v3821, %v3909
    %v3911 = vpop.f32.mrf.mxu0
    %v3912 = vadd.f32 %v3823, %v3911
    %3913 = vmatmul.bf16.gmra.mxu0 %v3631
    %v3914 = vpop.f32.mrf.mxu0
    %v3915 = vadd.f32 %v3826, %v3914
    %v3916 = vpop.f32.mrf.mxu0
    %v3917 = vadd.f32 %v3828, %v3916
    %3918 = vmatmul.bf16.gmra.mxu0 %v3633
    %v3919 = vpop.f32.mrf.mxu0
    %v3920 = vadd.f32 %v3831, %v3919
    %v3921 = vpop.f32.mrf.mxu0
    %v3922 = vadd.f32 %v3833, %v3921
    %3923 = vmatmul.bf16.gmra.mxu0 %v3635
    %v3924 = vpop.f32.mrf.mxu0
    %v3925 = vadd.f32 %v3836, %v3924
    %v3926 = vpop.f32.mrf.mxu0
    %v3927 = vadd.f32 %v3838, %v3926
    %3928 = vmatmul.bf16.gmra.mxu0 %v3637
    %v3929 = vpop.f32.mrf.mxu0
    %v3930 = vadd.f32 %v3841, %v3929
    %v3931 = vpop.f32.mrf.mxu0
    %v3932 = vadd.f32 %v3843, %v3931
    %3933 = vmatmul.bf16.gmra.mxu0 %v3639
    %v3934 = vpop.f32.mrf.mxu0
    %v3935 = vadd.f32 %v3846, %v3934
    %v3936 = vpop.f32.mrf.mxu0
    %v3937 = vadd.f32 %v3848, %v3936
    %3938 = vmatmul.bf16.gmra.mxu0 %v3641
    %v3939 = vpop.f32.mrf.mxu0
    %v3940 = vadd.f32 %v3851, %v3939
    %v3941 = vpop.f32.mrf.mxu0
    %v3942 = vadd.f32 %v3853, %v3941
    %3943 = vmatmul.bf16.gmra.mxu0 %v3643
    %v3944 = vpop.f32.mrf.mxu0
    %v3945 = vadd.f32 %v3856, %v3944
    %v3946 = vpop.f32.mrf.mxu0
    %v3947 = vadd.f32 %v3858, %v3946
    %3948 = vmatmul.bf16.gmra.mxu0 %v3645
    %v3949 = vpop.f32.mrf.mxu0
    %v3950 = vadd.f32 %v3861, %v3949
    %v3951 = vpop.f32.mrf.mxu0
    %v3952 = vadd.f32 %v3863, %v3951
    %3953 = vdwg.mxu0
    %v3954 = vpack.c.bf16 %v3875, %v3875
    %v3955 = vpack.c.bf16 %v3877, %v3877
    %v3956 = vpack.c.bf16 %v3880, %v3880
    %v3957 = vpack.c.bf16 %v3882, %v3882
    %v3958 = vpack.c.bf16 %v3885, %v3885
    %v3959 = vpack.c.bf16 %v3887, %v3887
    %v3960 = vpack.c.bf16 %v3890, %v3890
    %v3961 = vpack.c.bf16 %v3892, %v3892
    %v3962 = vpack.c.bf16 %v3895, %v3895
    %v3963 = vpack.c.bf16 %v3897, %v3897
    %v3964 = vpack.c.bf16 %v3900, %v3900
    %v3965 = vpack.c.bf16 %v3902, %v3902
    %v3966 = vpack.c.bf16 %v3905, %v3905
    %v3967 = vpack.c.bf16 %v3907, %v3907
    %v3968 = vpack.c.bf16 %v3910, %v3910
    %v3969 = vpack.c.bf16 %v3912, %v3912
    %v3970 = vpack.c.bf16 %v3915, %v3915
    %v3971 = vpack.c.bf16 %v3917, %v3917
    %v3972 = vpack.c.bf16 %v3920, %v3920
    %v3973 = vpack.c.bf16 %v3922, %v3922
    %v3974 = vpack.c.bf16 %v3925, %v3925
    %v3975 = vpack.c.bf16 %v3927, %v3927
    %v3976 = vpack.c.bf16 %v3930, %v3930
    %v3977 = vpack.c.bf16 %v3932, %v3932
    %v3978 = vpack.c.bf16 %v3935, %v3935
    %v3979 = vpack.c.bf16 %v3937, %v3937
    %v3980 = vpack.c.bf16 %v3940, %v3940
    %v3981 = vpack.c.bf16 %v3942, %v3942
    %v3982 = vpack.c.bf16 %v3945, %v3945
    %v3983 = vpack.c.bf16 %v3947, %v3947
    %v3984 = vpack.c.bf16 %v3950, %v3950
    %v3985 = vpack.c.bf16 %v3952, %v3952
    %3986 = vst [vmem:[#allocation2] sm:$0xf] %v3954
    %3987 = vst [vmem:[#allocation2 + $0x4] sm:$0xf] %v3955
    %3988 = vst [vmem:[#allocation2 + $0x8] sm:$0xf] %v3956
    %3989 = vst [vmem:[#allocation2 + $0xc] sm:$0xf] %v3957
    %3990 = vst [vmem:[#allocation2 + $0x10] sm:$0xf] %v3958
    %3991 = vst [vmem:[#allocation2 + $0x14] sm:$0xf] %v3959
    %3992 = vst [vmem:[#allocation2 + $0x18] sm:$0xf] %v3960
    %3993 = vst [vmem:[#allocation2 + $0x1c] sm:$0xf] %v3961
    %3994 = vst [vmem:[#allocation2 + $0x20] sm:$0xf] %v3962
    %3995 = vst [vmem:[#allocation2 + $0x24] sm:$0xf] %v3963
    %3996 = vst [vmem:[#allocation2 + $0x28] sm:$0xf] %v3964
    %3997 = vst [vmem:[#allocation2 + $0x2c] sm:$0xf] %v3965
    %3998 = vst [vmem:[#allocation2 + $0x30] sm:$0xf] %v3966
    %3999 = vst [vmem:[#allocation2 + $0x34] sm:$0xf] %v3967
    %4000 = vst [vmem:[#allocation2 + $0x38] sm:$0xf] %v3968
    %4001 = vst [vmem:[#allocation2 + $0x3c] sm:$0xf] %v3969
    %4002 = vst [vmem:[#allocation2 + $0x40] sm:$0xf] %v3970
    %4003 = vst [vmem:[#allocation2 + $0x44] sm:$0xf] %v3971
    %4004 = vst [vmem:[#allocation2 + $0x48] sm:$0xf] %v3972
    %4005 = vst [vmem:[#allocation2 + $0x4c] sm:$0xf] %v3973
    %4006 = vst [vmem:[#allocation2 + $0x50] sm:$0xf] %v3974
    %4007 = vst [vmem:[#allocation2 + $0x54] sm:$0xf] %v3975
    %4008 = vst [vmem:[#allocation2 + $0x58] sm:$0xf] %v3976
    %4009 = vst [vmem:[#allocation2 + $0x5c] sm:$0xf] %v3977
    %4010 = vst [vmem:[#allocation2 + $0x60] sm:$0xf] %v3978
    %4011 = vst [vmem:[#allocation2 + $0x64] sm:$0xf] %v3979
    %4012 = vst [vmem:[#allocation2 + $0x68] sm:$0xf] %v3980
    %4013 = vst [vmem:[#allocation2 + $0x6c] sm:$0xf] %v3981
    %4014 = vst [vmem:[#allocation2 + $0x70] sm:$0xf] %v3982
    %4015 = vst [vmem:[#allocation2 + $0x74] sm:$0xf] %v3983
    %4016 = vst [vmem:[#allocation2 + $0x78] sm:$0xf] %v3984
    %4017 = vst [vmem:[#allocation2 + $0x7c] sm:$0xf] %v3985
    // Predicated region
    $region22: #{tpu_custom_call.1} parent=1 // pred_check
      _
    $region23: #{tpu_custom_call.1} parent=1 // pred_check_branch
      %4019 = sbr.rel (0) target = $region25
    $region24: #{tpu_custom_call.1} parent=1 // pred_region
      %4021 = vsyncadd [#allocation3], 0
      %s4022 = sshll.u32 [#allocation2], 4
      %s4023 = int_to_ptr.vmem [resolvable:$true] %s4022
      %s4024 = sshll.u32 %s5, 4
      %s4025 = int_to_ptr.hbm [resolvable:$true] %s4024
      %4030 = dma.vmem_to_hbm [thread:$0]  %s4023, 2048, %s4025, [#allocation3], 64, 64, 4
    $region25: #{tpu_custom_call.1} parent=1 // pred_fallthru
      _
    // Predicated region
    $region26: #{tpu_custom_call.1} parent=1 // pred_check
      _
    $region27: #{tpu_custom_call.1} parent=1 // pred_check_branch
      %4032 = sbr.rel (0) target = $region29
    $region28: #{tpu_custom_call.1} parent=1 // pred_region
      %4034 = dma.done [#allocation3], 2048
    $region29: #{tpu_custom_call.1} parent=1 // pred_fallthru
      _
    %4035 = vsyncpa [#allocation3], 1

</llo_original>
